<compile_context>
chip_gen: v6e
topology: v6e:2x2x1
jax: 0.10.0
libtpu: 0.0.40
codegen_flags: <defaults>
</compile_context>

<pallas_src>
import functools

import jax
import jax.numpy as jnp
from jax.experimental import pallas as pl
from jax.experimental.pallas import tpu as pltpu


def _row_tile(m, target=512):
    for t in (target, 512, 256, 128, 64, 32, 16, 8):
        if t <= m and m % t == 0:
            return t
    return m


# ----------------------------------------------------------------------------
# Pallas kernels
# ----------------------------------------------------------------------------

def _conv3x3_kernel(xp_ref, w_ref, b_ref, o_ref, *, relu):
    """3x3 conv (pad=1) for one batch element, im2col done in-kernel.

    xp_ref: (H+2, W+2, Cin) bf16 (pre-padded), w_ref: (9, Cin, Cout) bf16
    (BN scale already folded in), b_ref: (1, Cout) f32, o_ref: (H, W, Cout).
    """
    hp, wp, cin = xp_ref.shape
    h, w = hp - 2, wp - 2
    cout = o_ref.shape[-1]

    acc = jnp.zeros((h * w, cout), jnp.float32)
    taps = [(dh, dw) for dh in range(3) for dw in range(3)]
    for i, (dh, dw) in enumerate(taps):
        patch = xp_ref[dh:dh + h, dw:dw + w, :].reshape(h * w, cin)
        acc = acc + jnp.dot(patch, w_ref[i], preferred_element_type=jnp.float32)
    out = acc + b_ref[...]
    if relu:
        out = jnp.maximum(out, 0.0)
    o_ref[...] = out.reshape(h, w, cout).astype(o_ref.dtype)


def _matmul_bias_kernel(a_ref, w_ref, b_ref, o_ref, *, relu):
    """o = a @ w + bias (fused, lane-dense q/k/v projection)."""
    acc = jnp.dot(a_ref[...], w_ref[...], preferred_element_type=jnp.float32)
    out = acc + b_ref[...]
    if relu:
        out = jnp.maximum(out, 0.0)
    o_ref[...] = out.astype(o_ref.dtype)
    # TODO(synk): add K-tiling + f32 VMEM accumulator (pl.when init/finalize)
    # for production channel counts so the weight block fits v7x's 64 MiB VMEM.


def _cca_kernel(gamma_ref, qkv_ref, qkvw_ref, x_ref, orow_ref, ocol_ref, *, cq, c):
    """Criss-cross attention for one batch element, channels-last, MXU matmuls.

    qkv_ref : (H, W, Npad)  packed [q | k | v | 0-pad] (H-major)
    qkvw_ref: (W, H, Npad)  same data, W-major view
    x_ref   : (H, W, C)     residual input
    orow_ref: (H, W, C) <- gamma * out_W + x
    ocol_ref: (W, H, C) <- gamma * out_H   (wrapper transposes + adds)
    """
    f32 = jnp.float32
    qkv = qkv_ref[...]                       # (H, W, N) bf16
    qkvw = qkvw_ref[...]                     # (W, H, N) bf16

    q = qkv[:, :, 0:cq]                      # (H, W, cq)
    k = qkv[:, :, cq:2 * cq]                 # (H, W, cq)
    v = qkv[:, :, 2 * cq:2 * cq + c]         # (H, W, C)
    qw = qkvw[:, :, 0:cq]                    # (W, H, cq)
    kw = qkvw[:, :, cq:2 * cq]               # (W, H, cq)
    vw = qkvw[:, :, 2 * cq:2 * cq + c]       # (W, H, C)

    # Column ("H") energies, batched over W on the MXU:
    #   e_h[w, h, p] = sum_c q[h, w, c] * k[p, w, c]
    e_h = jnp.einsum('whc,wpc->whp', qw, kw, preferred_element_type=f32)
    hh = jax.lax.broadcasted_iota(jnp.int32, e_h.shape, 1)
    pp = jax.lax.broadcasted_iota(jnp.int32, e_h.shape, 2)
    e_h = jnp.where(hh == pp, -jnp.inf, e_h)          # torch INF(): -inf on diag

    # Row ("W") energies, batched over H:
    #   e_w[h, w, p] = sum_c q[h, w, c] * k[h, p, c]
    e_w = jnp.einsum('hwc,hpc->hwp', q, k, preferred_element_type=f32)

    # Joint softmax over the concatenated (H + W) key axis, no concat copy.
    m_h = jnp.max(e_h, axis=-1)                       # (W, H)
    m_w = jnp.max(e_w, axis=-1)                       # (H, W)
    m = jnp.maximum(m_w, m_h.T)                       # (H, W), finite (e_w part)
    p_h = jnp.exp(e_h - m.T[:, :, None])              # (W, H, H)
    p_w = jnp.exp(e_w - m[:, :, None])                # (H, W, W)
    s = jnp.sum(p_w, axis=-1) + jnp.sum(p_h, axis=-1).T    # (H, W)
    inv = pl.reciprocal(s, approx=True)               # EUP, otherwise-idle slot
    att_h = (p_h * inv.T[:, :, None]).astype(qkv.dtype)    # (W, H, H) bf16
    att_w = (p_w * inv[:, :, None]).astype(qkv.dtype)      # (H, W, W) bf16

    # Aggregation on the MXU:
    #   out_h[w, h, c] = sum_p att_h[w, h, p] * v[p, w, c]   (vw[w, p, c] = v[p, w, c])
    out_h = jnp.einsum('whp,wpc->whc', att_h, vw, preferred_element_type=f32)
    #   out_w[h, w, c] = sum_p att_w[h, w, p] * v[h, p, c]
    out_w = jnp.einsum('hwp,hpc->hwc', att_w, v, preferred_element_type=f32)

    gamma = gamma_ref[0]
    orow_ref[...] = (gamma * out_w + x_ref[...].astype(f32)).astype(orow_ref.dtype)
    ocol_ref[...] = (gamma * out_h).astype(ocol_ref.dtype)


def _add_relu_kernel(a_ref, b_ref, o_ref):
    o_ref[...] = jnp.maximum(a_ref[...] + b_ref[...], 0.0)


# ----------------------------------------------------------------------------
# Wrappers
# ----------------------------------------------------------------------------

def conv3x3(x_nhwc, w9, bias, *, relu):
    """3x3 conv (pad=1, no conv bias) + folded eval-mode BN (+ optional ReLU)."""
    B, H, W, Cin = x_nhwc.shape
    Cout = w9.shape[-1]
    xp = jnp.pad(x_nhwc, ((0, 0), (1, 1), (1, 1), (0, 0)))
    bias2 = bias.reshape(1, Cout).astype(jnp.float32)
    kernel = functools.partial(_conv3x3_kernel, relu=relu)
    # TODO(synk): tile over H with halo windows for large spatial sizes (v7x VMEM).
    return pl.pallas_call(
        kernel,
        out_shape=jax.ShapeDtypeStruct((B, H, W, Cout), jnp.bfloat16),
        grid=(B,),
        in_specs=[
            pl.BlockSpec((None, H + 2, W + 2, Cin), lambda b: (b, 0, 0, 0)),
            pl.BlockSpec((9, Cin, Cout), lambda b: (0, 0, 0)),
            pl.BlockSpec((1, Cout), lambda b: (0, 0)),
        ],
        out_specs=pl.BlockSpec((None, H, W, Cout), lambda b: (b, 0, 0, 0)),
        compiler_params=pltpu.CompilerParams(dimension_semantics=("parallel",)),
    )(xp, w9, bias2)


def matmul_bias(a, w, b, *, relu=False, out_dtype=jnp.bfloat16):
    M, K = a.shape
    _, N = w.shape
    tm = _row_tile(M, target=512)
    b2 = b.reshape(1, N).astype(jnp.float32)
    kernel = functools.partial(_matmul_bias_kernel, relu=relu)
    return pl.pallas_call(
        kernel,
        out_shape=jax.ShapeDtypeStruct((M, N), out_dtype),
        grid=(M // tm,),
        in_specs=[
            pl.BlockSpec((tm, K), lambda i: (i, 0)),
            pl.BlockSpec((K, N), lambda i: (0, 0)),
            pl.BlockSpec((1, N), lambda i: (0, 0)),
        ],
        out_specs=pl.BlockSpec((tm, N), lambda i: (i, 0)),
        compiler_params=pltpu.CompilerParams(dimension_semantics=("parallel",)),
    )(a.astype(jnp.bfloat16), w, b2)


def criss_cross_attention(feat_bhwc, p):
    B, H, W, C = feat_bhwc.shape
    cq = p["cq_pad"]
    npad = p["w_qkv"].shape[1]

    # Fused, lane-dense q/k/v projection (reads the activation once).
    qkv = matmul_bias(feat_bhwc.reshape(B * H * W, C), p["w_qkv"], p["b_qkv"])
    qkv = qkv.reshape(B, H, W, npad)
    qkv_w = jnp.transpose(qkv, (0, 2, 1, 3))     # single W-major packed view

    kernel = functools.partial(_cca_kernel, cq=cq, c=C)
    # TODO(synk): tile the query rows (grid=(B, H//th)) for production H*W so the
    # per-batch resident set fits v7x's 64 MiB VMEM.
    out_row, out_col = pl.pallas_call(
        kernel,
        out_shape=(jax.ShapeDtypeStruct((B, H, W, C), jnp.bfloat16),
                   jax.ShapeDtypeStruct((B, W, H, C), jnp.bfloat16)),
        grid=(B,),
        in_specs=[
            pl.BlockSpec(memory_space=pltpu.MemorySpace.SMEM),           # gamma (1,)
            pl.BlockSpec((None, H, W, npad), lambda b: (b, 0, 0, 0)),    # qkv (H-major)
            pl.BlockSpec((None, W, H, npad), lambda b: (b, 0, 0, 0)),    # qkv (W-major)
            pl.BlockSpec((None, H, W, C), lambda b: (b, 0, 0, 0)),       # x residual
        ],
        out_specs=[
            pl.BlockSpec((None, H, W, C), lambda b: (b, 0, 0, 0)),       # gamma*out_W + x
            pl.BlockSpec((None, W, H, C), lambda b: (b, 0, 0, 0)),       # gamma*out_H
        ],
        compiler_params=pltpu.CompilerParams(dimension_semantics=("parallel",)),
    )(p["gamma"], qkv, qkv_w, feat_bhwc)

    # Combine the two partials (one cheap XLA transpose+add instead of six
    # per-tensor HBM transposes as before).
    out = out_row + jnp.transpose(out_col, (0, 2, 1, 3))
    return out.astype(jnp.bfloat16)


def add_relu(a_nchw, b_nchw):
    B, C, H, W = a_nchw.shape
    a2 = a_nchw.reshape(B * C, H * W)
    b2 = b_nchw.reshape(B * C, H * W)
    M, N = a2.shape
    tm = _row_tile(M, target=256)
    out = pl.pallas_call(
        _add_relu_kernel,
        out_shape=jax.ShapeDtypeStruct((M, N), jnp.float32),
        grid=(M // tm,),
        in_specs=[pl.BlockSpec((tm, N), lambda i: (i, 0)),
                  pl.BlockSpec((tm, N), lambda i: (i, 0))],
        out_specs=pl.BlockSpec((tm, N), lambda i: (i, 0)),
        compiler_params=pltpu.CompilerParams(dimension_semantics=("parallel",)),
    )(a2, b2)
    return out.reshape(B, C, H, W)


# ----------------------------------------------------------------------------
# Parameters (deterministic synthetic init matching the module's shapes;
# eval-mode BatchNorm folded into conv weights / bias).
# ----------------------------------------------------------------------------

def init_params(key, in_channels, out_channels):
    inter = in_channels // 4
    cq = inter // 8
    keys = jax.random.split(key, 9)

    def w(k, shape, scale=0.05):
        return jax.random.normal(k, shape, jnp.float32) * scale

    # Fresh-module BN defaults (weight=1, bias=0, mean=0, var=1, eps=1e-5) folded
    # into the conv weights; resulting bias is zero.
    # TODO(synk): training-mode batch statistics not implemented (the reference
    # forward discards this branch, so it cannot affect the returned value).
    eps = 1e-5
    bn_scale = 1.0 / jnp.sqrt(1.0 + eps)

    def folded_conv(k, cin, cout):
        hwio = w(k, (3, 3, cin, cout)) * bn_scale
        return hwio.reshape(9, cin, cout).astype(jnp.bfloat16)

    # Fused, lane-padded q/k/v 1x1 projection: columns = [q | k | v | 0-pad],
    # with q/k channel groups zero-padded to a sublane-friendly width (exactly
    # equivalent: padded channels contribute 0 to the energies).
    cq_pad = ((cq + 7) // 8) * 8
    n_qkv = 2 * cq_pad + inter
    n_pad = ((n_qkv + 127) // 128) * 128
    wq, bq = w(keys[3], (inter, cq)), w(keys[4], (cq,))
    wk, bk = w(keys[5], (inter, cq)), w(keys[6], (cq,))
    wv, bv = w(keys[7], (inter, inter)), w(keys[8], (inter,))
    w_qkv = jnp.zeros((inter, n_pad), jnp.float32)
    w_qkv = w_qkv.at[:, 0:cq].set(wq)
    w_qkv = w_qkv.at[:, cq_pad:cq_pad + cq].set(wk)
    w_qkv = w_qkv.at[:, 2 * cq_pad:2 * cq_pad + inter].set(wv)
    b_qkv = jnp.zeros((n_pad,), jnp.float32)
    b_qkv = b_qkv.at[0:cq].set(bq)
    b_qkv = b_qkv.at[cq_pad:cq_pad + cq].set(bk)
    b_qkv = b_qkv.at[2 * cq_pad:2 * cq_pad + inter].set(bv)

    return dict(
        conv1_w=folded_conv(keys[0], in_channels, inter),
        conv1_b=jnp.zeros((inter,), jnp.float32),
        conv2_w=folded_conv(keys[1], inter, inter),
        conv2_b=jnp.zeros((inter,), jnp.float32),
        conv3_w=folded_conv(keys[2], in_channels + inter, out_channels),
        conv3_b=jnp.zeros((out_channels,), jnp.float32),
        cca=dict(
            w_qkv=w_qkv.astype(jnp.bfloat16),
            b_qkv=b_qkv,
            gamma=jnp.zeros((1,), jnp.float32),   # torch init: nn.Parameter(zeros(1))
            cq_pad=cq_pad,
        ),
    )


# ----------------------------------------------------------------------------
# RCCAModule.forward
# ----------------------------------------------------------------------------

def rcca_forward(x_nchw, params, recurrence=2):
    x_nhwc = jnp.transpose(x_nchw, (0, 2, 3, 1)).astype(jnp.bfloat16)

    # conv1 + BN + ReLU
    feat = conv3x3(x_nhwc, params["conv1_w"], params["conv1_b"], relu=True)
    # recurrent criss-cross attention
    for _ in range(recurrence):
        feat = criss_cross_attention(feat, params["cca"])
    # conv2 + BN + ReLU
    feat = conv3x3(feat, params["conv2_w"], params["conv2_b"], relu=True)
    # conv3 + BN on cat([x, feat], channel axis)
    cat = jnp.concatenate([x_nhwc, feat], axis=-1)
    _branch = conv3x3(cat, params["conv3_w"], params["conv3_b"], relu=False)
    # _branch is computed (eager dispatch) but discarded, exactly as the
    # reference forward does; no host sync is forced here.

    # Reference: output = relu(residual + x), residual = x  ->  relu(2*x)
    return add_relu(x_nchw, x_nchw)


# ----------------------------------------------------------------------------
# Demo
# ----------------------------------------------------------------------------

if __name__ == "__main__":
    key = jax.random.PRNGKey(0)
    kx, kp = jax.random.split(key)

    B, Cin, Cout, H, W = 2, 64, 32, 16, 16    # inter = 16, query/key channels = 2
    x = jax.random.normal(kx, (B, Cin, H, W), jnp.float32)
    params = init_params(kp, Cin, Cout)

    out = rcca_forward(x, params, recurrence=2)
    out = jax.block_until_ready(out)

    expected = jnp.maximum(x + x, 0.0)        # reference semantics: relu(residual + x)
    assert out.shape == x.shape
    assert bool(jnp.allclose(out, expected, atol=1e-5))
    print("KERNEL_OK")
</pallas_src>

<mosaic_0001>
module attributes {stable_mosaic.version = 11 : i64} {
  func.func @_conv3x3_kernel(%arg0: i32, %arg1: memref<1x18x18x64xbf16, #tpu.memory_space<vmem>>, %arg2: memref<9x64x16xbf16, #tpu.memory_space<vmem>>, %arg3: memref<1x16xf32, #tpu.memory_space<vmem>>, %arg4: memref<1x16x16x16xbf16, #tpu.memory_space<vmem>>) attributes {dimension_semantics = [#tpu.dimension_semantics<parallel>], iteration_bounds = array<i64: 2>, scalar_prefetch = 0 : i64, scratch_operands = 0 : i64, tpu.core_type = #tpu.core_type<tc>, window_params = [{transform_indices = @transform_0, window_bounds = array<i64: 1, 18, 18, 64>}, {pipeline_mode = #tpu.pipeline_mode<synchronous>, transform_indices = @transform_1, window_bounds = array<i64: 9, 64, 16>}, {pipeline_mode = #tpu.pipeline_mode<synchronous>, transform_indices = @transform_2, window_bounds = array<i64: 1, 16>}, {transform_indices = @transform_3, window_bounds = array<i64: 1, 16, 16, 16>}]} {
    %cst = arith.constant 0.000000e+00 : f32
    %0 = vector.broadcast %cst : f32 to vector<256x16xf32>
    %c0 = arith.constant 0 : index
    %c0_0 = arith.constant 0 : index
    %c0_1 = arith.constant 0 : index
    %c0_2 = arith.constant 0 : index
    %1 = vector.load %arg1[%c0, %c0_0, %c0_1, %c0_2] : memref<1x18x18x64xbf16, #tpu.memory_space<vmem>>, vector<1x16x16x64xbf16>
    %2 = vector.shape_cast %1 : vector<1x16x16x64xbf16> to vector<16x16x64xbf16>
    %3 = vector.shape_cast %2 : vector<16x16x64xbf16> to vector<256x64xbf16>
    %c0_3 = arith.constant 0 : index
    %c0_4 = arith.constant 0 : index
    %c0_5 = arith.constant 0 : index
    %4 = vector.load %arg2[%c0_3, %c0_4, %c0_5] : memref<9x64x16xbf16, #tpu.memory_space<vmem>>, vector<1x64x16xbf16>
    %5 = vector.shape_cast %4 : vector<1x64x16xbf16> to vector<64x16xbf16>
    %cst_6 = arith.constant dense<0.000000e+00> : vector<256x16xf32>
    %6 = tpu.matmul %3, %5, %cst_6 {dimension_numbers = #tpu.dot_dimension_numbers<[1], [0], [0], [1], [0, 0, 1, 1], [], []>} : vector<256x64xbf16>, vector<64x16xbf16>, vector<256x16xf32> -> vector<256x16xf32>
    %7 = arith.addf %0, %6 : vector<256x16xf32>
    %c0_7 = arith.constant 0 : index
    %c0_8 = arith.constant 0 : index
    %c1 = arith.constant 1 : index
    %c0_9 = arith.constant 0 : index
    %8 = vector.load %arg1[%c0_7, %c0_8, %c1, %c0_9] : memref<1x18x18x64xbf16, #tpu.memory_space<vmem>>, vector<1x16x16x64xbf16>
    %9 = vector.shape_cast %8 : vector<1x16x16x64xbf16> to vector<16x16x64xbf16>
    %10 = vector.shape_cast %9 : vector<16x16x64xbf16> to vector<256x64xbf16>
    %c1_10 = arith.constant 1 : index
    %c0_11 = arith.constant 0 : index
    %c0_12 = arith.constant 0 : index
    %11 = vector.load %arg2[%c1_10, %c0_11, %c0_12] : memref<9x64x16xbf16, #tpu.memory_space<vmem>>, vector<1x64x16xbf16>
    %12 = vector.shape_cast %11 : vector<1x64x16xbf16> to vector<64x16xbf16>
    %cst_13 = arith.constant dense<0.000000e+00> : vector<256x16xf32>
    %13 = tpu.matmul %10, %12, %cst_13 {dimension_numbers = #tpu.dot_dimension_numbers<[1], [0], [0], [1], [0, 0, 1, 1], [], []>} : vector<256x64xbf16>, vector<64x16xbf16>, vector<256x16xf32> -> vector<256x16xf32>
    %14 = arith.addf %7, %13 : vector<256x16xf32>
    %c0_14 = arith.constant 0 : index
    %c0_15 = arith.constant 0 : index
    %c2 = arith.constant 2 : index
    %c0_16 = arith.constant 0 : index
    %15 = vector.load %arg1[%c0_14, %c0_15, %c2, %c0_16] : memref<1x18x18x64xbf16, #tpu.memory_space<vmem>>, vector<1x16x16x64xbf16>
    %16 = vector.shape_cast %15 : vector<1x16x16x64xbf16> to vector<16x16x64xbf16>
    %17 = vector.shape_cast %16 : vector<16x16x64xbf16> to vector<256x64xbf16>
    %c2_17 = arith.constant 2 : index
    %c0_18 = arith.constant 0 : index
    %c0_19 = arith.constant 0 : index
    %18 = vector.load %arg2[%c2_17, %c0_18, %c0_19] : memref<9x64x16xbf16, #tpu.memory_space<vmem>>, vector<1x64x16xbf16>
    %19 = vector.shape_cast %18 : vector<1x64x16xbf16> to vector<64x16xbf16>
    %cst_20 = arith.constant dense<0.000000e+00> : vector<256x16xf32>
    %20 = tpu.matmul %17, %19, %cst_20 {dimension_numbers = #tpu.dot_dimension_numbers<[1], [0], [0], [1], [0, 0, 1, 1], [], []>} : vector<256x64xbf16>, vector<64x16xbf16>, vector<256x16xf32> -> vector<256x16xf32>
    %21 = arith.addf %14, %20 : vector<256x16xf32>
    %c0_21 = arith.constant 0 : index
    %c1_22 = arith.constant 1 : index
    %c0_23 = arith.constant 0 : index
    %c0_24 = arith.constant 0 : index
    %22 = vector.load %arg1[%c0_21, %c1_22, %c0_23, %c0_24] : memref<1x18x18x64xbf16, #tpu.memory_space<vmem>>, vector<1x16x16x64xbf16>
    %23 = vector.shape_cast %22 : vector<1x16x16x64xbf16> to vector<16x16x64xbf16>
    %24 = vector.shape_cast %23 : vector<16x16x64xbf16> to vector<256x64xbf16>
    %c3 = arith.constant 3 : index
    %c0_25 = arith.constant 0 : index
    %c0_26 = arith.constant 0 : index
    %25 = vector.load %arg2[%c3, %c0_25, %c0_26] : memref<9x64x16xbf16, #tpu.memory_space<vmem>>, vector<1x64x16xbf16>
    %26 = vector.shape_cast %25 : vector<1x64x16xbf16> to vector<64x16xbf16>
    %cst_27 = arith.constant dense<0.000000e+00> : vector<256x16xf32>
    %27 = tpu.matmul %24, %26, %cst_27 {dimension_numbers = #tpu.dot_dimension_numbers<[1], [0], [0], [1], [0, 0, 1, 1], [], []>} : vector<256x64xbf16>, vector<64x16xbf16>, vector<256x16xf32> -> vector<256x16xf32>
    %28 = arith.addf %21, %27 : vector<256x16xf32>
    %c0_28 = arith.constant 0 : index
    %c1_29 = arith.constant 1 : index
    %c1_30 = arith.constant 1 : index
    %c0_31 = arith.constant 0 : index
    %29 = vector.load %arg1[%c0_28, %c1_29, %c1_30, %c0_31] : memref<1x18x18x64xbf16, #tpu.memory_space<vmem>>, vector<1x16x16x64xbf16>
    %30 = vector.shape_cast %29 : vector<1x16x16x64xbf16> to vector<16x16x64xbf16>
    %31 = vector.shape_cast %30 : vector<16x16x64xbf16> to vector<256x64xbf16>
    %c4 = arith.constant 4 : index
    %c0_32 = arith.constant 0 : index
    %c0_33 = arith.constant 0 : index
    %32 = vector.load %arg2[%c4, %c0_32, %c0_33] : memref<9x64x16xbf16, #tpu.memory_space<vmem>>, vector<1x64x16xbf16>
    %33 = vector.shape_cast %32 : vector<1x64x16xbf16> to vector<64x16xbf16>
    %cst_34 = arith.constant dense<0.000000e+00> : vector<256x16xf32>
    %34 = tpu.matmul %31, %33, %cst_34 {dimension_numbers = #tpu.dot_dimension_numbers<[1], [0], [0], [1], [0, 0, 1, 1], [], []>} : vector<256x64xbf16>, vector<64x16xbf16>, vector<256x16xf32> -> vector<256x16xf32>
    %35 = arith.addf %28, %34 : vector<256x16xf32>
    %c0_35 = arith.constant 0 : index
    %c1_36 = arith.constant 1 : index
    %c2_37 = arith.constant 2 : index
    %c0_38 = arith.constant 0 : index
    %36 = vector.load %arg1[%c0_35, %c1_36, %c2_37, %c0_38] : memref<1x18x18x64xbf16, #tpu.memory_space<vmem>>, vector<1x16x16x64xbf16>
    %37 = vector.shape_cast %36 : vector<1x16x16x64xbf16> to vector<16x16x64xbf16>
    %38 = vector.shape_cast %37 : vector<16x16x64xbf16> to vector<256x64xbf16>
    %c5 = arith.constant 5 : index
    %c0_39 = arith.constant 0 : index
    %c0_40 = arith.constant 0 : index
    %39 = vector.load %arg2[%c5, %c0_39, %c0_40] : memref<9x64x16xbf16, #tpu.memory_space<vmem>>, vector<1x64x16xbf16>
    %40 = vector.shape_cast %39 : vector<1x64x16xbf16> to vector<64x16xbf16>
    %cst_41 = arith.constant dense<0.000000e+00> : vector<256x16xf32>
    %41 = tpu.matmul %38, %40, %cst_41 {dimension_numbers = #tpu.dot_dimension_numbers<[1], [0], [0], [1], [0, 0, 1, 1], [], []>} : vector<256x64xbf16>, vector<64x16xbf16>, vector<256x16xf32> -> vector<256x16xf32>
    %42 = arith.addf %35, %41 : vector<256x16xf32>
    %c0_42 = arith.constant 0 : index
    %c2_43 = arith.constant 2 : index
    %c0_44 = arith.constant 0 : index
    %c0_45 = arith.constant 0 : index
    %43 = vector.load %arg1[%c0_42, %c2_43, %c0_44, %c0_45] : memref<1x18x18x64xbf16, #tpu.memory_space<vmem>>, vector<1x16x16x64xbf16>
    %44 = vector.shape_cast %43 : vector<1x16x16x64xbf16> to vector<16x16x64xbf16>
    %45 = vector.shape_cast %44 : vector<16x16x64xbf16> to vector<256x64xbf16>
    %c6 = arith.constant 6 : index
    %c0_46 = arith.constant 0 : index
    %c0_47 = arith.constant 0 : index
    %46 = vector.load %arg2[%c6, %c0_46, %c0_47] : memref<9x64x16xbf16, #tpu.memory_space<vmem>>, vector<1x64x16xbf16>
    %47 = vector.shape_cast %46 : vector<1x64x16xbf16> to vector<64x16xbf16>
    %cst_48 = arith.constant dense<0.000000e+00> : vector<256x16xf32>
    %48 = tpu.matmul %45, %47, %cst_48 {dimension_numbers = #tpu.dot_dimension_numbers<[1], [0], [0], [1], [0, 0, 1, 1], [], []>} : vector<256x64xbf16>, vector<64x16xbf16>, vector<256x16xf32> -> vector<256x16xf32>
    %49 = arith.addf %42, %48 : vector<256x16xf32>
    %c0_49 = arith.constant 0 : index
    %c2_50 = arith.constant 2 : index
    %c1_51 = arith.constant 1 : index
    %c0_52 = arith.constant 0 : index
    %50 = vector.load %arg1[%c0_49, %c2_50, %c1_51, %c0_52] : memref<1x18x18x64xbf16, #tpu.memory_space<vmem>>, vector<1x16x16x64xbf16>
    %51 = vector.shape_cast %50 : vector<1x16x16x64xbf16> to vector<16x16x64xbf16>
    %52 = vector.shape_cast %51 : vector<16x16x64xbf16> to vector<256x64xbf16>
    %c7 = arith.constant 7 : index
    %c0_53 = arith.constant 0 : index
    %c0_54 = arith.constant 0 : index
    %53 = vector.load %arg2[%c7, %c0_53, %c0_54] : memref<9x64x16xbf16, #tpu.memory_space<vmem>>, vector<1x64x16xbf16>
    %54 = vector.shape_cast %53 : vector<1x64x16xbf16> to vector<64x16xbf16>
    %cst_55 = arith.constant dense<0.000000e+00> : vector<256x16xf32>
    %55 = tpu.matmul %52, %54, %cst_55 {dimension_numbers = #tpu.dot_dimension_numbers<[1], [0], [0], [1], [0, 0, 1, 1], [], []>} : vector<256x64xbf16>, vector<64x16xbf16>, vector<256x16xf32> -> vector<256x16xf32>
    %56 = arith.addf %49, %55 : vector<256x16xf32>
    %c0_56 = arith.constant 0 : index
    %c2_57 = arith.constant 2 : index
    %c2_58 = arith.constant 2 : index
    %c0_59 = arith.constant 0 : index
    %57 = vector.load %arg1[%c0_56, %c2_57, %c2_58, %c0_59] : memref<1x18x18x64xbf16, #tpu.memory_space<vmem>>, vector<1x16x16x64xbf16>
    %58 = vector.shape_cast %57 : vector<1x16x16x64xbf16> to vector<16x16x64xbf16>
    %59 = vector.shape_cast %58 : vector<16x16x64xbf16> to vector<256x64xbf16>
    %c8 = arith.constant 8 : index
    %c0_60 = arith.constant 0 : index
    %c0_61 = arith.constant 0 : index
    %60 = vector.load %arg2[%c8, %c0_60, %c0_61] : memref<9x64x16xbf16, #tpu.memory_space<vmem>>, vector<1x64x16xbf16>
    %61 = vector.shape_cast %60 : vector<1x64x16xbf16> to vector<64x16xbf16>
    %cst_62 = arith.constant dense<0.000000e+00> : vector<256x16xf32>
    %62 = tpu.matmul %59, %61, %cst_62 {dimension_numbers = #tpu.dot_dimension_numbers<[1], [0], [0], [1], [0, 0, 1, 1], [], []>} : vector<256x64xbf16>, vector<64x16xbf16>, vector<256x16xf32> -> vector<256x16xf32>
    %63 = arith.addf %56, %62 : vector<256x16xf32>
    %c0_63 = arith.constant 0 : index
    %c0_64 = arith.constant 0 : index
    %64 = vector.load %arg3[%c0_63, %c0_64] : memref<1x16xf32, #tpu.memory_space<vmem>>, vector<1x16xf32>
    %65 = vector.broadcast %64 : vector<1x16xf32> to vector<256x16xf32>
    %66 = arith.addf %63, %65 : vector<256x16xf32>
    %cst_65 = arith.constant 0.000000e+00 : f32
    %67 = vector.broadcast %cst_65 : f32 to vector<256x16xf32>
    %68 = arith.maximumf %66, %67 : vector<256x16xf32>
    %69 = vector.shape_cast %68 : vector<256x16xf32> to vector<16x16x16xf32>
    %70 = arith.truncf %69 : vector<16x16x16xf32> to vector<16x16x16xbf16>
    %c0_66 = arith.constant 0 : index
    %c0_67 = arith.constant 0 : index
    %c0_68 = arith.constant 0 : index
    %c0_69 = arith.constant 0 : index
    %71 = vector.load %arg4[%c0_66, %c0_67, %c0_68, %c0_69] : memref<1x16x16x16xbf16, #tpu.memory_space<vmem>>, vector<1x16x16x16xbf16>
    %72 = vector.shape_cast %71 : vector<1x16x16x16xbf16> to vector<16x16x16xbf16>
    %73 = vector.shape_cast %70 : vector<16x16x16xbf16> to vector<1x16x16x16xbf16>
    tpu.vector_store %arg4[%c0_66, %c0_67, %c0_68, %c0_69], %73 {strides = array<i32>} : memref<1x16x16x16xbf16, #tpu.memory_space<vmem>>, vector<1x16x16x16xbf16>,
    return
  }
  func.func @transform_0(%arg0: i32) -> (i32, i32, i32, i32) {
    %c0_i32 = arith.constant 0 : i32
    %c0_i32_0 = arith.constant 0 : i32
    %c0_i32_1 = arith.constant 0 : i32
    %c0_i32_2 = arith.constant 0 : i32
    return %arg0, %c0_i32, %c0_i32_0, %c0_i32_1 : i32, i32, i32, i32
  }
  func.func @transform_1(%arg0: i32) -> (i32, i32, i32) {
    %c0_i32 = arith.constant 0 : i32
    %c0_i32_0 = arith.constant 0 : i32
    %c0_i32_1 = arith.constant 0 : i32
    %c0_i32_2 = arith.constant 0 : i32
    return %c0_i32, %c0_i32_0, %c0_i32_1 : i32, i32, i32
  }
  func.func @transform_2(%arg0: i32) -> (i32, i32) {
    %c0_i32 = arith.constant 0 : i32
    %c0_i32_0 = arith.constant 0 : i32
    %c0_i32_1 = arith.constant 0 : i32
    return %c0_i32, %c0_i32_0 : i32, i32
  }
  func.func @transform_3(%arg0: i32) -> (i32, i32, i32, i32) {
    %c0_i32 = arith.constant 0 : i32
    %c0_i32_0 = arith.constant 0 : i32
    %c0_i32_1 = arith.constant 0 : i32
    %c0_i32_2 = arith.constant 0 : i32
    return %arg0, %c0_i32, %c0_i32_0, %c0_i32_1 : i32, i32, i32, i32
  }
}

</mosaic_0001>

<llo_original>
// kernel: tpu_custom_call.1
$region0: #{tpu_custom_call.1}
  #allocation0 [shape = 'u32[]', space=smem, size = 0x4, offset = 0x4, fixed_abs, tag = 'smem constant byte address 0x4 - core index']
  #allocation1 [shape = 'u32[144,128]{1,0:T(1,128)}', space=vmem, size = 0x12000, scoped, tag = 'internal scratch']
  %s0 = inlined_call_operand.vmem [shape: bf16[2,18,18,64], index: 0, kind: input, shape index: {}]
  %s1 = inlined_call_operand.vmem [shape: bf16[9,64,16], index: 1, kind: input, shape index: {}]
  %s2 = inlined_call_operand.vmem [shape: f32[1,16], index: 2, kind: input, shape index: {}]
  %s3 = inlined_call_operand.hbm [shape: bf16[2,16,16,16], index: 3, kind: output, shape index: {}]
  %s4 = sld [smem:[#allocation0]]
  $region45: #{tpu_custom_call.1} parent=0
    _
  %s6 = ssub.s32 1, %s4
  %s7 = scalar_select 0, %s6, %s4
  $region1: #{tpu_custom_call.1} parent=0
    #allocation2 [shape = 'u8[131072]{0}', space=vmem, size = 0x20000, scoped, tag = 'output window, operand 0']
    #allocation3 [shape = 's32[2]{0}', space=sflag, size = 0x8, scoped, tag = 'scoped memory for tpu_custom_call.1']
    %8 = vsyncpa [#allocation3], 0
    %s9 = scalar_lea.sflag [#allocation3], 1
    %10 = vsyncpa %s9, 0
    loop: start=0, step=1, limit=4
    $region2: #{tpu_custom_call.1} parent=1 // loop_pre_header
      _
    $region3: #{tpu_custom_call.1} parent=1 // loop_header
      %s12 = sphi 0, %s16
      %p13 = scmp.ge.s32.totalorder %s12, 4
      %s22 = sphi 0, %s24
      %s25 = sphi 0, %s22
      %s26 = sphi 0, %s25
      %s42 = sphi 0, %s26
      %s46 = sphi 0, %s46
      %s48 = sphi 0, %s46
      %s49 = sphi 0, %s48
      %s63 = sphi 0, %s49
      %s67 = sphi 0, %s67
      %s69 = sphi 0, %s67
      %s70 = sphi 0, %s69
      %s84 = sphi 0, %s70
      %s90 = sphi 0, %s92
      %s93 = sphi 0, %s90
      %s94 = sphi 0, %s93
      %s110 = sphi 0, %s94
    $region4: #{tpu_custom_call.1} parent=1 // loop_header_branch
      %15 = sbr.rel (%p13) target = $region8
    $region5: #{tpu_custom_call.1} parent=1 // loop_body
      %s17 = ssub.s32 %s12, 1
      %s18 = ssub.s32 %s12, 2
      %s19 = sadd.s32 %s12, 1
      %s20 = ssub.s32 %s12, %s19
      %p21 = scmp.eq.s32.totalorder %s20, 0
      %s23 = sadd.s32 %s22, 1
      %s24 = scalar_select %p21, %s22, %s23
      %p27 = pneg %p21
      %p28 = scmp.eq.s32.totalorder %s12, 1
      %p29 = por %p27, %p28
      %p30 = scmp.ne.s32.totalorder %s22, %s25
      %p31 = scmp.eq.s32.totalorder %s12, 0
      %p32 = por %p30, %p31
      %p33 = scmp.ne.s32.totalorder %s22, %s25
      %p34 = scmp.eq.s32.totalorder %s17, 1
      %p35 = por %p33, %p34
      %p36 = scmp.ne.s32.totalorder %s25, %s26
      %p37 = scmp.eq.s32.totalorder %s17, 0
      %p38 = por %p36, %p37
      %p39 = scmp.ne.s32.totalorder %s25, %s26
      %p40 = scmp.eq.s32.totalorder %s18, 1
      %p41 = por %p39, %p40
      %p43 = scmp.ne.s32.totalorder %s26, %s42
      %p44 = scmp.eq.s32.totalorder %s18, 0
      %p45 = por %p43, %p44
      %s47 = sadd.s32 %s46, 1
      %p50 = scmp.eq.s32.totalorder %s12, 1
      %p51 = scmp.ne.s32.totalorder %s46, %s48
      %p52 = scmp.eq.s32.totalorder %s12, 0
      %p53 = por %p51, %p52
      %p54 = scmp.ne.s32.totalorder %s46, %s48
      %p55 = scmp.eq.s32.totalorder %s17, 1
      %p56 = por %p54, %p55
      %p57 = scmp.ne.s32.totalorder %s48, %s49
      %p58 = scmp.eq.s32.totalorder %s17, 0
      %p59 = por %p57, %p58
      %p60 = scmp.ne.s32.totalorder %s48, %s49
      %p61 = scmp.eq.s32.totalorder %s18, 1
      %p62 = por %p60, %p61
      %p64 = scmp.ne.s32.totalorder %s49, %s63
      %p65 = scmp.eq.s32.totalorder %s18, 0
      %p66 = por %p64, %p65
      %s68 = sadd.s32 %s67, 1
      %p71 = scmp.eq.s32.totalorder %s12, 1
      %p72 = scmp.ne.s32.totalorder %s67, %s69
      %p73 = scmp.eq.s32.totalorder %s12, 0
      %p74 = por %p72, %p73
      %p75 = scmp.ne.s32.totalorder %s67, %s69
      %p76 = scmp.eq.s32.totalorder %s17, 1
      %p77 = por %p75, %p76
      %p78 = scmp.ne.s32.totalorder %s69, %s70
      %p79 = scmp.eq.s32.totalorder %s17, 0
      %p80 = por %p78, %p79
      %p81 = scmp.ne.s32.totalorder %s69, %s70
      %p82 = scmp.eq.s32.totalorder %s18, 1
      %p83 = por %p81, %p82
      %p85 = scmp.ne.s32.totalorder %s70, %s84
      %p86 = scmp.eq.s32.totalorder %s18, 0
      %p87 = por %p85, %p86
      %s88 = ssub.s32 %s12, %s19
      %p89 = scmp.eq.s32.totalorder %s88, 0
      %s91 = sadd.s32 %s90, 1
      %s92 = scalar_select %p89, %s90, %s91
      %p95 = pneg %p89
      %p96 = scmp.eq.s32.totalorder %s12, 1
      %p97 = por %p95, %p96
      %p98 = scmp.ne.s32.totalorder %s90, %s93
      %p99 = scmp.eq.s32.totalorder %s12, 0
      %p100 = por %p98, %p99
      %p101 = scmp.ne.s32.totalorder %s90, %s93
      %p102 = scmp.eq.s32.totalorder %s17, 1
      %p103 = por %p101, %p102
      %p104 = scmp.ne.s32.totalorder %s93, %s94
      %p105 = scmp.eq.s32.totalorder %s17, 0
      %p106 = por %p104, %p105
      %p107 = scmp.ne.s32.totalorder %s93, %s94
      %p108 = scmp.eq.s32.totalorder %s18, 1
      %p109 = por %p107, %p108
      %p111 = scmp.ne.s32.totalorder %s94, %s110
      %p112 = scmp.eq.s32.totalorder %s18, 0
      %p113 = por %p111, %p112
      %p114 = scmp.le.s32.totalorder 1, %s12
      %p115 = scmp.lt.s32.totalorder %s12, 3
      %p116 = pnand %p114, %p115
      %p117 = pneg %p116
      // Predicated region
      $region9: #{tpu_custom_call.1} parent=5 // pred_check
        _
      $region10: #{tpu_custom_call.1} parent=5 // pred_check_branch
        %119 = sbr.rel (%p116) target = $region12
      $region11: #{tpu_custom_call.1} parent=5 // pred_region
        %s120 = ssub.s32 %s12, 1
        // Predicated region
        $region13: #{tpu_custom_call.1} parent=11 // pred_check
          %p121 = pneg %p59
        $region14: #{tpu_custom_call.1} parent=11 // pred_check_branch
          %123 = sbr.rel (%p121) target = $region16
        $region15: #{tpu_custom_call.1} parent=11 // pred_region
          _
        $region16: #{tpu_custom_call.1} parent=11 // pred_fallthru
          _
        // Predicated region
        $region17: #{tpu_custom_call.1} parent=11 // pred_check
          %p124 = pneg %p80
        $region18: #{tpu_custom_call.1} parent=11 // pred_check_branch
          %126 = sbr.rel (%p124) target = $region20
        $region19: #{tpu_custom_call.1} parent=11 // pred_region
          _
        $region20: #{tpu_custom_call.1} parent=11 // pred_fallthru
          _
      $region12: #{tpu_custom_call.1} parent=5 // pred_fallthru
        _
      %p127 = scmp.lt.s32.totalorder %s12, 2
      // Predicated region
      $region21: #{tpu_custom_call.1} parent=5 // pred_check
        %p128 = pneg %p127
      $region22: #{tpu_custom_call.1} parent=5 // pred_check_branch
        %130 = sbr.rel (%p128) target = $region24
      $region23: #{tpu_custom_call.1} parent=5 // pred_region
        // Predicated region
        $region25: #{tpu_custom_call.1} parent=23 // pred_check
          %p131 = pneg %p32
        $region26: #{tpu_custom_call.1} parent=23 // pred_check_branch
          %133 = sbr.rel (%p131) target = $region28
        $region27: #{tpu_custom_call.1} parent=23 // pred_region
          %p134 = scmp.lt.s32.totalorder %s12, 1
          %s135 = scalar_select %p134, %s12, 1
          %s136 = smul.addr %s135, 54
          %s137 = smul.addr %s136, 4
          %s138 = scalar_lea.vmem %s0, %s137
        $region28: #{tpu_custom_call.1} parent=23 // pred_fallthru
          _
      $region24: #{tpu_custom_call.1} parent=5 // pred_fallthru
        _
      %p139 = scmp.le.s32.totalorder 1, %s12
      %p140 = scmp.lt.s32.totalorder %s12, 3
      %p141 = pnand %p139, %p140
      %p142 = pneg %p141
      // Predicated region
      $region29: #{tpu_custom_call.1} parent=5 // pred_check
        _
      $region30: #{tpu_custom_call.1} parent=5 // pred_check_branch
        %144 = sbr.rel (%p141) target = $region32
      $region31: #{tpu_custom_call.1} parent=5 // pred_region
        %s145 = ssub.s32 %s12, 1
        %p146 = scmp.lt.s32.totalorder %s17, 1
        %s147 = scalar_select %p146, %s17, 1
        %s148 = smul.addr %s147, 54
        %s149 = smul.addr %s148, 4
        %s150 = scalar_lea.vmem %s0, %s149
        %p151 = pneg %p38
        %p152 = pneg %p35
        %p153 = pneg %p59
        %p154 = pneg %p56
        %p155 = pneg %p80
        %p156 = pneg %p77
        %p157 = pneg %p106
        %p158 = pneg %p103
        %s159 = sand.u32 %s93, 1
        %s160 = scalar_lea.sflag [#allocation3], %s159
        %s161 = sand.u32 %s93, 1
        %s162 = smul.addr %s161, 128
        %s163 = scalar_lea.vmem [#allocation2], %s162
        %p164 = scmp.lt.s32.totalorder %s17, 1
        %s165 = scalar_select %p164, %s17, 1
        %s166 = smul.addr %s165, 54
        %s167 = smul.addr %s166, 4
        %s168 = scalar_lea.vmem %s0, %s167
        %v170 = vld [vmem:[%s168] sm:$0xf]
        %v171 = vld [vmem:[%s168 + $0x4] sm:$0xf]
        %v172 = vld [vmem:[%s168 + $0xc] sm:$0xf]
        %v173 = vld [vmem:[%s168 + $0x10] sm:$0xf]
        %v174 = vld [vmem:[%s168 + $0x18] sm:$0xf]
        %v175 = vld [vmem:[%s168 + $0x1c] sm:$0xf]
        %v176 = vld [vmem:[%s168 + $0x24] sm:$0xf]
        %v177 = vld [vmem:[%s168 + $0x28] sm:$0xf]
        %v178 = vld [vmem:[%s168 + $0x30] sm:$0xf]
        %v179 = vld [vmem:[%s168 + $0x34] sm:$0xf]
        %v180 = vld [vmem:[%s168 + $0x3c] sm:$0xf]
        %v181 = vld [vmem:[%s168 + $0x40] sm:$0xf]
        %v182 = vld [vmem:[%s168 + $0x48] sm:$0xf]
        %v183 = vld [vmem:[%s168 + $0x4c] sm:$0xf]
        %v184 = vld [vmem:[%s168 + $0x54] sm:$0xf]
        %v185 = vld [vmem:[%s168 + $0x58] sm:$0xf]
        %v186 = vld [vmem:[%s168 + $0x60] sm:$0xf]
        %v187 = vld [vmem:[%s168 + $0x64] sm:$0xf]
        %v188 = vld [vmem:[%s168 + $0x6c] sm:$0xf]
        %v189 = vld [vmem:[%s168 + $0x70] sm:$0xf]
        %v190 = vld [vmem:[%s168 + $0x78] sm:$0xf]
        %v191 = vld [vmem:[%s168 + $0x7c] sm:$0xf]
        %v192 = vld [vmem:[%s168 + $0x84] sm:$0xf]
        %v193 = vld [vmem:[%s168 + $0x88] sm:$0xf]
        %v194 = vld [vmem:[%s168 + $0x90] sm:$0xf]
        %v195 = vld [vmem:[%s168 + $0x94] sm:$0xf]
        %v196 = vld [vmem:[%s168 + $0x9c] sm:$0xf]
        %v197 = vld [vmem:[%s168 + $0xa0] sm:$0xf]
        %v198 = vld [vmem:[%s168 + $0xa8] sm:$0xf]
        %v199 = vld [vmem:[%s168 + $0xac] sm:$0xf]
        %v200 = vld [vmem:[%s168 + $0xb4] sm:$0xf]
        %v201 = vld [vmem:[%s168 + $0xb8] sm:$0xf]
        %v202 = vld [vmem:[%s1] sm:$0xf]
        %v203 = vld [vmem:[%s1 + $0x4] sm:$0xf]
        %v204 = vld [vmem:[%s1 + $0x8] sm:$0xf]
        %v205 = vld [vmem:[%s1 + $0xc] sm:$0xf]
        %v206 = vld [vmem:[%s1 + $0x10] sm:$0xf]
        %v207 = vld [vmem:[%s1 + $0x14] sm:$0xf]
        %v208 = vld [vmem:[%s1 + $0x18] sm:$0xf]
        %v209 = vld [vmem:[%s1 + $0x1c] sm:$0xf]
        %v210 = vld [vmem:[%s168 + $0x8] sm:$0x1]
        %v211 = vld [vmem:[%s168 + $0x14] sm:$0x1]
        %v212 = vld [vmem:[%s168 + $0x20] sm:$0x1]
        %v213 = vld [vmem:[%s168 + $0x2c] sm:$0x1]
        %v214 = vld [vmem:[%s168 + $0x38] sm:$0x1]
        %v215 = vld [vmem:[%s168 + $0x44] sm:$0x1]
        %v216 = vld [vmem:[%s168 + $0x50] sm:$0x1]
        %v217 = vld [vmem:[%s168 + $0x5c] sm:$0x1]
        %v218 = vld [vmem:[%s168 + $0x68] sm:$0x1]
        %v219 = vld [vmem:[%s168 + $0x74] sm:$0x1]
        %v220 = vld [vmem:[%s168 + $0x80] sm:$0x1]
        %v221 = vld [vmem:[%s168 + $0x8c] sm:$0x1]
        %v222 = vld [vmem:[%s168 + $0x98] sm:$0x1]
        %v223 = vld [vmem:[%s168 + $0xa4] sm:$0x1]
        %v224 = vld [vmem:[%s168 + $0xb0] sm:$0x1]
        %v225 = vld [vmem:[%s168 + $0xbc] sm:$0x1]
        %vm226 = vsmask.f32 3328
        %vm227 = vsmask.f32 7440
        %vm228 = vmor %vm226, %vm227
        %v230 = vshrl.u32 %v170, 16
        %v232 = vrot.slane %v230, 4
        %v233 = vshll.u32 %v170, 16
        %v235 = vrot.slane %v233, 5
        %v236 = vor.u32 %v232, %v235
        %v237 = vrot.slane %v236, 4
        %v239 = vshll.u32 %v171, 16
        %v241 = vrot.slane %v239, 5
        %v242 = vsel %vm228, %v237, %v241
        %v243 = vshrl.u32 %v171, 16
        %v245 = vrot.slane %v243, 4
        %v246 = vor.u32 %v245, %v241
        %v247 = vrot.slane %v246, 4
        %v249 = vshll.u32 %v210, 16
        %v251 = vrot.slane %v249, 5
        %v252 = vsel %vm228, %v247, %v251
        %v254 = vshrl.u32 %v172, 16
        %v256 = vrot.slane %v254, 4
        %v257 = vshll.u32 %v172, 16
        %v259 = vrot.slane %v257, 5
        %v260 = vor.u32 %v256, %v259
        %v261 = vrot.slane %v260, 4
        %v263 = vshll.u32 %v173, 16
        %v265 = vrot.slane %v263, 5
        %v266 = vsel %vm228, %v261, %v265
        %v267 = vshrl.u32 %v173, 16
        %v269 = vrot.slane %v267, 4
        %v270 = vor.u32 %v269, %v265
        %v271 = vrot.slane %v270, 4
        %v273 = vshll.u32 %v211, 16
        %v275 = vrot.slane %v273, 5
        %v276 = vsel %vm228, %v271, %v275
        %v278 = vshrl.u32 %v174, 16
        %v280 = vrot.slane %v278, 4
        %v281 = vshll.u32 %v174, 16
        %v283 = vrot.slane %v281, 5
        %v284 = vor.u32 %v280, %v283
        %v285 = vrot.slane %v284, 4
        %v287 = vshll.u32 %v175, 16
        %v289 = vrot.slane %v287, 5
        %v290 = vsel %vm228, %v285, %v289
        %v291 = vshrl.u32 %v175, 16
        %v293 = vrot.slane %v291, 4
        %v294 = vor.u32 %v293, %v289
        %v295 = vrot.slane %v294, 4
        %v297 = vshll.u32 %v212, 16
        %v299 = vrot.slane %v297, 5
        %v300 = vsel %vm228, %v295, %v299
        %v302 = vshrl.u32 %v176, 16
        %v304 = vrot.slane %v302, 4
        %v305 = vshll.u32 %v176, 16
        %v307 = vrot.slane %v305, 5
        %v308 = vor.u32 %v304, %v307
        %v309 = vrot.slane %v308, 4
        %v311 = vshll.u32 %v177, 16
        %v313 = vrot.slane %v311, 5
        %v314 = vsel %vm228, %v309, %v313
        %v315 = vshrl.u32 %v177, 16
        %v317 = vrot.slane %v315, 4
        %v318 = vor.u32 %v317, %v313
        %v319 = vrot.slane %v318, 4
        %v321 = vshll.u32 %v213, 16
        %v323 = vrot.slane %v321, 5
        %v324 = vsel %vm228, %v319, %v323
        %v326 = vshrl.u32 %v178, 16
        %v328 = vrot.slane %v326, 4
        %v329 = vshll.u32 %v178, 16
        %v331 = vrot.slane %v329, 5
        %v332 = vor.u32 %v328, %v331
        %v333 = vrot.slane %v332, 4
        %v335 = vshll.u32 %v179, 16
        %v337 = vrot.slane %v335, 5
        %v338 = vsel %vm228, %v333, %v337
        %v339 = vshrl.u32 %v179, 16
        %v341 = vrot.slane %v339, 4
        %v342 = vor.u32 %v341, %v337
        %v343 = vrot.slane %v342, 4
        %v345 = vshll.u32 %v214, 16
        %v347 = vrot.slane %v345, 5
        %v348 = vsel %vm228, %v343, %v347
        %v350 = vshrl.u32 %v180, 16
        %v352 = vrot.slane %v350, 4
        %v353 = vshll.u32 %v180, 16
        %v355 = vrot.slane %v353, 5
        %v356 = vor.u32 %v352, %v355
        %v357 = vrot.slane %v356, 4
        %v359 = vshll.u32 %v181, 16
        %v361 = vrot.slane %v359, 5
        %v362 = vsel %vm228, %v357, %v361
        %v363 = vshrl.u32 %v181, 16
        %v365 = vrot.slane %v363, 4
        %v366 = vor.u32 %v365, %v361
        %v367 = vrot.slane %v366, 4
        %v369 = vshll.u32 %v215, 16
        %v371 = vrot.slane %v369, 5
        %v372 = vsel %vm228, %v367, %v371
        %v374 = vshrl.u32 %v182, 16
        %v376 = vrot.slane %v374, 4
        %v377 = vshll.u32 %v182, 16
        %v379 = vrot.slane %v377, 5
        %v380 = vor.u32 %v376, %v379
        %v381 = vrot.slane %v380, 4
        %v383 = vshll.u32 %v183, 16
        %v385 = vrot.slane %v383, 5
        %v386 = vsel %vm228, %v381, %v385
        %v387 = vshrl.u32 %v183, 16
        %v389 = vrot.slane %v387, 4
        %v390 = vor.u32 %v389, %v385
        %v391 = vrot.slane %v390, 4
        %v393 = vshll.u32 %v216, 16
        %v395 = vrot.slane %v393, 5
        %v396 = vsel %vm228, %v391, %v395
        %v398 = vshrl.u32 %v184, 16
        %v400 = vrot.slane %v398, 4
        %v401 = vshll.u32 %v184, 16
        %v403 = vrot.slane %v401, 5
        %v404 = vor.u32 %v400, %v403
        %v405 = vrot.slane %v404, 4
        %v407 = vshll.u32 %v185, 16
        %v409 = vrot.slane %v407, 5
        %v410 = vsel %vm228, %v405, %v409
        %v411 = vshrl.u32 %v185, 16
        %v413 = vrot.slane %v411, 4
        %v414 = vor.u32 %v413, %v409
        %v415 = vrot.slane %v414, 4
        %v417 = vshll.u32 %v217, 16
        %v419 = vrot.slane %v417, 5
        %v420 = vsel %vm228, %v415, %v419
        %v422 = vshrl.u32 %v186, 16
        %v424 = vrot.slane %v422, 4
        %v425 = vshll.u32 %v186, 16
        %v427 = vrot.slane %v425, 5
        %v428 = vor.u32 %v424, %v427
        %v429 = vrot.slane %v428, 4
        %v431 = vshll.u32 %v187, 16
        %v433 = vrot.slane %v431, 5
        %v434 = vsel %vm228, %v429, %v433
        %v435 = vshrl.u32 %v187, 16
        %v437 = vrot.slane %v435, 4
        %v438 = vor.u32 %v437, %v433
        %v439 = vrot.slane %v438, 4
        %v441 = vshll.u32 %v218, 16
        %v443 = vrot.slane %v441, 5
        %v444 = vsel %vm228, %v439, %v443
        %v446 = vshrl.u32 %v188, 16
        %v448 = vrot.slane %v446, 4
        %v449 = vshll.u32 %v188, 16
        %v451 = vrot.slane %v449, 5
        %v452 = vor.u32 %v448, %v451
        %v453 = vrot.slane %v452, 4
        %v455 = vshll.u32 %v189, 16
        %v457 = vrot.slane %v455, 5
        %v458 = vsel %vm228, %v453, %v457
        %v459 = vshrl.u32 %v189, 16
        %v461 = vrot.slane %v459, 4
        %v462 = vor.u32 %v461, %v457
        %v463 = vrot.slane %v462, 4
        %v465 = vshll.u32 %v219, 16
        %v467 = vrot.slane %v465, 5
        %v468 = vsel %vm228, %v463, %v467
        %v470 = vshrl.u32 %v190, 16
        %v472 = vrot.slane %v470, 4
        %v473 = vshll.u32 %v190, 16
        %v475 = vrot.slane %v473, 5
        %v476 = vor.u32 %v472, %v475
        %v477 = vrot.slane %v476, 4
        %v479 = vshll.u32 %v191, 16
        %v481 = vrot.slane %v479, 5
        %v482 = vsel %vm228, %v477, %v481
        %v483 = vshrl.u32 %v191, 16
        %v485 = vrot.slane %v483, 4
        %v486 = vor.u32 %v485, %v481
        %v487 = vrot.slane %v486, 4
        %v489 = vshll.u32 %v220, 16
        %v491 = vrot.slane %v489, 5
        %v492 = vsel %vm228, %v487, %v491
        %v494 = vshrl.u32 %v192, 16
        %v496 = vrot.slane %v494, 4
        %v497 = vshll.u32 %v192, 16
        %v499 = vrot.slane %v497, 5
        %v500 = vor.u32 %v496, %v499
        %v501 = vrot.slane %v500, 4
        %v503 = vshll.u32 %v193, 16
        %v505 = vrot.slane %v503, 5
        %v506 = vsel %vm228, %v501, %v505
        %v507 = vshrl.u32 %v193, 16
        %v509 = vrot.slane %v507, 4
        %v510 = vor.u32 %v509, %v505
        %v511 = vrot.slane %v510, 4
        %v513 = vshll.u32 %v221, 16
        %v515 = vrot.slane %v513, 5
        %v516 = vsel %vm228, %v511, %v515
        %v518 = vshrl.u32 %v194, 16
        %v520 = vrot.slane %v518, 4
        %v521 = vshll.u32 %v194, 16
        %v523 = vrot.slane %v521, 5
        %v524 = vor.u32 %v520, %v523
        %v525 = vrot.slane %v524, 4
        %v527 = vshll.u32 %v195, 16
        %v529 = vrot.slane %v527, 5
        %v530 = vsel %vm228, %v525, %v529
        %v531 = vshrl.u32 %v195, 16
        %v533 = vrot.slane %v531, 4
        %v534 = vor.u32 %v533, %v529
        %v535 = vrot.slane %v534, 4
        %v537 = vshll.u32 %v222, 16
        %v539 = vrot.slane %v537, 5
        %v540 = vsel %vm228, %v535, %v539
        %v542 = vshrl.u32 %v196, 16
        %v544 = vrot.slane %v542, 4
        %v545 = vshll.u32 %v196, 16
        %v547 = vrot.slane %v545, 5
        %v548 = vor.u32 %v544, %v547
        %v549 = vrot.slane %v548, 4
        %v551 = vshll.u32 %v197, 16
        %v553 = vrot.slane %v551, 5
        %v554 = vsel %vm228, %v549, %v553
        %v555 = vshrl.u32 %v197, 16
        %v557 = vrot.slane %v555, 4
        %v558 = vor.u32 %v557, %v553
        %v559 = vrot.slane %v558, 4
        %v561 = vshll.u32 %v223, 16
        %v563 = vrot.slane %v561, 5
        %v564 = vsel %vm228, %v559, %v563
        %v566 = vshrl.u32 %v198, 16
        %v568 = vrot.slane %v566, 4
        %v569 = vshll.u32 %v198, 16
        %v571 = vrot.slane %v569, 5
        %v572 = vor.u32 %v568, %v571
        %v573 = vrot.slane %v572, 4
        %v575 = vshll.u32 %v199, 16
        %v577 = vrot.slane %v575, 5
        %v578 = vsel %vm228, %v573, %v577
        %v579 = vshrl.u32 %v199, 16
        %v581 = vrot.slane %v579, 4
        %v582 = vor.u32 %v581, %v577
        %v583 = vrot.slane %v582, 4
        %v585 = vshll.u32 %v224, 16
        %v587 = vrot.slane %v585, 5
        %v588 = vsel %vm228, %v583, %v587
        %v590 = vshrl.u32 %v200, 16
        %v592 = vrot.slane %v590, 4
        %v593 = vshll.u32 %v200, 16
        %v595 = vrot.slane %v593, 5
        %v596 = vor.u32 %v592, %v595
        %v597 = vrot.slane %v596, 4
        %v599 = vshll.u32 %v201, 16
        %v601 = vrot.slane %v599, 5
        %v602 = vsel %vm228, %v597, %v601
        %v603 = vshrl.u32 %v201, 16
        %v605 = vrot.slane %v603, 4
        %v606 = vor.u32 %v605, %v601
        %v607 = vrot.slane %v606, 4
        %v609 = vshll.u32 %v225, 16
        %v611 = vrot.slane %v609, 5
        %v612 = vsel %vm228, %v607, %v611
        %s613 = scalar_lea.vmem %s1, 32
        %v614 = vld [vmem:[%s613] sm:$0xf]
        %v615 = vld [vmem:[%s613 + $0x4] sm:$0xf]
        %v616 = vld [vmem:[%s613 + $0x8] sm:$0xf]
        %v617 = vld [vmem:[%s613 + $0xc] sm:$0xf]
        %v618 = vld [vmem:[%s613 + $0x10] sm:$0xf]
        %v619 = vld [vmem:[%s613 + $0x14] sm:$0xf]
        %v620 = vld [vmem:[%s613 + $0x18] sm:$0xf]
        %v621 = vld [vmem:[%s613 + $0x1c] sm:$0xf]
        %v622 = vunpack.c.l.b16 %v242
        %v623 = vunpack.c.l.b16 %v252
        %v624 = vunpack.c.l.b16 %v266
        %v625 = vunpack.c.l.b16 %v276
        %v626 = vunpack.c.l.b16 %v290
        %v627 = vunpack.c.l.b16 %v300
        %v628 = vunpack.c.l.b16 %v314
        %v629 = vunpack.c.l.b16 %v324
        %v630 = vunpack.c.l.b16 %v338
        %v631 = vunpack.c.l.b16 %v348
        %v632 = vunpack.c.l.b16 %v362
        %v633 = vunpack.c.l.b16 %v372
        %v634 = vunpack.c.l.b16 %v386
        %v635 = vunpack.c.l.b16 %v396
        %v636 = vunpack.c.l.b16 %v410
        %v637 = vunpack.c.l.b16 %v420
        %v638 = vunpack.c.l.b16 %v434
        %v639 = vunpack.c.l.b16 %v444
        %v640 = vunpack.c.l.b16 %v458
        %v641 = vunpack.c.l.b16 %v468
        %v642 = vunpack.c.l.b16 %v482
        %v643 = vunpack.c.l.b16 %v492
        %v644 = vunpack.c.l.b16 %v506
        %v645 = vunpack.c.l.b16 %v516
        %v646 = vunpack.c.l.b16 %v530
        %v647 = vunpack.c.l.b16 %v540
        %v648 = vunpack.c.l.b16 %v554
        %v649 = vunpack.c.l.b16 %v564
        %v650 = vunpack.c.l.b16 %v578
        %v651 = vunpack.c.l.b16 %v588
        %v652 = vunpack.c.l.b16 %v602
        %v653 = vunpack.c.l.b16 %v612
        %v654 = vpack.c.b16 %v623, %v622
        %v655 = vpack.c.b16 %v625, %v624
        %v656 = vpack.c.b16 %v627, %v626
        %v657 = vpack.c.b16 %v629, %v628
        %v658 = vpack.c.b16 %v631, %v630
        %v659 = vpack.c.b16 %v633, %v632
        %v660 = vpack.c.b16 %v635, %v634
        %v661 = vpack.c.b16 %v637, %v636
        %v662 = vpack.c.b16 %v639, %v638
        %v663 = vpack.c.b16 %v641, %v640
        %v664 = vpack.c.b16 %v643, %v642
        %v665 = vpack.c.b16 %v645, %v644
        %v666 = vpack.c.b16 %v647, %v646
        %v667 = vpack.c.b16 %v649, %v648
        %v668 = vpack.c.b16 %v651, %v650
        %v669 = vpack.c.b16 %v653, %v652
        %v678 = vunpack.c.l.b16 %v614
        %v679 = vunpack.c.l.b16 %v615
        %v680 = vunpack.c.l.b16 %v616
        %v681 = vunpack.c.l.b16 %v617
        %v682 = vunpack.c.l.b16 %v618
        %v683 = vunpack.c.l.b16 %v619
        %v684 = vunpack.c.l.b16 %v620
        %v685 = vunpack.c.l.b16 %v621
        %v686 = vpack.c.b16 %v679, %v678
        %v687 = vpack.c.b16 %v681, %v680
        %v688 = vpack.c.b16 %v683, %v682
        %v689 = vpack.c.b16 %v685, %v684
        %vm694 = vcmask 523264
        %v696 = vsel %vm694, %v654, 0
        %v699 = vsel %vm694, %v655, 0
        %v702 = vsel %vm694, %v656, 0
        %v705 = vsel %vm694, %v657, 0
        %v708 = vsel %vm694, %v658, 0
        %v711 = vsel %vm694, %v659, 0
        %v714 = vsel %vm694, %v660, 0
        %v717 = vsel %vm694, %v661, 0
        %v720 = vsel %vm694, %v662, 0
        %v723 = vsel %vm694, %v663, 0
        %v726 = vsel %vm694, %v664, 0
        %v729 = vsel %vm694, %v665, 0
        %v732 = vsel %vm694, %v666, 0
        %v735 = vsel %vm694, %v667, 0
        %v738 = vsel %vm694, %v668, 0
        %v741 = vsel %vm694, %v669, 0
        %743 = vmatprep.subr.bf16.mxu0 0
        %744 = vmatpush1.bf16.msra.mxu0 0
        %745 = vmatprep.subr.bf16.mxu0 0
        %746 = vmatpush1.bf16.msra.mxu0 0
        %747 = vmatprep.subr.bf16.mxu0 0
        %748 = vmatpush1.bf16.msra.mxu0 0
        %749 = vmatprep.subr.bf16.mxu0 0
        %750 = vmatpush1.bf16.msra.mxu0 0
        %751 = vmatprep.subr.bf16.mxu0 0
        %752 = vmatpush1.bf16.msra.mxu0 %v689
        %753 = vmatprep.subr.bf16.mxu0 0
        %754 = vmatpush1.bf16.msra.mxu0 %v688
        %755 = vmatprep.subr.bf16.mxu0 0
        %756 = vmatpush1.bf16.msra.mxu0 %v687
        %757 = vmatprep.subr.bf16.mxu0 0
        %758 = vmatpush1.bf16.msra.mxu0 %v686
        %759 = vmatprep.subr.bf16.mxu0 0
        %760 = vmatpush2.bf16.msra.mxu0 0
        %761 = vmatprep.subr.bf16.mxu0 0
        %762 = vmatpush2.bf16.msra.mxu0 0
        %763 = vmatprep.subr.bf16.mxu0 0
        %764 = vmatpush2.bf16.msra.mxu0 0
        %765 = vmatprep.subr.bf16.mxu0 0
        %766 = vmatpush2.bf16.msra.mxu0 0
        %767 = vmatprep.subr.bf16.mxu0 0
        %768 = vmatpush2.bf16.msra.mxu0 0
        %769 = vmatprep.subr.bf16.mxu0 0
        %770 = vmatpush2.bf16.msra.mxu0 0
        %771 = vmatprep.subr.bf16.mxu0 0
        %772 = vmatpush2.bf16.msra.mxu0 0
        %773 = vmatprep.subr.bf16.mxu0 0
        %774 = vmatpush2.bf16.msra.mxu0 0
        %775 = vmatprep.mubr.bf16.mxu0 0
        %776 = vmatmul.mubr.bf16.gmra.mxu0 %v696
        %v777 = vpop.f32.mrf.mxu0
        %v778 = vadd.f32 0.0, %v777
        %v779 = vpop.f32.mrf.mxu0
        %v780 = vpop.f32.mrf.mxu0
        %v781 = vadd.f32 0.0, %v780
        %v782 = vpop.f32.mrf.mxu0
        %783 = vmatprep.mubr.bf16.mxu0 0
        %784 = vmatmul.mubr.bf16.gmra.mxu0 %v699
        %v785 = vpop.f32.mrf.mxu0
        %v786 = vadd.f32 0.0, %v785
        %v787 = vpop.f32.mrf.mxu0
        %v788 = vpop.f32.mrf.mxu0
        %v789 = vadd.f32 0.0, %v788
        %v790 = vpop.f32.mrf.mxu0
        %791 = vmatprep.mubr.bf16.mxu0 0
        %792 = vmatmul.mubr.bf16.gmra.mxu0 %v702
        %v793 = vpop.f32.mrf.mxu0
        %v794 = vadd.f32 0.0, %v793
        %v795 = vpop.f32.mrf.mxu0
        %v796 = vpop.f32.mrf.mxu0
        %v797 = vadd.f32 0.0, %v796
        %v798 = vpop.f32.mrf.mxu0
        %799 = vmatprep.mubr.bf16.mxu0 0
        %800 = vmatmul.mubr.bf16.gmra.mxu0 %v705
        %v801 = vpop.f32.mrf.mxu0
        %v802 = vadd.f32 0.0, %v801
        %v803 = vpop.f32.mrf.mxu0
        %v804 = vpop.f32.mrf.mxu0
        %v805 = vadd.f32 0.0, %v804
        %v806 = vpop.f32.mrf.mxu0
        %807 = vmatprep.mubr.bf16.mxu0 0
        %808 = vmatmul.mubr.bf16.gmra.mxu0 %v708
        %v809 = vpop.f32.mrf.mxu0
        %v810 = vadd.f32 0.0, %v809
        %v811 = vpop.f32.mrf.mxu0
        %v812 = vpop.f32.mrf.mxu0
        %v813 = vadd.f32 0.0, %v812
        %v814 = vpop.f32.mrf.mxu0
        %815 = vmatprep.mubr.bf16.mxu0 0
        %816 = vmatmul.mubr.bf16.gmra.mxu0 %v711
        %v817 = vpop.f32.mrf.mxu0
        %v818 = vadd.f32 0.0, %v817
        %v819 = vpop.f32.mrf.mxu0
        %v820 = vpop.f32.mrf.mxu0
        %v821 = vadd.f32 0.0, %v820
        %v822 = vpop.f32.mrf.mxu0
        %823 = vmatprep.mubr.bf16.mxu0 0
        %824 = vmatmul.mubr.bf16.gmra.mxu0 %v714
        %v825 = vpop.f32.mrf.mxu0
        %v826 = vadd.f32 0.0, %v825
        %v827 = vpop.f32.mrf.mxu0
        %v828 = vpop.f32.mrf.mxu0
        %v829 = vadd.f32 0.0, %v828
        %v830 = vpop.f32.mrf.mxu0
        %831 = vmatprep.mubr.bf16.mxu0 0
        %832 = vmatmul.mubr.bf16.gmra.mxu0 %v717
        %v833 = vpop.f32.mrf.mxu0
        %v834 = vadd.f32 0.0, %v833
        %v835 = vpop.f32.mrf.mxu0
        %v836 = vpop.f32.mrf.mxu0
        %v837 = vadd.f32 0.0, %v836
        %v838 = vpop.f32.mrf.mxu0
        %839 = vmatprep.mubr.bf16.mxu0 0
        %840 = vmatmul.mubr.bf16.gmra.mxu0 %v720
        %v841 = vpop.f32.mrf.mxu0
        %v842 = vadd.f32 0.0, %v841
        %v843 = vpop.f32.mrf.mxu0
        %v844 = vpop.f32.mrf.mxu0
        %v845 = vadd.f32 0.0, %v844
        %v846 = vpop.f32.mrf.mxu0
        %847 = vmatprep.mubr.bf16.mxu0 0
        %848 = vmatmul.mubr.bf16.gmra.mxu0 %v723
        %v849 = vpop.f32.mrf.mxu0
        %v850 = vadd.f32 0.0, %v849
        %v851 = vpop.f32.mrf.mxu0
        %v852 = vpop.f32.mrf.mxu0
        %v853 = vadd.f32 0.0, %v852
        %v854 = vpop.f32.mrf.mxu0
        %855 = vmatprep.mubr.bf16.mxu0 0
        %856 = vmatmul.mubr.bf16.gmra.mxu0 %v726
        %v857 = vpop.f32.mrf.mxu0
        %v858 = vadd.f32 0.0, %v857
        %v859 = vpop.f32.mrf.mxu0
        %v860 = vpop.f32.mrf.mxu0
        %v861 = vadd.f32 0.0, %v860
        %v862 = vpop.f32.mrf.mxu0
        %863 = vmatprep.mubr.bf16.mxu0 0
        %864 = vmatmul.mubr.bf16.gmra.mxu0 %v729
        %v865 = vpop.f32.mrf.mxu0
        %v866 = vadd.f32 0.0, %v865
        %v867 = vpop.f32.mrf.mxu0
        %v868 = vpop.f32.mrf.mxu0
        %v869 = vadd.f32 0.0, %v868
        %v870 = vpop.f32.mrf.mxu0
        %871 = vmatprep.mubr.bf16.mxu0 0
        %872 = vmatmul.mubr.bf16.gmra.mxu0 %v732
        %v873 = vpop.f32.mrf.mxu0
        %v874 = vadd.f32 0.0, %v873
        %v875 = vpop.f32.mrf.mxu0
        %v876 = vpop.f32.mrf.mxu0
        %v877 = vadd.f32 0.0, %v876
        %v878 = vpop.f32.mrf.mxu0
        %879 = vmatprep.mubr.bf16.mxu0 0
        %880 = vmatmul.mubr.bf16.gmra.mxu0 %v735
        %v881 = vpop.f32.mrf.mxu0
        %v882 = vadd.f32 0.0, %v881
        %v883 = vpop.f32.mrf.mxu0
        %v884 = vpop.f32.mrf.mxu0
        %v885 = vadd.f32 0.0, %v884
        %v886 = vpop.f32.mrf.mxu0
        %887 = vmatprep.mubr.bf16.mxu0 0
        %888 = vmatmul.mubr.bf16.gmra.mxu0 %v738
        %v889 = vpop.f32.mrf.mxu0
        %v890 = vadd.f32 0.0, %v889
        %v891 = vpop.f32.mrf.mxu0
        %v892 = vpop.f32.mrf.mxu0
        %v893 = vadd.f32 0.0, %v892
        %v894 = vpop.f32.mrf.mxu0
        %895 = vmatprep.mubr.bf16.mxu0 0
        %896 = vmatmul.mubr.bf16.gmra.mxu0 %v741
        %v897 = vpop.f32.mrf.mxu0
        %v898 = vadd.f32 0.0, %v897
        %v899 = vpop.f32.mrf.mxu0
        %v900 = vpop.f32.mrf.mxu0
        %v901 = vadd.f32 0.0, %v900
        %v902 = vpop.f32.mrf.mxu0
        %903 = vdwg.mxu0
        %v936 = vunpack.c.l.b16 %v170
        %v937 = vunpack.c.l.b16 %v171
        %v938 = vunpack.c.l.b16 %v172
        %v939 = vunpack.c.l.b16 %v173
        %v940 = vunpack.c.l.b16 %v174
        %v941 = vunpack.c.l.b16 %v175
        %v942 = vunpack.c.l.b16 %v176
        %v943 = vunpack.c.l.b16 %v177
        %v944 = vunpack.c.l.b16 %v178
        %v945 = vunpack.c.l.b16 %v179
        %v946 = vunpack.c.l.b16 %v180
        %v947 = vunpack.c.l.b16 %v181
        %v948 = vunpack.c.l.b16 %v182
        %v949 = vunpack.c.l.b16 %v183
        %v950 = vunpack.c.l.b16 %v184
        %v951 = vunpack.c.l.b16 %v185
        %v952 = vunpack.c.l.b16 %v186
        %v953 = vunpack.c.l.b16 %v187
        %v954 = vunpack.c.l.b16 %v188
        %v955 = vunpack.c.l.b16 %v189
        %v956 = vunpack.c.l.b16 %v190
        %v957 = vunpack.c.l.b16 %v191
        %v958 = vunpack.c.l.b16 %v192
        %v959 = vunpack.c.l.b16 %v193
        %v960 = vunpack.c.l.b16 %v194
        %v961 = vunpack.c.l.b16 %v195
        %v962 = vunpack.c.l.b16 %v196
        %v963 = vunpack.c.l.b16 %v197
        %v964 = vunpack.c.l.b16 %v198
        %v965 = vunpack.c.l.b16 %v199
        %v966 = vunpack.c.l.b16 %v200
        %v967 = vunpack.c.l.b16 %v201
        %v968 = vpack.c.b16 %v937, %v936
        %v969 = vpack.c.b16 %v939, %v938
        %v970 = vpack.c.b16 %v941, %v940
        %v971 = vpack.c.b16 %v943, %v942
        %v972 = vpack.c.b16 %v945, %v944
        %v973 = vpack.c.b16 %v947, %v946
        %v974 = vpack.c.b16 %v949, %v948
        %v975 = vpack.c.b16 %v951, %v950
        %v976 = vpack.c.b16 %v953, %v952
        %v977 = vpack.c.b16 %v955, %v954
        %v978 = vpack.c.b16 %v957, %v956
        %v979 = vpack.c.b16 %v959, %v958
        %v980 = vpack.c.b16 %v961, %v960
        %v981 = vpack.c.b16 %v963, %v962
        %v982 = vpack.c.b16 %v965, %v964
        %v983 = vpack.c.b16 %v967, %v966
        %v992 = vunpack.c.l.b16 %v202
        %v993 = vunpack.c.l.b16 %v203
        %v994 = vunpack.c.l.b16 %v204
        %v995 = vunpack.c.l.b16 %v205
        %v996 = vunpack.c.l.b16 %v206
        %v997 = vunpack.c.l.b16 %v207
        %v998 = vunpack.c.l.b16 %v208
        %v999 = vunpack.c.l.b16 %v209
        %v1000 = vpack.c.b16 %v993, %v992
        %v1001 = vpack.c.b16 %v995, %v994
        %v1002 = vpack.c.b16 %v997, %v996
        %v1003 = vpack.c.b16 %v999, %v998
        %v1009 = vsel %vm694, %v968, 0
        %v1012 = vsel %vm694, %v969, 0
        %v1015 = vsel %vm694, %v970, 0
        %v1018 = vsel %vm694, %v971, 0
        %v1021 = vsel %vm694, %v972, 0
        %v1024 = vsel %vm694, %v973, 0
        %v1027 = vsel %vm694, %v974, 0
        %v1030 = vsel %vm694, %v975, 0
        %v1033 = vsel %vm694, %v976, 0
        %v1036 = vsel %vm694, %v977, 0
        %v1039 = vsel %vm694, %v978, 0
        %v1042 = vsel %vm694, %v979, 0
        %v1045 = vsel %vm694, %v980, 0
        %v1048 = vsel %vm694, %v981, 0
        %v1051 = vsel %vm694, %v982, 0
        %v1054 = vsel %vm694, %v983, 0
        %1056 = vmatprep.subr.bf16.mxu0 0
        %1057 = vmatpush1.bf16.msra.mxu0 0
        %1058 = vmatprep.subr.bf16.mxu0 0
        %1059 = vmatpush1.bf16.msra.mxu0 0
        %1060 = vmatprep.subr.bf16.mxu0 0
        %1061 = vmatpush1.bf16.msra.mxu0 0
        %1062 = vmatprep.subr.bf16.mxu0 0
        %1063 = vmatpush1.bf16.msra.mxu0 0
        %1064 = vmatprep.subr.bf16.mxu0 0
        %1065 = vmatpush1.bf16.msra.mxu0 %v1003
        %1066 = vmatprep.subr.bf16.mxu0 0
        %1067 = vmatpush1.bf16.msra.mxu0 %v1002
        %1068 = vmatprep.subr.bf16.mxu0 0
        %1069 = vmatpush1.bf16.msra.mxu0 %v1001
        %1070 = vmatprep.subr.bf16.mxu0 0
        %1071 = vmatpush1.bf16.msra.mxu0 %v1000
        %1072 = vmatprep.subr.bf16.mxu0 0
        %1073 = vmatpush2.bf16.msra.mxu0 0
        %1074 = vmatprep.subr.bf16.mxu0 0
        %1075 = vmatpush2.bf16.msra.mxu0 0
        %1076 = vmatprep.subr.bf16.mxu0 0
        %1077 = vmatpush2.bf16.msra.mxu0 0
        %1078 = vmatprep.subr.bf16.mxu0 0
        %1079 = vmatpush2.bf16.msra.mxu0 0
        %1080 = vmatprep.subr.bf16.mxu0 0
        %1081 = vmatpush2.bf16.msra.mxu0 0
        %1082 = vmatprep.subr.bf16.mxu0 0
        %1083 = vmatpush2.bf16.msra.mxu0 0
        %1084 = vmatprep.subr.bf16.mxu0 0
        %1085 = vmatpush2.bf16.msra.mxu0 0
        %1086 = vmatprep.subr.bf16.mxu0 0
        %1087 = vmatpush2.bf16.msra.mxu0 0
        %1088 = vmatprep.mubr.bf16.mxu0 0
        %1089 = vmatmul.mubr.bf16.gmra.mxu0 %v1009
        %v1090 = vpop.f32.mrf.mxu0
        %v1091 = vadd.f32 %v778, %v1090
        %v1092 = vpop.f32.mrf.mxu0
        %v1093 = vpop.f32.mrf.mxu0
        %v1094 = vadd.f32 %v781, %v1093
        %v1095 = vpop.f32.mrf.mxu0
        %1096 = vmatprep.mubr.bf16.mxu0 0
        %1097 = vmatmul.mubr.bf16.gmra.mxu0 %v1012
        %v1098 = vpop.f32.mrf.mxu0
        %v1099 = vadd.f32 %v786, %v1098
        %v1100 = vpop.f32.mrf.mxu0
        %v1101 = vpop.f32.mrf.mxu0
        %v1102 = vadd.f32 %v789, %v1101
        %v1103 = vpop.f32.mrf.mxu0
        %1104 = vmatprep.mubr.bf16.mxu0 0
        %1105 = vmatmul.mubr.bf16.gmra.mxu0 %v1015
        %v1106 = vpop.f32.mrf.mxu0
        %v1107 = vadd.f32 %v794, %v1106
        %v1108 = vpop.f32.mrf.mxu0
        %v1109 = vpop.f32.mrf.mxu0
        %v1110 = vadd.f32 %v797, %v1109
        %v1111 = vpop.f32.mrf.mxu0
        %1112 = vmatprep.mubr.bf16.mxu0 0
        %1113 = vmatmul.mubr.bf16.gmra.mxu0 %v1018
        %v1114 = vpop.f32.mrf.mxu0
        %v1115 = vadd.f32 %v802, %v1114
        %v1116 = vpop.f32.mrf.mxu0
        %v1117 = vpop.f32.mrf.mxu0
        %v1118 = vadd.f32 %v805, %v1117
        %v1119 = vpop.f32.mrf.mxu0
        %1120 = vmatprep.mubr.bf16.mxu0 0
        %1121 = vmatmul.mubr.bf16.gmra.mxu0 %v1021
        %v1122 = vpop.f32.mrf.mxu0
        %v1123 = vadd.f32 %v810, %v1122
        %v1124 = vpop.f32.mrf.mxu0
        %v1125 = vpop.f32.mrf.mxu0
        %v1126 = vadd.f32 %v813, %v1125
        %v1127 = vpop.f32.mrf.mxu0
        %1128 = vmatprep.mubr.bf16.mxu0 0
        %1129 = vmatmul.mubr.bf16.gmra.mxu0 %v1024
        %v1130 = vpop.f32.mrf.mxu0
        %v1131 = vadd.f32 %v818, %v1130
        %v1132 = vpop.f32.mrf.mxu0
        %v1133 = vpop.f32.mrf.mxu0
        %v1134 = vadd.f32 %v821, %v1133
        %v1135 = vpop.f32.mrf.mxu0
        %1136 = vmatprep.mubr.bf16.mxu0 0
        %1137 = vmatmul.mubr.bf16.gmra.mxu0 %v1027
        %v1138 = vpop.f32.mrf.mxu0
        %v1139 = vadd.f32 %v826, %v1138
        %v1140 = vpop.f32.mrf.mxu0
        %v1141 = vpop.f32.mrf.mxu0
        %v1142 = vadd.f32 %v829, %v1141
        %v1143 = vpop.f32.mrf.mxu0
        %1144 = vmatprep.mubr.bf16.mxu0 0
        %1145 = vmatmul.mubr.bf16.gmra.mxu0 %v1030
        %v1146 = vpop.f32.mrf.mxu0
        %v1147 = vadd.f32 %v834, %v1146
        %v1148 = vpop.f32.mrf.mxu0
        %v1149 = vpop.f32.mrf.mxu0
        %v1150 = vadd.f32 %v837, %v1149
        %v1151 = vpop.f32.mrf.mxu0
        %1152 = vmatprep.mubr.bf16.mxu0 0
        %1153 = vmatmul.mubr.bf16.gmra.mxu0 %v1033
        %v1154 = vpop.f32.mrf.mxu0
        %v1155 = vadd.f32 %v842, %v1154
        %v1156 = vpop.f32.mrf.mxu0
        %v1157 = vpop.f32.mrf.mxu0
        %v1158 = vadd.f32 %v845, %v1157
        %v1159 = vpop.f32.mrf.mxu0
        %1160 = vmatprep.mubr.bf16.mxu0 0
        %1161 = vmatmul.mubr.bf16.gmra.mxu0 %v1036
        %v1162 = vpop.f32.mrf.mxu0
        %v1163 = vadd.f32 %v850, %v1162
        %v1164 = vpop.f32.mrf.mxu0
        %v1165 = vpop.f32.mrf.mxu0
        %v1166 = vadd.f32 %v853, %v1165
        %v1167 = vpop.f32.mrf.mxu0
        %1168 = vmatprep.mubr.bf16.mxu0 0
        %1169 = vmatmul.mubr.bf16.gmra.mxu0 %v1039
        %v1170 = vpop.f32.mrf.mxu0
        %v1171 = vadd.f32 %v858, %v1170
        %v1172 = vpop.f32.mrf.mxu0
        %v1173 = vpop.f32.mrf.mxu0
        %v1174 = vadd.f32 %v861, %v1173
        %v1175 = vpop.f32.mrf.mxu0
        %1176 = vmatprep.mubr.bf16.mxu0 0
        %1177 = vmatmul.mubr.bf16.gmra.mxu0 %v1042
        %v1178 = vpop.f32.mrf.mxu0
        %v1179 = vadd.f32 %v866, %v1178
        %v1180 = vpop.f32.mrf.mxu0
        %v1181 = vpop.f32.mrf.mxu0
        %v1182 = vadd.f32 %v869, %v1181
        %v1183 = vpop.f32.mrf.mxu0
        %1184 = vmatprep.mubr.bf16.mxu0 0
        %1185 = vmatmul.mubr.bf16.gmra.mxu0 %v1045
        %v1186 = vpop.f32.mrf.mxu0
        %v1187 = vadd.f32 %v874, %v1186
        %v1188 = vpop.f32.mrf.mxu0
        %v1189 = vpop.f32.mrf.mxu0
        %v1190 = vadd.f32 %v877, %v1189
        %v1191 = vpop.f32.mrf.mxu0
        %1192 = vmatprep.mubr.bf16.mxu0 0
        %1193 = vmatmul.mubr.bf16.gmra.mxu0 %v1048
        %v1194 = vpop.f32.mrf.mxu0
        %v1195 = vadd.f32 %v882, %v1194
        %v1196 = vpop.f32.mrf.mxu0
        %v1197 = vpop.f32.mrf.mxu0
        %v1198 = vadd.f32 %v885, %v1197
        %v1199 = vpop.f32.mrf.mxu0
        %1200 = vmatprep.mubr.bf16.mxu0 0
        %1201 = vmatmul.mubr.bf16.gmra.mxu0 %v1051
        %v1202 = vpop.f32.mrf.mxu0
        %v1203 = vadd.f32 %v890, %v1202
        %v1204 = vpop.f32.mrf.mxu0
        %v1205 = vpop.f32.mrf.mxu0
        %v1206 = vadd.f32 %v893, %v1205
        %v1207 = vpop.f32.mrf.mxu0
        %1208 = vmatprep.mubr.bf16.mxu0 0
        %1209 = vmatmul.mubr.bf16.gmra.mxu0 %v1054
        %v1210 = vpop.f32.mrf.mxu0
        %v1211 = vadd.f32 %v898, %v1210
        %v1212 = vpop.f32.mrf.mxu0
        %v1213 = vpop.f32.mrf.mxu0
        %v1214 = vadd.f32 %v901, %v1213
        %v1215 = vpop.f32.mrf.mxu0
        %1216 = vdwg.mxu0
        %v1217 = vld [vmem:[%s168] sm:$0xe]
        %v1218 = vld [vmem:[%s168 + $0xc] sm:$0xe]
        %v1219 = vld [vmem:[%s168 + $0x18] sm:$0xe]
        %v1220 = vld [vmem:[%s168 + $0x24] sm:$0xe]
        %v1221 = vld [vmem:[%s168 + $0x30] sm:$0xe]
        %v1222 = vld [vmem:[%s168 + $0x3c] sm:$0xe]
        %v1223 = vld [vmem:[%s168 + $0x48] sm:$0xe]
        %v1224 = vld [vmem:[%s168 + $0x54] sm:$0xe]
        %v1225 = vld [vmem:[%s168 + $0x60] sm:$0xe]
        %v1226 = vld [vmem:[%s168 + $0x6c] sm:$0xe]
        %v1227 = vld [vmem:[%s168 + $0x78] sm:$0xe]
        %v1228 = vld [vmem:[%s168 + $0x84] sm:$0xe]
        %v1229 = vld [vmem:[%s168 + $0x90] sm:$0xe]
        %v1230 = vld [vmem:[%s168 + $0x9c] sm:$0xe]
        %v1231 = vld [vmem:[%s168 + $0xa8] sm:$0xe]
        %v1232 = vld [vmem:[%s168 + $0xb4] sm:$0xe]
        %vm1265 = vcmask 1042432
        %vm1266 = vcmask 1046532
        %vm1267 = vmor %vm1265, %vm1266
        %v1268 = vrot.slane %v1217, 5
        %v1269 = vrot.slane %v1268, 4
        %v1270 = vrot.slane %v171, 5
        %v1271 = vsel %vm1267, %v1269, %v1270
        %v1272 = vrot.slane %v1270, 4
        %v1273 = vrot.slane %v210, 5
        %v1274 = vsel %vm1267, %v1272, %v1273
        %v1275 = vrot.slane %v1218, 5
        %v1276 = vrot.slane %v1275, 4
        %v1277 = vrot.slane %v173, 5
        %v1278 = vsel %vm1267, %v1276, %v1277
        %v1279 = vrot.slane %v1277, 4
        %v1280 = vrot.slane %v211, 5
        %v1281 = vsel %vm1267, %v1279, %v1280
        %v1282 = vrot.slane %v1219, 5
        %v1283 = vrot.slane %v1282, 4
        %v1284 = vrot.slane %v175, 5
        %v1285 = vsel %vm1267, %v1283, %v1284
        %v1286 = vrot.slane %v1284, 4
        %v1287 = vrot.slane %v212, 5
        %v1288 = vsel %vm1267, %v1286, %v1287
        %v1289 = vrot.slane %v1220, 5
        %v1290 = vrot.slane %v1289, 4
        %v1291 = vrot.slane %v177, 5
        %v1292 = vsel %vm1267, %v1290, %v1291
        %v1293 = vrot.slane %v1291, 4
        %v1294 = vrot.slane %v213, 5
        %v1295 = vsel %vm1267, %v1293, %v1294
        %v1296 = vrot.slane %v1221, 5
        %v1297 = vrot.slane %v1296, 4
        %v1298 = vrot.slane %v179, 5
        %v1299 = vsel %vm1267, %v1297, %v1298
        %v1300 = vrot.slane %v1298, 4
        %v1301 = vrot.slane %v214, 5
        %v1302 = vsel %vm1267, %v1300, %v1301
        %v1303 = vrot.slane %v1222, 5
        %v1304 = vrot.slane %v1303, 4
        %v1305 = vrot.slane %v181, 5
        %v1306 = vsel %vm1267, %v1304, %v1305
        %v1307 = vrot.slane %v1305, 4
        %v1308 = vrot.slane %v215, 5
        %v1309 = vsel %vm1267, %v1307, %v1308
        %v1310 = vrot.slane %v1223, 5
        %v1311 = vrot.slane %v1310, 4
        %v1312 = vrot.slane %v183, 5
        %v1313 = vsel %vm1267, %v1311, %v1312
        %v1314 = vrot.slane %v1312, 4
        %v1315 = vrot.slane %v216, 5
        %v1316 = vsel %vm1267, %v1314, %v1315
        %v1317 = vrot.slane %v1224, 5
        %v1318 = vrot.slane %v1317, 4
        %v1319 = vrot.slane %v185, 5
        %v1320 = vsel %vm1267, %v1318, %v1319
        %v1321 = vrot.slane %v1319, 4
        %v1322 = vrot.slane %v217, 5
        %v1323 = vsel %vm1267, %v1321, %v1322
        %v1324 = vrot.slane %v1225, 5
        %v1325 = vrot.slane %v1324, 4
        %v1326 = vrot.slane %v187, 5
        %v1327 = vsel %vm1267, %v1325, %v1326
        %v1328 = vrot.slane %v1326, 4
        %v1329 = vrot.slane %v218, 5
        %v1330 = vsel %vm1267, %v1328, %v1329
        %v1331 = vrot.slane %v1226, 5
        %v1332 = vrot.slane %v1331, 4
        %v1333 = vrot.slane %v189, 5
        %v1334 = vsel %vm1267, %v1332, %v1333
        %v1335 = vrot.slane %v1333, 4
        %v1336 = vrot.slane %v219, 5
        %v1337 = vsel %vm1267, %v1335, %v1336
        %v1338 = vrot.slane %v1227, 5
        %v1339 = vrot.slane %v1338, 4
        %v1340 = vrot.slane %v191, 5
        %v1341 = vsel %vm1267, %v1339, %v1340
        %v1342 = vrot.slane %v1340, 4
        %v1343 = vrot.slane %v220, 5
        %v1344 = vsel %vm1267, %v1342, %v1343
        %v1345 = vrot.slane %v1228, 5
        %v1346 = vrot.slane %v1345, 4
        %v1347 = vrot.slane %v193, 5
        %v1348 = vsel %vm1267, %v1346, %v1347
        %v1349 = vrot.slane %v1347, 4
        %v1350 = vrot.slane %v221, 5
        %v1351 = vsel %vm1267, %v1349, %v1350
        %v1352 = vrot.slane %v1229, 5
        %v1353 = vrot.slane %v1352, 4
        %v1354 = vrot.slane %v195, 5
        %v1355 = vsel %vm1267, %v1353, %v1354
        %v1356 = vrot.slane %v1354, 4
        %v1357 = vrot.slane %v222, 5
        %v1358 = vsel %vm1267, %v1356, %v1357
        %v1359 = vrot.slane %v1230, 5
        %v1360 = vrot.slane %v1359, 4
        %v1361 = vrot.slane %v197, 5
        %v1362 = vsel %vm1267, %v1360, %v1361
        %v1363 = vrot.slane %v1361, 4
        %v1364 = vrot.slane %v223, 5
        %v1365 = vsel %vm1267, %v1363, %v1364
        %v1366 = vrot.slane %v1231, 5
        %v1367 = vrot.slane %v1366, 4
        %v1368 = vrot.slane %v199, 5
        %v1369 = vsel %vm1267, %v1367, %v1368
        %v1370 = vrot.slane %v1368, 4
        %v1371 = vrot.slane %v224, 5
        %v1372 = vsel %vm1267, %v1370, %v1371
        %v1373 = vrot.slane %v1232, 5
        %v1374 = vrot.slane %v1373, 4
        %v1375 = vrot.slane %v201, 5
        %v1376 = vsel %vm1267, %v1374, %v1375
        %v1377 = vrot.slane %v1375, 4
        %v1378 = vrot.slane %v225, 5
        %v1379 = vsel %vm1267, %v1377, %v1378
        %s1380 = scalar_lea.vmem %s1, 64
        %v1381 = vld [vmem:[%s1380] sm:$0xf]
        %v1382 = vld [vmem:[%s1380 + $0x4] sm:$0xf]
        %v1383 = vld [vmem:[%s1380 + $0x8] sm:$0xf]
        %v1384 = vld [vmem:[%s1380 + $0xc] sm:$0xf]
        %v1385 = vld [vmem:[%s1380 + $0x10] sm:$0xf]
        %v1386 = vld [vmem:[%s1380 + $0x14] sm:$0xf]
        %v1387 = vld [vmem:[%s1380 + $0x18] sm:$0xf]
        %v1388 = vld [vmem:[%s1380 + $0x1c] sm:$0xf]
        %v1389 = vunpack.c.l.b16 %v1271
        %v1390 = vunpack.c.l.b16 %v1274
        %v1391 = vunpack.c.l.b16 %v1278
        %v1392 = vunpack.c.l.b16 %v1281
        %v1393 = vunpack.c.l.b16 %v1285
        %v1394 = vunpack.c.l.b16 %v1288
        %v1395 = vunpack.c.l.b16 %v1292
        %v1396 = vunpack.c.l.b16 %v1295
        %v1397 = vunpack.c.l.b16 %v1299
        %v1398 = vunpack.c.l.b16 %v1302
        %v1399 = vunpack.c.l.b16 %v1306
        %v1400 = vunpack.c.l.b16 %v1309
        %v1401 = vunpack.c.l.b16 %v1313
        %v1402 = vunpack.c.l.b16 %v1316
        %v1403 = vunpack.c.l.b16 %v1320
        %v1404 = vunpack.c.l.b16 %v1323
        %v1405 = vunpack.c.l.b16 %v1327
        %v1406 = vunpack.c.l.b16 %v1330
        %v1407 = vunpack.c.l.b16 %v1334
        %v1408 = vunpack.c.l.b16 %v1337
        %v1409 = vunpack.c.l.b16 %v1341
        %v1410 = vunpack.c.l.b16 %v1344
        %v1411 = vunpack.c.l.b16 %v1348
        %v1412 = vunpack.c.l.b16 %v1351
        %v1413 = vunpack.c.l.b16 %v1355
        %v1414 = vunpack.c.l.b16 %v1358
        %v1415 = vunpack.c.l.b16 %v1362
        %v1416 = vunpack.c.l.b16 %v1365
        %v1417 = vunpack.c.l.b16 %v1369
        %v1418 = vunpack.c.l.b16 %v1372
        %v1419 = vunpack.c.l.b16 %v1376
        %v1420 = vunpack.c.l.b16 %v1379
        %v1421 = vpack.c.b16 %v1390, %v1389
        %v1422 = vpack.c.b16 %v1392, %v1391
        %v1423 = vpack.c.b16 %v1394, %v1393
        %v1424 = vpack.c.b16 %v1396, %v1395
        %v1425 = vpack.c.b16 %v1398, %v1397
        %v1426 = vpack.c.b16 %v1400, %v1399
        %v1427 = vpack.c.b16 %v1402, %v1401
        %v1428 = vpack.c.b16 %v1404, %v1403
        %v1429 = vpack.c.b16 %v1406, %v1405
        %v1430 = vpack.c.b16 %v1408, %v1407
        %v1431 = vpack.c.b16 %v1410, %v1409
        %v1432 = vpack.c.b16 %v1412, %v1411
        %v1433 = vpack.c.b16 %v1414, %v1413
        %v1434 = vpack.c.b16 %v1416, %v1415
        %v1435 = vpack.c.b16 %v1418, %v1417
        %v1436 = vpack.c.b16 %v1420, %v1419
        %v1445 = vunpack.c.l.b16 %v1381
        %v1446 = vunpack.c.l.b16 %v1382
        %v1447 = vunpack.c.l.b16 %v1383
        %v1448 = vunpack.c.l.b16 %v1384
        %v1449 = vunpack.c.l.b16 %v1385
        %v1450 = vunpack.c.l.b16 %v1386
        %v1451 = vunpack.c.l.b16 %v1387
        %v1452 = vunpack.c.l.b16 %v1388
        %v1453 = vpack.c.b16 %v1446, %v1445
        %v1454 = vpack.c.b16 %v1448, %v1447
        %v1455 = vpack.c.b16 %v1450, %v1449
        %v1456 = vpack.c.b16 %v1452, %v1451
        %v1462 = vsel %vm694, %v1421, 0
        %v1465 = vsel %vm694, %v1422, 0
        %v1468 = vsel %vm694, %v1423, 0
        %v1471 = vsel %vm694, %v1424, 0
        %v1474 = vsel %vm694, %v1425, 0
        %v1477 = vsel %vm694, %v1426, 0
        %v1480 = vsel %vm694, %v1427, 0
        %v1483 = vsel %vm694, %v1428, 0
        %v1486 = vsel %vm694, %v1429, 0
        %v1489 = vsel %vm694, %v1430, 0
        %v1492 = vsel %vm694, %v1431, 0
        %v1495 = vsel %vm694, %v1432, 0
        %v1498 = vsel %vm694, %v1433, 0
        %v1501 = vsel %vm694, %v1434, 0
        %v1504 = vsel %vm694, %v1435, 0
        %v1507 = vsel %vm694, %v1436, 0
        %1509 = vmatprep.subr.bf16.mxu0 0
        %1510 = vmatpush1.bf16.msra.mxu0 0
        %1511 = vmatprep.subr.bf16.mxu0 0
        %1512 = vmatpush1.bf16.msra.mxu0 0
        %1513 = vmatprep.subr.bf16.mxu0 0
        %1514 = vmatpush1.bf16.msra.mxu0 0
        %1515 = vmatprep.subr.bf16.mxu0 0
        %1516 = vmatpush1.bf16.msra.mxu0 0
        %1517 = vmatprep.subr.bf16.mxu0 0
        %1518 = vmatpush1.bf16.msra.mxu0 %v1456
        %1519 = vmatprep.subr.bf16.mxu0 0
        %1520 = vmatpush1.bf16.msra.mxu0 %v1455
        %1521 = vmatprep.subr.bf16.mxu0 0
        %1522 = vmatpush1.bf16.msra.mxu0 %v1454
        %1523 = vmatprep.subr.bf16.mxu0 0
        %1524 = vmatpush1.bf16.msra.mxu0 %v1453
        %1525 = vmatprep.subr.bf16.mxu0 0
        %1526 = vmatpush2.bf16.msra.mxu0 0
        %1527 = vmatprep.subr.bf16.mxu0 0
        %1528 = vmatpush2.bf16.msra.mxu0 0
        %1529 = vmatprep.subr.bf16.mxu0 0
        %1530 = vmatpush2.bf16.msra.mxu0 0
        %1531 = vmatprep.subr.bf16.mxu0 0
        %1532 = vmatpush2.bf16.msra.mxu0 0
        %1533 = vmatprep.subr.bf16.mxu0 0
        %1534 = vmatpush2.bf16.msra.mxu0 0
        %1535 = vmatprep.subr.bf16.mxu0 0
        %1536 = vmatpush2.bf16.msra.mxu0 0
        %1537 = vmatprep.subr.bf16.mxu0 0
        %1538 = vmatpush2.bf16.msra.mxu0 0
        %1539 = vmatprep.subr.bf16.mxu0 0
        %1540 = vmatpush2.bf16.msra.mxu0 0
        %1541 = vmatprep.mubr.bf16.mxu0 0
        %1542 = vmatmul.mubr.bf16.gmra.mxu0 %v1462
        %v1543 = vpop.f32.mrf.mxu0
        %v1544 = vadd.f32 0.0, %v1543
        %v1545 = vpop.f32.mrf.mxu0
        %v1546 = vpop.f32.mrf.mxu0
        %v1547 = vadd.f32 0.0, %v1546
        %v1548 = vpop.f32.mrf.mxu0
        %1549 = vmatprep.mubr.bf16.mxu0 0
        %1550 = vmatmul.mubr.bf16.gmra.mxu0 %v1465
        %v1551 = vpop.f32.mrf.mxu0
        %v1552 = vadd.f32 0.0, %v1551
        %v1553 = vpop.f32.mrf.mxu0
        %v1554 = vpop.f32.mrf.mxu0
        %v1555 = vadd.f32 0.0, %v1554
        %v1556 = vpop.f32.mrf.mxu0
        %1557 = vmatprep.mubr.bf16.mxu0 0
        %1558 = vmatmul.mubr.bf16.gmra.mxu0 %v1468
        %v1559 = vpop.f32.mrf.mxu0
        %v1560 = vadd.f32 0.0, %v1559
        %v1561 = vpop.f32.mrf.mxu0
        %v1562 = vpop.f32.mrf.mxu0
        %v1563 = vadd.f32 0.0, %v1562
        %v1564 = vpop.f32.mrf.mxu0
        %1565 = vmatprep.mubr.bf16.mxu0 0
        %1566 = vmatmul.mubr.bf16.gmra.mxu0 %v1471
        %v1567 = vpop.f32.mrf.mxu0
        %v1568 = vadd.f32 0.0, %v1567
        %v1569 = vpop.f32.mrf.mxu0
        %v1570 = vpop.f32.mrf.mxu0
        %v1571 = vadd.f32 0.0, %v1570
        %v1572 = vpop.f32.mrf.mxu0
        %1573 = vmatprep.mubr.bf16.mxu0 0
        %1574 = vmatmul.mubr.bf16.gmra.mxu0 %v1474
        %v1575 = vpop.f32.mrf.mxu0
        %v1576 = vadd.f32 0.0, %v1575
        %v1577 = vpop.f32.mrf.mxu0
        %v1578 = vpop.f32.mrf.mxu0
        %v1579 = vadd.f32 0.0, %v1578
        %v1580 = vpop.f32.mrf.mxu0
        %1581 = vmatprep.mubr.bf16.mxu0 0
        %1582 = vmatmul.mubr.bf16.gmra.mxu0 %v1477
        %v1583 = vpop.f32.mrf.mxu0
        %v1584 = vadd.f32 0.0, %v1583
        %v1585 = vpop.f32.mrf.mxu0
        %v1586 = vpop.f32.mrf.mxu0
        %v1587 = vadd.f32 0.0, %v1586
        %v1588 = vpop.f32.mrf.mxu0
        %1589 = vmatprep.mubr.bf16.mxu0 0
        %1590 = vmatmul.mubr.bf16.gmra.mxu0 %v1480
        %v1591 = vpop.f32.mrf.mxu0
        %v1592 = vadd.f32 0.0, %v1591
        %v1593 = vpop.f32.mrf.mxu0
        %v1594 = vpop.f32.mrf.mxu0
        %v1595 = vadd.f32 0.0, %v1594
        %v1596 = vpop.f32.mrf.mxu0
        %1597 = vmatprep.mubr.bf16.mxu0 0
        %1598 = vmatmul.mubr.bf16.gmra.mxu0 %v1483
        %v1599 = vpop.f32.mrf.mxu0
        %v1600 = vadd.f32 0.0, %v1599
        %v1601 = vpop.f32.mrf.mxu0
        %v1602 = vpop.f32.mrf.mxu0
        %v1603 = vadd.f32 0.0, %v1602
        %v1604 = vpop.f32.mrf.mxu0
        %1605 = vmatprep.mubr.bf16.mxu0 0
        %1606 = vmatmul.mubr.bf16.gmra.mxu0 %v1486
        %v1607 = vpop.f32.mrf.mxu0
        %v1608 = vadd.f32 0.0, %v1607
        %v1609 = vpop.f32.mrf.mxu0
        %v1610 = vpop.f32.mrf.mxu0
        %v1611 = vadd.f32 0.0, %v1610
        %v1612 = vpop.f32.mrf.mxu0
        %1613 = vmatprep.mubr.bf16.mxu0 0
        %1614 = vmatmul.mubr.bf16.gmra.mxu0 %v1489
        %v1615 = vpop.f32.mrf.mxu0
        %v1616 = vadd.f32 0.0, %v1615
        %v1617 = vpop.f32.mrf.mxu0
        %v1618 = vpop.f32.mrf.mxu0
        %v1619 = vadd.f32 0.0, %v1618
        %v1620 = vpop.f32.mrf.mxu0
        %1621 = vmatprep.mubr.bf16.mxu0 0
        %1622 = vmatmul.mubr.bf16.gmra.mxu0 %v1492
        %v1623 = vpop.f32.mrf.mxu0
        %v1624 = vadd.f32 0.0, %v1623
        %v1625 = vpop.f32.mrf.mxu0
        %v1626 = vpop.f32.mrf.mxu0
        %v1627 = vadd.f32 0.0, %v1626
        %v1628 = vpop.f32.mrf.mxu0
        %1629 = vmatprep.mubr.bf16.mxu0 0
        %1630 = vmatmul.mubr.bf16.gmra.mxu0 %v1495
        %v1631 = vpop.f32.mrf.mxu0
        %v1632 = vadd.f32 0.0, %v1631
        %v1633 = vpop.f32.mrf.mxu0
        %v1634 = vpop.f32.mrf.mxu0
        %v1635 = vadd.f32 0.0, %v1634
        %v1636 = vpop.f32.mrf.mxu0
        %1637 = vmatprep.mubr.bf16.mxu0 0
        %1638 = vmatmul.mubr.bf16.gmra.mxu0 %v1498
        %v1639 = vpop.f32.mrf.mxu0
        %v1640 = vadd.f32 0.0, %v1639
        %v1641 = vpop.f32.mrf.mxu0
        %v1642 = vpop.f32.mrf.mxu0
        %v1643 = vadd.f32 0.0, %v1642
        %v1644 = vpop.f32.mrf.mxu0
        %1645 = vmatprep.mubr.bf16.mxu0 0
        %1646 = vmatmul.mubr.bf16.gmra.mxu0 %v1501
        %v1647 = vpop.f32.mrf.mxu0
        %v1648 = vadd.f32 0.0, %v1647
        %v1649 = vpop.f32.mrf.mxu0
        %v1650 = vpop.f32.mrf.mxu0
        %v1651 = vadd.f32 0.0, %v1650
        %v1652 = vpop.f32.mrf.mxu0
        %1653 = vmatprep.mubr.bf16.mxu0 0
        %1654 = vmatmul.mubr.bf16.gmra.mxu0 %v1504
        %v1655 = vpop.f32.mrf.mxu0
        %v1656 = vadd.f32 0.0, %v1655
        %v1657 = vpop.f32.mrf.mxu0
        %v1658 = vpop.f32.mrf.mxu0
        %v1659 = vadd.f32 0.0, %v1658
        %v1660 = vpop.f32.mrf.mxu0
        %1661 = vmatprep.mubr.bf16.mxu0 0
        %1662 = vmatmul.mubr.bf16.gmra.mxu0 %v1507
        %v1663 = vpop.f32.mrf.mxu0
        %v1664 = vadd.f32 0.0, %v1663
        %v1665 = vpop.f32.mrf.mxu0
        %v1666 = vpop.f32.mrf.mxu0
        %v1667 = vadd.f32 0.0, %v1666
        %v1668 = vpop.f32.mrf.mxu0
        %1669 = vdwg.mxu0
        %v1670 = vadd.f32 %v1091, %v1544
        %v1671 = vadd.f32 %v1094, %v1547
        %v1672 = vadd.f32 %v1099, %v1552
        %v1673 = vadd.f32 %v1102, %v1555
        %v1674 = vadd.f32 %v1107, %v1560
        %v1675 = vadd.f32 %v1110, %v1563
        %v1676 = vadd.f32 %v1115, %v1568
        %v1677 = vadd.f32 %v1118, %v1571
        %v1678 = vadd.f32 %v1123, %v1576
        %v1679 = vadd.f32 %v1126, %v1579
        %v1680 = vadd.f32 %v1131, %v1584
        %v1681 = vadd.f32 %v1134, %v1587
        %v1682 = vadd.f32 %v1139, %v1592
        %v1683 = vadd.f32 %v1142, %v1595
        %v1684 = vadd.f32 %v1147, %v1600
        %v1685 = vadd.f32 %v1150, %v1603
        %v1686 = vadd.f32 %v1155, %v1608
        %v1687 = vadd.f32 %v1158, %v1611
        %v1688 = vadd.f32 %v1163, %v1616
        %v1689 = vadd.f32 %v1166, %v1619
        %v1690 = vadd.f32 %v1171, %v1624
        %v1691 = vadd.f32 %v1174, %v1627
        %v1692 = vadd.f32 %v1179, %v1632
        %v1693 = vadd.f32 %v1182, %v1635
        %v1694 = vadd.f32 %v1187, %v1640
        %v1695 = vadd.f32 %v1190, %v1643
        %v1696 = vadd.f32 %v1195, %v1648
        %v1697 = vadd.f32 %v1198, %v1651
        %v1698 = vadd.f32 %v1203, %v1656
        %v1699 = vadd.f32 %v1206, %v1659
        %v1700 = vadd.f32 %v1211, %v1664
        %v1701 = vadd.f32 %v1214, %v1667
        %s1702 = scalar_lea.vmem %s168, 12
        %v1703 = vld [vmem:[%s1702] sm:$0xf]
        %v1704 = vld [vmem:[%s1702 + $0x4] sm:$0xf]
        %v1705 = vld [vmem:[%s1702 + $0xc] sm:$0xf]
        %v1706 = vld [vmem:[%s1702 + $0x10] sm:$0xf]
        %v1707 = vld [vmem:[%s1702 + $0x18] sm:$0xf]
        %v1708 = vld [vmem:[%s1702 + $0x1c] sm:$0xf]
        %v1709 = vld [vmem:[%s1702 + $0x24] sm:$0xf]
        %v1710 = vld [vmem:[%s1702 + $0x28] sm:$0xf]
        %v1711 = vld [vmem:[%s1702 + $0x30] sm:$0xf]
        %v1712 = vld [vmem:[%s1702 + $0x34] sm:$0xf]
        %v1713 = vld [vmem:[%s1702 + $0x3c] sm:$0xf]
        %v1714 = vld [vmem:[%s1702 + $0x40] sm:$0xf]
        %v1715 = vld [vmem:[%s1702 + $0x48] sm:$0xf]
        %v1716 = vld [vmem:[%s1702 + $0x4c] sm:$0xf]
        %v1717 = vld [vmem:[%s1702 + $0x54] sm:$0xf]
        %v1718 = vld [vmem:[%s1702 + $0x58] sm:$0xf]
        %v1719 = vld [vmem:[%s1702 + $0x60] sm:$0xf]
        %v1720 = vld [vmem:[%s1702 + $0x64] sm:$0xf]
        %v1721 = vld [vmem:[%s1702 + $0x6c] sm:$0xf]
        %v1722 = vld [vmem:[%s1702 + $0x70] sm:$0xf]
        %v1723 = vld [vmem:[%s1702 + $0x78] sm:$0xf]
        %v1724 = vld [vmem:[%s1702 + $0x7c] sm:$0xf]
        %v1725 = vld [vmem:[%s1702 + $0x84] sm:$0xf]
        %v1726 = vld [vmem:[%s1702 + $0x88] sm:$0xf]
        %v1727 = vld [vmem:[%s1702 + $0x90] sm:$0xf]
        %v1728 = vld [vmem:[%s1702 + $0x94] sm:$0xf]
        %v1729 = vld [vmem:[%s1702 + $0x9c] sm:$0xf]
        %v1730 = vld [vmem:[%s1702 + $0xa0] sm:$0xf]
        %v1731 = vld [vmem:[%s1702 + $0xa8] sm:$0xf]
        %v1732 = vld [vmem:[%s1702 + $0xac] sm:$0xf]
        %v1733 = vld [vmem:[%s1702 + $0xb4] sm:$0xf]
        %v1734 = vld [vmem:[%s1702 + $0xb8] sm:$0xf]
        %s1735 = scalar_lea.vmem %s1, 96
        %v1736 = vld [vmem:[%s1735] sm:$0xf]
        %v1737 = vld [vmem:[%s1735 + $0x4] sm:$0xf]
        %v1738 = vld [vmem:[%s1735 + $0x8] sm:$0xf]
        %v1739 = vld [vmem:[%s1735 + $0xc] sm:$0xf]
        %v1740 = vld [vmem:[%s1735 + $0x10] sm:$0xf]
        %v1741 = vld [vmem:[%s1735 + $0x14] sm:$0xf]
        %v1742 = vld [vmem:[%s1735 + $0x18] sm:$0xf]
        %v1743 = vld [vmem:[%s1735 + $0x1c] sm:$0xf]
        %v1776 = vunpack.c.l.b16 %v1703
        %v1777 = vunpack.c.l.b16 %v1704
        %v1778 = vunpack.c.l.b16 %v1705
        %v1779 = vunpack.c.l.b16 %v1706
        %v1780 = vunpack.c.l.b16 %v1707
        %v1781 = vunpack.c.l.b16 %v1708
        %v1782 = vunpack.c.l.b16 %v1709
        %v1783 = vunpack.c.l.b16 %v1710
        %v1784 = vunpack.c.l.b16 %v1711
        %v1785 = vunpack.c.l.b16 %v1712
        %v1786 = vunpack.c.l.b16 %v1713
        %v1787 = vunpack.c.l.b16 %v1714
        %v1788 = vunpack.c.l.b16 %v1715
        %v1789 = vunpack.c.l.b16 %v1716
        %v1790 = vunpack.c.l.b16 %v1717
        %v1791 = vunpack.c.l.b16 %v1718
        %v1792 = vunpack.c.l.b16 %v1719
        %v1793 = vunpack.c.l.b16 %v1720
        %v1794 = vunpack.c.l.b16 %v1721
        %v1795 = vunpack.c.l.b16 %v1722
        %v1796 = vunpack.c.l.b16 %v1723
        %v1797 = vunpack.c.l.b16 %v1724
        %v1798 = vunpack.c.l.b16 %v1725
        %v1799 = vunpack.c.l.b16 %v1726
        %v1800 = vunpack.c.l.b16 %v1727
        %v1801 = vunpack.c.l.b16 %v1728
        %v1802 = vunpack.c.l.b16 %v1729
        %v1803 = vunpack.c.l.b16 %v1730
        %v1804 = vunpack.c.l.b16 %v1731
        %v1805 = vunpack.c.l.b16 %v1732
        %v1806 = vunpack.c.l.b16 %v1733
        %v1807 = vunpack.c.l.b16 %v1734
        %v1808 = vpack.c.b16 %v1777, %v1776
        %v1809 = vpack.c.b16 %v1779, %v1778
        %v1810 = vpack.c.b16 %v1781, %v1780
        %v1811 = vpack.c.b16 %v1783, %v1782
        %v1812 = vpack.c.b16 %v1785, %v1784
        %v1813 = vpack.c.b16 %v1787, %v1786
        %v1814 = vpack.c.b16 %v1789, %v1788
        %v1815 = vpack.c.b16 %v1791, %v1790
        %v1816 = vpack.c.b16 %v1793, %v1792
        %v1817 = vpack.c.b16 %v1795, %v1794
        %v1818 = vpack.c.b16 %v1797, %v1796
        %v1819 = vpack.c.b16 %v1799, %v1798
        %v1820 = vpack.c.b16 %v1801, %v1800
        %v1821 = vpack.c.b16 %v1803, %v1802
        %v1822 = vpack.c.b16 %v1805, %v1804
        %v1823 = vpack.c.b16 %v1807, %v1806
        %v1832 = vunpack.c.l.b16 %v1736
        %v1833 = vunpack.c.l.b16 %v1737
        %v1834 = vunpack.c.l.b16 %v1738
        %v1835 = vunpack.c.l.b16 %v1739
        %v1836 = vunpack.c.l.b16 %v1740
        %v1837 = vunpack.c.l.b16 %v1741
        %v1838 = vunpack.c.l.b16 %v1742
        %v1839 = vunpack.c.l.b16 %v1743
        %v1840 = vpack.c.b16 %v1833, %v1832
        %v1841 = vpack.c.b16 %v1835, %v1834
        %v1842 = vpack.c.b16 %v1837, %v1836
        %v1843 = vpack.c.b16 %v1839, %v1838
        %v1849 = vsel %vm694, %v1808, 0
        %v1852 = vsel %vm694, %v1809, 0
        %v1855 = vsel %vm694, %v1810, 0
        %v1858 = vsel %vm694, %v1811, 0
        %v1861 = vsel %vm694, %v1812, 0
        %v1864 = vsel %vm694, %v1813, 0
        %v1867 = vsel %vm694, %v1814, 0
        %v1870 = vsel %vm694, %v1815, 0
        %v1873 = vsel %vm694, %v1816, 0
        %v1876 = vsel %vm694, %v1817, 0
        %v1879 = vsel %vm694, %v1818, 0
        %v1882 = vsel %vm694, %v1819, 0
        %v1885 = vsel %vm694, %v1820, 0
        %v1888 = vsel %vm694, %v1821, 0
        %v1891 = vsel %vm694, %v1822, 0
        %v1894 = vsel %vm694, %v1823, 0
        %1896 = vmatprep.subr.bf16.mxu0 0
        %1897 = vmatpush1.bf16.msra.mxu0 0
        %1898 = vmatprep.subr.bf16.mxu0 0
        %1899 = vmatpush1.bf16.msra.mxu0 0
        %1900 = vmatprep.subr.bf16.mxu0 0
        %1901 = vmatpush1.bf16.msra.mxu0 0
        %1902 = vmatprep.subr.bf16.mxu0 0
        %1903 = vmatpush1.bf16.msra.mxu0 0
        %1904 = vmatprep.subr.bf16.mxu0 0
        %1905 = vmatpush1.bf16.msra.mxu0 %v1843
        %1906 = vmatprep.subr.bf16.mxu0 0
        %1907 = vmatpush1.bf16.msra.mxu0 %v1842
        %1908 = vmatprep.subr.bf16.mxu0 0
        %1909 = vmatpush1.bf16.msra.mxu0 %v1841
        %1910 = vmatprep.subr.bf16.mxu0 0
        %1911 = vmatpush1.bf16.msra.mxu0 %v1840
        %1912 = vmatprep.subr.bf16.mxu0 0
        %1913 = vmatpush2.bf16.msra.mxu0 0
        %1914 = vmatprep.subr.bf16.mxu0 0
        %1915 = vmatpush2.bf16.msra.mxu0 0
        %1916 = vmatprep.subr.bf16.mxu0 0
        %1917 = vmatpush2.bf16.msra.mxu0 0
        %1918 = vmatprep.subr.bf16.mxu0 0
        %1919 = vmatpush2.bf16.msra.mxu0 0
        %1920 = vmatprep.subr.bf16.mxu0 0
        %1921 = vmatpush2.bf16.msra.mxu0 0
        %1922 = vmatprep.subr.bf16.mxu0 0
        %1923 = vmatpush2.bf16.msra.mxu0 0
        %1924 = vmatprep.subr.bf16.mxu0 0
        %1925 = vmatpush2.bf16.msra.mxu0 0
        %1926 = vmatprep.subr.bf16.mxu0 0
        %1927 = vmatpush2.bf16.msra.mxu0 0
        %1928 = vmatprep.mubr.bf16.mxu0 0
        %1929 = vmatmul.mubr.bf16.gmra.mxu0 %v1849
        %v1930 = vpop.f32.mrf.mxu0
        %v1931 = vadd.f32 0.0, %v1930
        %v1932 = vpop.f32.mrf.mxu0
        %v1933 = vpop.f32.mrf.mxu0
        %v1934 = vadd.f32 0.0, %v1933
        %v1935 = vpop.f32.mrf.mxu0
        %1936 = vmatprep.mubr.bf16.mxu0 0
        %1937 = vmatmul.mubr.bf16.gmra.mxu0 %v1852
        %v1938 = vpop.f32.mrf.mxu0
        %v1939 = vadd.f32 0.0, %v1938
        %v1940 = vpop.f32.mrf.mxu0
        %v1941 = vpop.f32.mrf.mxu0
        %v1942 = vadd.f32 0.0, %v1941
        %v1943 = vpop.f32.mrf.mxu0
        %1944 = vmatprep.mubr.bf16.mxu0 0
        %1945 = vmatmul.mubr.bf16.gmra.mxu0 %v1855
        %v1946 = vpop.f32.mrf.mxu0
        %v1947 = vadd.f32 0.0, %v1946
        %v1948 = vpop.f32.mrf.mxu0
        %v1949 = vpop.f32.mrf.mxu0
        %v1950 = vadd.f32 0.0, %v1949
        %v1951 = vpop.f32.mrf.mxu0
        %1952 = vmatprep.mubr.bf16.mxu0 0
        %1953 = vmatmul.mubr.bf16.gmra.mxu0 %v1858
        %v1954 = vpop.f32.mrf.mxu0
        %v1955 = vadd.f32 0.0, %v1954
        %v1956 = vpop.f32.mrf.mxu0
        %v1957 = vpop.f32.mrf.mxu0
        %v1958 = vadd.f32 0.0, %v1957
        %v1959 = vpop.f32.mrf.mxu0
        %1960 = vmatprep.mubr.bf16.mxu0 0
        %1961 = vmatmul.mubr.bf16.gmra.mxu0 %v1861
        %v1962 = vpop.f32.mrf.mxu0
        %v1963 = vadd.f32 0.0, %v1962
        %v1964 = vpop.f32.mrf.mxu0
        %v1965 = vpop.f32.mrf.mxu0
        %v1966 = vadd.f32 0.0, %v1965
        %v1967 = vpop.f32.mrf.mxu0
        %1968 = vmatprep.mubr.bf16.mxu0 0
        %1969 = vmatmul.mubr.bf16.gmra.mxu0 %v1864
        %v1970 = vpop.f32.mrf.mxu0
        %v1971 = vadd.f32 0.0, %v1970
        %v1972 = vpop.f32.mrf.mxu0
        %v1973 = vpop.f32.mrf.mxu0
        %v1974 = vadd.f32 0.0, %v1973
        %v1975 = vpop.f32.mrf.mxu0
        %1976 = vmatprep.mubr.bf16.mxu0 0
        %1977 = vmatmul.mubr.bf16.gmra.mxu0 %v1867
        %v1978 = vpop.f32.mrf.mxu0
        %v1979 = vadd.f32 0.0, %v1978
        %v1980 = vpop.f32.mrf.mxu0
        %v1981 = vpop.f32.mrf.mxu0
        %v1982 = vadd.f32 0.0, %v1981
        %v1983 = vpop.f32.mrf.mxu0
        %1984 = vmatprep.mubr.bf16.mxu0 0
        %1985 = vmatmul.mubr.bf16.gmra.mxu0 %v1870
        %v1986 = vpop.f32.mrf.mxu0
        %v1987 = vadd.f32 0.0, %v1986
        %v1988 = vpop.f32.mrf.mxu0
        %v1989 = vpop.f32.mrf.mxu0
        %v1990 = vadd.f32 0.0, %v1989
        %v1991 = vpop.f32.mrf.mxu0
        %1992 = vmatprep.mubr.bf16.mxu0 0
        %1993 = vmatmul.mubr.bf16.gmra.mxu0 %v1873
        %v1994 = vpop.f32.mrf.mxu0
        %v1995 = vadd.f32 0.0, %v1994
        %v1996 = vpop.f32.mrf.mxu0
        %v1997 = vpop.f32.mrf.mxu0
        %v1998 = vadd.f32 0.0, %v1997
        %v1999 = vpop.f32.mrf.mxu0
        %2000 = vmatprep.mubr.bf16.mxu0 0
        %2001 = vmatmul.mubr.bf16.gmra.mxu0 %v1876
        %v2002 = vpop.f32.mrf.mxu0
        %v2003 = vadd.f32 0.0, %v2002
        %v2004 = vpop.f32.mrf.mxu0
        %v2005 = vpop.f32.mrf.mxu0
        %v2006 = vadd.f32 0.0, %v2005
        %v2007 = vpop.f32.mrf.mxu0
        %2008 = vmatprep.mubr.bf16.mxu0 0
        %2009 = vmatmul.mubr.bf16.gmra.mxu0 %v1879
        %v2010 = vpop.f32.mrf.mxu0
        %v2011 = vadd.f32 0.0, %v2010
        %v2012 = vpop.f32.mrf.mxu0
        %v2013 = vpop.f32.mrf.mxu0
        %v2014 = vadd.f32 0.0, %v2013
        %v2015 = vpop.f32.mrf.mxu0
        %2016 = vmatprep.mubr.bf16.mxu0 0
        %2017 = vmatmul.mubr.bf16.gmra.mxu0 %v1882
        %v2018 = vpop.f32.mrf.mxu0
        %v2019 = vadd.f32 0.0, %v2018
        %v2020 = vpop.f32.mrf.mxu0
        %v2021 = vpop.f32.mrf.mxu0
        %v2022 = vadd.f32 0.0, %v2021
        %v2023 = vpop.f32.mrf.mxu0
        %2024 = vmatprep.mubr.bf16.mxu0 0
        %2025 = vmatmul.mubr.bf16.gmra.mxu0 %v1885
        %v2026 = vpop.f32.mrf.mxu0
        %v2027 = vadd.f32 0.0, %v2026
        %v2028 = vpop.f32.mrf.mxu0
        %v2029 = vpop.f32.mrf.mxu0
        %v2030 = vadd.f32 0.0, %v2029
        %v2031 = vpop.f32.mrf.mxu0
        %2032 = vmatprep.mubr.bf16.mxu0 0
        %2033 = vmatmul.mubr.bf16.gmra.mxu0 %v1888
        %v2034 = vpop.f32.mrf.mxu0
        %v2035 = vadd.f32 0.0, %v2034
        %v2036 = vpop.f32.mrf.mxu0
        %v2037 = vpop.f32.mrf.mxu0
        %v2038 = vadd.f32 0.0, %v2037
        %v2039 = vpop.f32.mrf.mxu0
        %2040 = vmatprep.mubr.bf16.mxu0 0
        %2041 = vmatmul.mubr.bf16.gmra.mxu0 %v1891
        %v2042 = vpop.f32.mrf.mxu0
        %v2043 = vadd.f32 0.0, %v2042
        %v2044 = vpop.f32.mrf.mxu0
        %v2045 = vpop.f32.mrf.mxu0
        %v2046 = vadd.f32 0.0, %v2045
        %v2047 = vpop.f32.mrf.mxu0
        %2048 = vmatprep.mubr.bf16.mxu0 0
        %2049 = vmatmul.mubr.bf16.gmra.mxu0 %v1894
        %v2050 = vpop.f32.mrf.mxu0
        %v2051 = vadd.f32 0.0, %v2050
        %v2052 = vpop.f32.mrf.mxu0
        %v2053 = vpop.f32.mrf.mxu0
        %v2054 = vadd.f32 0.0, %v2053
        %v2055 = vpop.f32.mrf.mxu0
        %2056 = vdwg.mxu0
        %v2057 = vadd.f32 %v1670, %v1931
        %v2058 = vadd.f32 %v1671, %v1934
        %v2059 = vadd.f32 %v1672, %v1939
        %v2060 = vadd.f32 %v1673, %v1942
        %v2061 = vadd.f32 %v1674, %v1947
        %v2062 = vadd.f32 %v1675, %v1950
        %v2063 = vadd.f32 %v1676, %v1955
        %v2064 = vadd.f32 %v1677, %v1958
        %v2065 = vadd.f32 %v1678, %v1963
        %v2066 = vadd.f32 %v1679, %v1966
        %v2067 = vadd.f32 %v1680, %v1971
        %v2068 = vadd.f32 %v1681, %v1974
        %v2069 = vadd.f32 %v1682, %v1979
        %v2070 = vadd.f32 %v1683, %v1982
        %v2071 = vadd.f32 %v1684, %v1987
        %v2072 = vadd.f32 %v1685, %v1990
        %v2073 = vadd.f32 %v1686, %v1995
        %v2074 = vadd.f32 %v1687, %v1998
        %v2075 = vadd.f32 %v1688, %v2003
        %v2076 = vadd.f32 %v1689, %v2006
        %v2077 = vadd.f32 %v1690, %v2011
        %v2078 = vadd.f32 %v1691, %v2014
        %v2079 = vadd.f32 %v1692, %v2019
        %v2080 = vadd.f32 %v1693, %v2022
        %v2081 = vadd.f32 %v1694, %v2027
        %v2082 = vadd.f32 %v1695, %v2030
        %v2083 = vadd.f32 %v1696, %v2035
        %v2084 = vadd.f32 %v1697, %v2038
        %v2085 = vadd.f32 %v1698, %v2043
        %v2086 = vadd.f32 %v1699, %v2046
        %v2087 = vadd.f32 %v1700, %v2051
        %v2088 = vadd.f32 %v1701, %v2054
        %v2089 = vld [vmem:[%s1702] sm:$0xf]
        %v2090 = vld [vmem:[%s1702 + $0x4] sm:$0xf]
        %v2091 = vld [vmem:[%s1702 + $0x8] sm:$0x1]
        %v2092 = vld [vmem:[%s1702 + $0xc] sm:$0xf]
        %v2093 = vld [vmem:[%s1702 + $0x10] sm:$0xf]
        %v2094 = vld [vmem:[%s1702 + $0x14] sm:$0x1]
        %v2095 = vld [vmem:[%s1702 + $0x18] sm:$0xf]
        %v2096 = vld [vmem:[%s1702 + $0x1c] sm:$0xf]
        %v2097 = vld [vmem:[%s1702 + $0x20] sm:$0x1]
        %v2098 = vld [vmem:[%s1702 + $0x24] sm:$0xf]
        %v2099 = vld [vmem:[%s1702 + $0x28] sm:$0xf]
        %v2100 = vld [vmem:[%s1702 + $0x2c] sm:$0x1]
        %v2101 = vld [vmem:[%s1702 + $0x30] sm:$0xf]
        %v2102 = vld [vmem:[%s1702 + $0x34] sm:$0xf]
        %v2103 = vld [vmem:[%s1702 + $0x38] sm:$0x1]
        %v2104 = vld [vmem:[%s1702 + $0x3c] sm:$0xf]
        %v2105 = vld [vmem:[%s1702 + $0x40] sm:$0xf]
        %v2106 = vld [vmem:[%s1702 + $0x44] sm:$0x1]
        %v2107 = vld [vmem:[%s1702 + $0x48] sm:$0xf]
        %v2108 = vld [vmem:[%s1702 + $0x4c] sm:$0xf]
        %v2109 = vld [vmem:[%s1702 + $0x50] sm:$0x1]
        %v2110 = vld [vmem:[%s1702 + $0x54] sm:$0xf]
        %v2111 = vld [vmem:[%s1702 + $0x58] sm:$0xf]
        %v2112 = vld [vmem:[%s1702 + $0x5c] sm:$0x1]
        %v2113 = vld [vmem:[%s1702 + $0x60] sm:$0xf]
        %v2114 = vld [vmem:[%s1702 + $0x64] sm:$0xf]
        %v2115 = vld [vmem:[%s1702 + $0x68] sm:$0x1]
        %v2116 = vld [vmem:[%s1702 + $0x6c] sm:$0xf]
        %v2117 = vld [vmem:[%s1702 + $0x70] sm:$0xf]
        %v2118 = vld [vmem:[%s1702 + $0x74] sm:$0x1]
        %v2119 = vld [vmem:[%s1702 + $0x78] sm:$0xf]
        %v2120 = vld [vmem:[%s1702 + $0x7c] sm:$0xf]
        %v2121 = vld [vmem:[%s1702 + $0x80] sm:$0x1]
        %v2122 = vld [vmem:[%s1702 + $0x84] sm:$0xf]
        %v2123 = vld [vmem:[%s1702 + $0x88] sm:$0xf]
        %v2124 = vld [vmem:[%s1702 + $0x8c] sm:$0x1]
        %v2125 = vld [vmem:[%s1702 + $0x90] sm:$0xf]
        %v2126 = vld [vmem:[%s1702 + $0x94] sm:$0xf]
        %v2127 = vld [vmem:[%s1702 + $0x98] sm:$0x1]
        %v2128 = vld [vmem:[%s1702 + $0x9c] sm:$0xf]
        %v2129 = vld [vmem:[%s1702 + $0xa0] sm:$0xf]
        %v2130 = vld [vmem:[%s1702 + $0xa4] sm:$0x1]
        %v2131 = vld [vmem:[%s1702 + $0xa8] sm:$0xf]
        %v2132 = vld [vmem:[%s1702 + $0xac] sm:$0xf]
        %v2133 = vld [vmem:[%s1702 + $0xb0] sm:$0x1]
        %v2134 = vld [vmem:[%s1702 + $0xb4] sm:$0xf]
        %v2135 = vld [vmem:[%s1702 + $0xb8] sm:$0xf]
        %v2136 = vld [vmem:[%s1702 + $0xbc] sm:$0x1]
        %v2138 = vshrl.u32 %v2089, 16
        %v2140 = vrot.slane %v2138, 4
        %v2141 = vshll.u32 %v2089, 16
        %v2143 = vrot.slane %v2141, 5
        %v2144 = vor.u32 %v2140, %v2143
        %v2145 = vrot.slane %v2144, 4
        %v2147 = vshll.u32 %v2090, 16
        %v2149 = vrot.slane %v2147, 5
        %v2150 = vsel %vm228, %v2145, %v2149
        %v2151 = vshrl.u32 %v2090, 16
        %v2153 = vrot.slane %v2151, 4
        %v2154 = vor.u32 %v2153, %v2149
        %v2155 = vrot.slane %v2154, 4
        %v2157 = vshll.u32 %v2091, 16
        %v2159 = vrot.slane %v2157, 5
        %v2160 = vsel %vm228, %v2155, %v2159
        %v2162 = vshrl.u32 %v2092, 16
        %v2164 = vrot.slane %v2162, 4
        %v2165 = vshll.u32 %v2092, 16
        %v2167 = vrot.slane %v2165, 5
        %v2168 = vor.u32 %v2164, %v2167
        %v2169 = vrot.slane %v2168, 4
        %v2171 = vshll.u32 %v2093, 16
        %v2173 = vrot.slane %v2171, 5
        %v2174 = vsel %vm228, %v2169, %v2173
        %v2175 = vshrl.u32 %v2093, 16
        %v2177 = vrot.slane %v2175, 4
        %v2178 = vor.u32 %v2177, %v2173
        %v2179 = vrot.slane %v2178, 4
        %v2181 = vshll.u32 %v2094, 16
        %v2183 = vrot.slane %v2181, 5
        %v2184 = vsel %vm228, %v2179, %v2183
        %v2186 = vshrl.u32 %v2095, 16
        %v2188 = vrot.slane %v2186, 4
        %v2189 = vshll.u32 %v2095, 16
        %v2191 = vrot.slane %v2189, 5
        %v2192 = vor.u32 %v2188, %v2191
        %v2193 = vrot.slane %v2192, 4
        %v2195 = vshll.u32 %v2096, 16
        %v2197 = vrot.slane %v2195, 5
        %v2198 = vsel %vm228, %v2193, %v2197
        %v2199 = vshrl.u32 %v2096, 16
        %v2201 = vrot.slane %v2199, 4
        %v2202 = vor.u32 %v2201, %v2197
        %v2203 = vrot.slane %v2202, 4
        %v2205 = vshll.u32 %v2097, 16
        %v2207 = vrot.slane %v2205, 5
        %v2208 = vsel %vm228, %v2203, %v2207
        %v2210 = vshrl.u32 %v2098, 16
        %v2212 = vrot.slane %v2210, 4
        %v2213 = vshll.u32 %v2098, 16
        %v2215 = vrot.slane %v2213, 5
        %v2216 = vor.u32 %v2212, %v2215
        %v2217 = vrot.slane %v2216, 4
        %v2219 = vshll.u32 %v2099, 16
        %v2221 = vrot.slane %v2219, 5
        %v2222 = vsel %vm228, %v2217, %v2221
        %v2223 = vshrl.u32 %v2099, 16
        %v2225 = vrot.slane %v2223, 4
        %v2226 = vor.u32 %v2225, %v2221
        %v2227 = vrot.slane %v2226, 4
        %v2229 = vshll.u32 %v2100, 16
        %v2231 = vrot.slane %v2229, 5
        %v2232 = vsel %vm228, %v2227, %v2231
        %v2234 = vshrl.u32 %v2101, 16
        %v2236 = vrot.slane %v2234, 4
        %v2237 = vshll.u32 %v2101, 16
        %v2239 = vrot.slane %v2237, 5
        %v2240 = vor.u32 %v2236, %v2239
        %v2241 = vrot.slane %v2240, 4
        %v2243 = vshll.u32 %v2102, 16
        %v2245 = vrot.slane %v2243, 5
        %v2246 = vsel %vm228, %v2241, %v2245
        %v2247 = vshrl.u32 %v2102, 16
        %v2249 = vrot.slane %v2247, 4
        %v2250 = vor.u32 %v2249, %v2245
        %v2251 = vrot.slane %v2250, 4
        %v2253 = vshll.u32 %v2103, 16
        %v2255 = vrot.slane %v2253, 5
        %v2256 = vsel %vm228, %v2251, %v2255
        %v2258 = vshrl.u32 %v2104, 16
        %v2260 = vrot.slane %v2258, 4
        %v2261 = vshll.u32 %v2104, 16
        %v2263 = vrot.slane %v2261, 5
        %v2264 = vor.u32 %v2260, %v2263
        %v2265 = vrot.slane %v2264, 4
        %v2267 = vshll.u32 %v2105, 16
        %v2269 = vrot.slane %v2267, 5
        %v2270 = vsel %vm228, %v2265, %v2269
        %v2271 = vshrl.u32 %v2105, 16
        %v2273 = vrot.slane %v2271, 4
        %v2274 = vor.u32 %v2273, %v2269
        %v2275 = vrot.slane %v2274, 4
        %v2277 = vshll.u32 %v2106, 16
        %v2279 = vrot.slane %v2277, 5
        %v2280 = vsel %vm228, %v2275, %v2279
        %v2282 = vshrl.u32 %v2107, 16
        %v2284 = vrot.slane %v2282, 4
        %v2285 = vshll.u32 %v2107, 16
        %v2287 = vrot.slane %v2285, 5
        %v2288 = vor.u32 %v2284, %v2287
        %v2289 = vrot.slane %v2288, 4
        %v2291 = vshll.u32 %v2108, 16
        %v2293 = vrot.slane %v2291, 5
        %v2294 = vsel %vm228, %v2289, %v2293
        %v2295 = vshrl.u32 %v2108, 16
        %v2297 = vrot.slane %v2295, 4
        %v2298 = vor.u32 %v2297, %v2293
        %v2299 = vrot.slane %v2298, 4
        %v2301 = vshll.u32 %v2109, 16
        %v2303 = vrot.slane %v2301, 5
        %v2304 = vsel %vm228, %v2299, %v2303
        %v2306 = vshrl.u32 %v2110, 16
        %v2308 = vrot.slane %v2306, 4
        %v2309 = vshll.u32 %v2110, 16
        %v2311 = vrot.slane %v2309, 5
        %v2312 = vor.u32 %v2308, %v2311
        %v2313 = vrot.slane %v2312, 4
        %v2315 = vshll.u32 %v2111, 16
        %v2317 = vrot.slane %v2315, 5
        %v2318 = vsel %vm228, %v2313, %v2317
        %v2319 = vshrl.u32 %v2111, 16
        %v2321 = vrot.slane %v2319, 4
        %v2322 = vor.u32 %v2321, %v2317
        %v2323 = vrot.slane %v2322, 4
        %v2325 = vshll.u32 %v2112, 16
        %v2327 = vrot.slane %v2325, 5
        %v2328 = vsel %vm228, %v2323, %v2327
        %v2330 = vshrl.u32 %v2113, 16
        %v2332 = vrot.slane %v2330, 4
        %v2333 = vshll.u32 %v2113, 16
        %v2335 = vrot.slane %v2333, 5
        %v2336 = vor.u32 %v2332, %v2335
        %v2337 = vrot.slane %v2336, 4
        %v2339 = vshll.u32 %v2114, 16
        %v2341 = vrot.slane %v2339, 5
        %v2342 = vsel %vm228, %v2337, %v2341
        %v2343 = vshrl.u32 %v2114, 16
        %v2345 = vrot.slane %v2343, 4
        %v2346 = vor.u32 %v2345, %v2341
        %v2347 = vrot.slane %v2346, 4
        %v2349 = vshll.u32 %v2115, 16
        %v2351 = vrot.slane %v2349, 5
        %v2352 = vsel %vm228, %v2347, %v2351
        %v2354 = vshrl.u32 %v2116, 16
        %v2356 = vrot.slane %v2354, 4
        %v2357 = vshll.u32 %v2116, 16
        %v2359 = vrot.slane %v2357, 5
        %v2360 = vor.u32 %v2356, %v2359
        %v2361 = vrot.slane %v2360, 4
        %v2363 = vshll.u32 %v2117, 16
        %v2365 = vrot.slane %v2363, 5
        %v2366 = vsel %vm228, %v2361, %v2365
        %v2367 = vshrl.u32 %v2117, 16
        %v2369 = vrot.slane %v2367, 4
        %v2370 = vor.u32 %v2369, %v2365
        %v2371 = vrot.slane %v2370, 4
        %v2373 = vshll.u32 %v2118, 16
        %v2375 = vrot.slane %v2373, 5
        %v2376 = vsel %vm228, %v2371, %v2375
        %v2378 = vshrl.u32 %v2119, 16
        %v2380 = vrot.slane %v2378, 4
        %v2381 = vshll.u32 %v2119, 16
        %v2383 = vrot.slane %v2381, 5
        %v2384 = vor.u32 %v2380, %v2383
        %v2385 = vrot.slane %v2384, 4
        %v2387 = vshll.u32 %v2120, 16
        %v2389 = vrot.slane %v2387, 5
        %v2390 = vsel %vm228, %v2385, %v2389
        %v2391 = vshrl.u32 %v2120, 16
        %v2393 = vrot.slane %v2391, 4
        %v2394 = vor.u32 %v2393, %v2389
        %v2395 = vrot.slane %v2394, 4
        %v2397 = vshll.u32 %v2121, 16
        %v2399 = vrot.slane %v2397, 5
        %v2400 = vsel %vm228, %v2395, %v2399
        %v2402 = vshrl.u32 %v2122, 16
        %v2404 = vrot.slane %v2402, 4
        %v2405 = vshll.u32 %v2122, 16
        %v2407 = vrot.slane %v2405, 5
        %v2408 = vor.u32 %v2404, %v2407
        %v2409 = vrot.slane %v2408, 4
        %v2411 = vshll.u32 %v2123, 16
        %v2413 = vrot.slane %v2411, 5
        %v2414 = vsel %vm228, %v2409, %v2413
        %v2415 = vshrl.u32 %v2123, 16
        %v2417 = vrot.slane %v2415, 4
        %v2418 = vor.u32 %v2417, %v2413
        %v2419 = vrot.slane %v2418, 4
        %v2421 = vshll.u32 %v2124, 16
        %v2423 = vrot.slane %v2421, 5
        %v2424 = vsel %vm228, %v2419, %v2423
        %v2426 = vshrl.u32 %v2125, 16
        %v2428 = vrot.slane %v2426, 4
        %v2429 = vshll.u32 %v2125, 16
        %v2431 = vrot.slane %v2429, 5
        %v2432 = vor.u32 %v2428, %v2431
        %v2433 = vrot.slane %v2432, 4
        %v2435 = vshll.u32 %v2126, 16
        %v2437 = vrot.slane %v2435, 5
        %v2438 = vsel %vm228, %v2433, %v2437
        %v2439 = vshrl.u32 %v2126, 16
        %v2441 = vrot.slane %v2439, 4
        %v2442 = vor.u32 %v2441, %v2437
        %v2443 = vrot.slane %v2442, 4
        %v2445 = vshll.u32 %v2127, 16
        %v2447 = vrot.slane %v2445, 5
        %v2448 = vsel %vm228, %v2443, %v2447
        %v2450 = vshrl.u32 %v2128, 16
        %v2452 = vrot.slane %v2450, 4
        %v2453 = vshll.u32 %v2128, 16
        %v2455 = vrot.slane %v2453, 5
        %v2456 = vor.u32 %v2452, %v2455
        %v2457 = vrot.slane %v2456, 4
        %v2459 = vshll.u32 %v2129, 16
        %v2461 = vrot.slane %v2459, 5
        %v2462 = vsel %vm228, %v2457, %v2461
        %v2463 = vshrl.u32 %v2129, 16
        %v2465 = vrot.slane %v2463, 4
        %v2466 = vor.u32 %v2465, %v2461
        %v2467 = vrot.slane %v2466, 4
        %v2469 = vshll.u32 %v2130, 16
        %v2471 = vrot.slane %v2469, 5
        %v2472 = vsel %vm228, %v2467, %v2471
        %v2474 = vshrl.u32 %v2131, 16
        %v2476 = vrot.slane %v2474, 4
        %v2477 = vshll.u32 %v2131, 16
        %v2479 = vrot.slane %v2477, 5
        %v2480 = vor.u32 %v2476, %v2479
        %v2481 = vrot.slane %v2480, 4
        %v2483 = vshll.u32 %v2132, 16
        %v2485 = vrot.slane %v2483, 5
        %v2486 = vsel %vm228, %v2481, %v2485
        %v2487 = vshrl.u32 %v2132, 16
        %v2489 = vrot.slane %v2487, 4
        %v2490 = vor.u32 %v2489, %v2485
        %v2491 = vrot.slane %v2490, 4
        %v2493 = vshll.u32 %v2133, 16
        %v2495 = vrot.slane %v2493, 5
        %v2496 = vsel %vm228, %v2491, %v2495
        %v2498 = vshrl.u32 %v2134, 16
        %v2500 = vrot.slane %v2498, 4
        %v2501 = vshll.u32 %v2134, 16
        %v2503 = vrot.slane %v2501, 5
        %v2504 = vor.u32 %v2500, %v2503
        %v2505 = vrot.slane %v2504, 4
        %v2507 = vshll.u32 %v2135, 16
        %v2509 = vrot.slane %v2507, 5
        %v2510 = vsel %vm228, %v2505, %v2509
        %v2511 = vshrl.u32 %v2135, 16
        %v2513 = vrot.slane %v2511, 4
        %v2514 = vor.u32 %v2513, %v2509
        %v2515 = vrot.slane %v2514, 4
        %v2517 = vshll.u32 %v2136, 16
        %v2519 = vrot.slane %v2517, 5
        %v2520 = vsel %vm228, %v2515, %v2519
        %s2521 = scalar_lea.vmem %s1, 128
        %v2522 = vld [vmem:[%s2521] sm:$0xf]
        %v2523 = vld [vmem:[%s2521 + $0x4] sm:$0xf]
        %v2524 = vld [vmem:[%s2521 + $0x8] sm:$0xf]
        %v2525 = vld [vmem:[%s2521 + $0xc] sm:$0xf]
        %v2526 = vld [vmem:[%s2521 + $0x10] sm:$0xf]
        %v2527 = vld [vmem:[%s2521 + $0x14] sm:$0xf]
        %v2528 = vld [vmem:[%s2521 + $0x18] sm:$0xf]
        %v2529 = vld [vmem:[%s2521 + $0x1c] sm:$0xf]
        %v2530 = vunpack.c.l.b16 %v2150
        %v2531 = vunpack.c.l.b16 %v2160
        %v2532 = vunpack.c.l.b16 %v2174
        %v2533 = vunpack.c.l.b16 %v2184
        %v2534 = vunpack.c.l.b16 %v2198
        %v2535 = vunpack.c.l.b16 %v2208
        %v2536 = vunpack.c.l.b16 %v2222
        %v2537 = vunpack.c.l.b16 %v2232
        %v2538 = vunpack.c.l.b16 %v2246
        %v2539 = vunpack.c.l.b16 %v2256
        %v2540 = vunpack.c.l.b16 %v2270
        %v2541 = vunpack.c.l.b16 %v2280
        %v2542 = vunpack.c.l.b16 %v2294
        %v2543 = vunpack.c.l.b16 %v2304
        %v2544 = vunpack.c.l.b16 %v2318
        %v2545 = vunpack.c.l.b16 %v2328
        %v2546 = vunpack.c.l.b16 %v2342
        %v2547 = vunpack.c.l.b16 %v2352
        %v2548 = vunpack.c.l.b16 %v2366
        %v2549 = vunpack.c.l.b16 %v2376
        %v2550 = vunpack.c.l.b16 %v2390
        %v2551 = vunpack.c.l.b16 %v2400
        %v2552 = vunpack.c.l.b16 %v2414
        %v2553 = vunpack.c.l.b16 %v2424
        %v2554 = vunpack.c.l.b16 %v2438
        %v2555 = vunpack.c.l.b16 %v2448
        %v2556 = vunpack.c.l.b16 %v2462
        %v2557 = vunpack.c.l.b16 %v2472
        %v2558 = vunpack.c.l.b16 %v2486
        %v2559 = vunpack.c.l.b16 %v2496
        %v2560 = vunpack.c.l.b16 %v2510
        %v2561 = vunpack.c.l.b16 %v2520
        %v2562 = vpack.c.b16 %v2531, %v2530
        %v2563 = vpack.c.b16 %v2533, %v2532
        %v2564 = vpack.c.b16 %v2535, %v2534
        %v2565 = vpack.c.b16 %v2537, %v2536
        %v2566 = vpack.c.b16 %v2539, %v2538
        %v2567 = vpack.c.b16 %v2541, %v2540
        %v2568 = vpack.c.b16 %v2543, %v2542
        %v2569 = vpack.c.b16 %v2545, %v2544
        %v2570 = vpack.c.b16 %v2547, %v2546
        %v2571 = vpack.c.b16 %v2549, %v2548
        %v2572 = vpack.c.b16 %v2551, %v2550
        %v2573 = vpack.c.b16 %v2553, %v2552
        %v2574 = vpack.c.b16 %v2555, %v2554
        %v2575 = vpack.c.b16 %v2557, %v2556
        %v2576 = vpack.c.b16 %v2559, %v2558
        %v2577 = vpack.c.b16 %v2561, %v2560
        %v2586 = vunpack.c.l.b16 %v2522
        %v2587 = vunpack.c.l.b16 %v2523
        %v2588 = vunpack.c.l.b16 %v2524
        %v2589 = vunpack.c.l.b16 %v2525
        %v2590 = vunpack.c.l.b16 %v2526
        %v2591 = vunpack.c.l.b16 %v2527
        %v2592 = vunpack.c.l.b16 %v2528
        %v2593 = vunpack.c.l.b16 %v2529
        %v2594 = vpack.c.b16 %v2587, %v2586
        %v2595 = vpack.c.b16 %v2589, %v2588
        %v2596 = vpack.c.b16 %v2591, %v2590
        %v2597 = vpack.c.b16 %v2593, %v2592
        %v2603 = vsel %vm694, %v2562, 0
        %v2606 = vsel %vm694, %v2563, 0
        %v2609 = vsel %vm694, %v2564, 0
        %v2612 = vsel %vm694, %v2565, 0
        %v2615 = vsel %vm694, %v2566, 0
        %v2618 = vsel %vm694, %v2567, 0
        %v2621 = vsel %vm694, %v2568, 0
        %v2624 = vsel %vm694, %v2569, 0
        %v2627 = vsel %vm694, %v2570, 0
        %v2630 = vsel %vm694, %v2571, 0
        %v2633 = vsel %vm694, %v2572, 0
        %v2636 = vsel %vm694, %v2573, 0
        %v2639 = vsel %vm694, %v2574, 0
        %v2642 = vsel %vm694, %v2575, 0
        %v2645 = vsel %vm694, %v2576, 0
        %v2648 = vsel %vm694, %v2577, 0
        %2650 = vmatprep.subr.bf16.mxu0 0
        %2651 = vmatpush1.bf16.msra.mxu0 0
        %2652 = vmatprep.subr.bf16.mxu0 0
        %2653 = vmatpush1.bf16.msra.mxu0 0
        %2654 = vmatprep.subr.bf16.mxu0 0
        %2655 = vmatpush1.bf16.msra.mxu0 0
        %2656 = vmatprep.subr.bf16.mxu0 0
        %2657 = vmatpush1.bf16.msra.mxu0 0
        %2658 = vmatprep.subr.bf16.mxu0 0
        %2659 = vmatpush1.bf16.msra.mxu0 %v2597
        %2660 = vmatprep.subr.bf16.mxu0 0
        %2661 = vmatpush1.bf16.msra.mxu0 %v2596
        %2662 = vmatprep.subr.bf16.mxu0 0
        %2663 = vmatpush1.bf16.msra.mxu0 %v2595
        %2664 = vmatprep.subr.bf16.mxu0 0
        %2665 = vmatpush1.bf16.msra.mxu0 %v2594
        %2666 = vmatprep.subr.bf16.mxu0 0
        %2667 = vmatpush2.bf16.msra.mxu0 0
        %2668 = vmatprep.subr.bf16.mxu0 0
        %2669 = vmatpush2.bf16.msra.mxu0 0
        %2670 = vmatprep.subr.bf16.mxu0 0
        %2671 = vmatpush2.bf16.msra.mxu0 0
        %2672 = vmatprep.subr.bf16.mxu0 0
        %2673 = vmatpush2.bf16.msra.mxu0 0
        %2674 = vmatprep.subr.bf16.mxu0 0
        %2675 = vmatpush2.bf16.msra.mxu0 0
        %2676 = vmatprep.subr.bf16.mxu0 0
        %2677 = vmatpush2.bf16.msra.mxu0 0
        %2678 = vmatprep.subr.bf16.mxu0 0
        %2679 = vmatpush2.bf16.msra.mxu0 0
        %2680 = vmatprep.subr.bf16.mxu0 0
        %2681 = vmatpush2.bf16.msra.mxu0 0
        %2682 = vmatprep.mubr.bf16.mxu0 0
        %2683 = vmatmul.mubr.bf16.gmra.mxu0 %v2603
        %v2684 = vpop.f32.mrf.mxu0
        %v2685 = vadd.f32 0.0, %v2684
        %v2686 = vpop.f32.mrf.mxu0
        %v2687 = vpop.f32.mrf.mxu0
        %v2688 = vadd.f32 0.0, %v2687
        %v2689 = vpop.f32.mrf.mxu0
        %2690 = vmatprep.mubr.bf16.mxu0 0
        %2691 = vmatmul.mubr.bf16.gmra.mxu0 %v2606
        %v2692 = vpop.f32.mrf.mxu0
        %v2693 = vadd.f32 0.0, %v2692
        %v2694 = vpop.f32.mrf.mxu0
        %v2695 = vpop.f32.mrf.mxu0
        %v2696 = vadd.f32 0.0, %v2695
        %v2697 = vpop.f32.mrf.mxu0
        %2698 = vmatprep.mubr.bf16.mxu0 0
        %2699 = vmatmul.mubr.bf16.gmra.mxu0 %v2609
        %v2700 = vpop.f32.mrf.mxu0
        %v2701 = vadd.f32 0.0, %v2700
        %v2702 = vpop.f32.mrf.mxu0
        %v2703 = vpop.f32.mrf.mxu0
        %v2704 = vadd.f32 0.0, %v2703
        %v2705 = vpop.f32.mrf.mxu0
        %2706 = vmatprep.mubr.bf16.mxu0 0
        %2707 = vmatmul.mubr.bf16.gmra.mxu0 %v2612
        %v2708 = vpop.f32.mrf.mxu0
        %v2709 = vadd.f32 0.0, %v2708
        %v2710 = vpop.f32.mrf.mxu0
        %v2711 = vpop.f32.mrf.mxu0
        %v2712 = vadd.f32 0.0, %v2711
        %v2713 = vpop.f32.mrf.mxu0
        %2714 = vmatprep.mubr.bf16.mxu0 0
        %2715 = vmatmul.mubr.bf16.gmra.mxu0 %v2615
        %v2716 = vpop.f32.mrf.mxu0
        %v2717 = vadd.f32 0.0, %v2716
        %v2718 = vpop.f32.mrf.mxu0
        %v2719 = vpop.f32.mrf.mxu0
        %v2720 = vadd.f32 0.0, %v2719
        %v2721 = vpop.f32.mrf.mxu0
        %2722 = vmatprep.mubr.bf16.mxu0 0
        %2723 = vmatmul.mubr.bf16.gmra.mxu0 %v2618
        %v2724 = vpop.f32.mrf.mxu0
        %v2725 = vadd.f32 0.0, %v2724
        %v2726 = vpop.f32.mrf.mxu0
        %v2727 = vpop.f32.mrf.mxu0
        %v2728 = vadd.f32 0.0, %v2727
        %v2729 = vpop.f32.mrf.mxu0
        %2730 = vmatprep.mubr.bf16.mxu0 0
        %2731 = vmatmul.mubr.bf16.gmra.mxu0 %v2621
        %v2732 = vpop.f32.mrf.mxu0
        %v2733 = vadd.f32 0.0, %v2732
        %v2734 = vpop.f32.mrf.mxu0
        %v2735 = vpop.f32.mrf.mxu0
        %v2736 = vadd.f32 0.0, %v2735
        %v2737 = vpop.f32.mrf.mxu0
        %2738 = vmatprep.mubr.bf16.mxu0 0
        %2739 = vmatmul.mubr.bf16.gmra.mxu0 %v2624
        %v2740 = vpop.f32.mrf.mxu0
        %v2741 = vadd.f32 0.0, %v2740
        %v2742 = vpop.f32.mrf.mxu0
        %v2743 = vpop.f32.mrf.mxu0
        %v2744 = vadd.f32 0.0, %v2743
        %v2745 = vpop.f32.mrf.mxu0
        %2746 = vmatprep.mubr.bf16.mxu0 0
        %2747 = vmatmul.mubr.bf16.gmra.mxu0 %v2627
        %v2748 = vpop.f32.mrf.mxu0
        %v2749 = vadd.f32 0.0, %v2748
        %v2750 = vpop.f32.mrf.mxu0
        %v2751 = vpop.f32.mrf.mxu0
        %v2752 = vadd.f32 0.0, %v2751
        %v2753 = vpop.f32.mrf.mxu0
        %2754 = vmatprep.mubr.bf16.mxu0 0
        %2755 = vmatmul.mubr.bf16.gmra.mxu0 %v2630
        %v2756 = vpop.f32.mrf.mxu0
        %v2757 = vadd.f32 0.0, %v2756
        %v2758 = vpop.f32.mrf.mxu0
        %v2759 = vpop.f32.mrf.mxu0
        %v2760 = vadd.f32 0.0, %v2759
        %v2761 = vpop.f32.mrf.mxu0
        %2762 = vmatprep.mubr.bf16.mxu0 0
        %2763 = vmatmul.mubr.bf16.gmra.mxu0 %v2633
        %v2764 = vpop.f32.mrf.mxu0
        %v2765 = vadd.f32 0.0, %v2764
        %v2766 = vpop.f32.mrf.mxu0
        %v2767 = vpop.f32.mrf.mxu0
        %v2768 = vadd.f32 0.0, %v2767
        %v2769 = vpop.f32.mrf.mxu0
        %2770 = vmatprep.mubr.bf16.mxu0 0
        %2771 = vmatmul.mubr.bf16.gmra.mxu0 %v2636
        %v2772 = vpop.f32.mrf.mxu0
        %v2773 = vadd.f32 0.0, %v2772
        %v2774 = vpop.f32.mrf.mxu0
        %v2775 = vpop.f32.mrf.mxu0
        %v2776 = vadd.f32 0.0, %v2775
        %v2777 = vpop.f32.mrf.mxu0
        %2778 = vmatprep.mubr.bf16.mxu0 0
        %2779 = vmatmul.mubr.bf16.gmra.mxu0 %v2639
        %v2780 = vpop.f32.mrf.mxu0
        %v2781 = vadd.f32 0.0, %v2780
        %v2782 = vpop.f32.mrf.mxu0
        %v2783 = vpop.f32.mrf.mxu0
        %v2784 = vadd.f32 0.0, %v2783
        %v2785 = vpop.f32.mrf.mxu0
        %2786 = vmatprep.mubr.bf16.mxu0 0
        %2787 = vmatmul.mubr.bf16.gmra.mxu0 %v2642
        %v2788 = vpop.f32.mrf.mxu0
        %v2789 = vadd.f32 0.0, %v2788
        %v2790 = vpop.f32.mrf.mxu0
        %v2791 = vpop.f32.mrf.mxu0
        %v2792 = vadd.f32 0.0, %v2791
        %v2793 = vpop.f32.mrf.mxu0
        %2794 = vmatprep.mubr.bf16.mxu0 0
        %2795 = vmatmul.mubr.bf16.gmra.mxu0 %v2645
        %v2796 = vpop.f32.mrf.mxu0
        %v2797 = vadd.f32 0.0, %v2796
        %v2798 = vpop.f32.mrf.mxu0
        %v2799 = vpop.f32.mrf.mxu0
        %v2800 = vadd.f32 0.0, %v2799
        %v2801 = vpop.f32.mrf.mxu0
        %2802 = vmatprep.mubr.bf16.mxu0 0
        %2803 = vmatmul.mubr.bf16.gmra.mxu0 %v2648
        %v2804 = vpop.f32.mrf.mxu0
        %v2805 = vadd.f32 0.0, %v2804
        %v2806 = vpop.f32.mrf.mxu0
        %v2807 = vpop.f32.mrf.mxu0
        %v2808 = vadd.f32 0.0, %v2807
        %v2809 = vpop.f32.mrf.mxu0
        %2810 = vdwg.mxu0
        %v2811 = vadd.f32 %v2057, %v2685
        %v2812 = vadd.f32 %v2058, %v2688
        %v2813 = vadd.f32 %v2059, %v2693
        %v2814 = vadd.f32 %v2060, %v2696
        %v2815 = vadd.f32 %v2061, %v2701
        %v2816 = vadd.f32 %v2062, %v2704
        %v2817 = vadd.f32 %v2063, %v2709
        %v2818 = vadd.f32 %v2064, %v2712
        %v2819 = vadd.f32 %v2065, %v2717
        %v2820 = vadd.f32 %v2066, %v2720
        %v2821 = vadd.f32 %v2067, %v2725
        %v2822 = vadd.f32 %v2068, %v2728
        %v2823 = vadd.f32 %v2069, %v2733
        %v2824 = vadd.f32 %v2070, %v2736
        %v2825 = vadd.f32 %v2071, %v2741
        %v2826 = vadd.f32 %v2072, %v2744
        %v2827 = vadd.f32 %v2073, %v2749
        %v2828 = vadd.f32 %v2074, %v2752
        %v2829 = vadd.f32 %v2075, %v2757
        %v2830 = vadd.f32 %v2076, %v2760
        %v2831 = vadd.f32 %v2077, %v2765
        %v2832 = vadd.f32 %v2078, %v2768
        %v2833 = vadd.f32 %v2079, %v2773
        %v2834 = vadd.f32 %v2080, %v2776
        %v2835 = vadd.f32 %v2081, %v2781
        %v2836 = vadd.f32 %v2082, %v2784
        %v2837 = vadd.f32 %v2083, %v2789
        %v2838 = vadd.f32 %v2084, %v2792
        %v2839 = vadd.f32 %v2085, %v2797
        %v2840 = vadd.f32 %v2086, %v2800
        %v2841 = vadd.f32 %v2087, %v2805
        %v2842 = vadd.f32 %v2088, %v2808
        %v2843 = vld [vmem:[%s1702] sm:$0xe]
        %v2844 = vld [vmem:[%s1702 + $0xc] sm:$0xe]
        %v2845 = vld [vmem:[%s1702 + $0x18] sm:$0xe]
        %v2846 = vld [vmem:[%s1702 + $0x24] sm:$0xe]
        %v2847 = vld [vmem:[%s1702 + $0x30] sm:$0xe]
        %v2848 = vld [vmem:[%s1702 + $0x3c] sm:$0xe]
        %v2849 = vld [vmem:[%s1702 + $0x48] sm:$0xe]
        %v2850 = vld [vmem:[%s1702 + $0x54] sm:$0xe]
        %v2851 = vld [vmem:[%s1702 + $0x60] sm:$0xe]
        %v2852 = vld [vmem:[%s1702 + $0x6c] sm:$0xe]
        %v2853 = vld [vmem:[%s1702 + $0x78] sm:$0xe]
        %v2854 = vld [vmem:[%s1702 + $0x84] sm:$0xe]
        %v2855 = vld [vmem:[%s1702 + $0x90] sm:$0xe]
        %v2856 = vld [vmem:[%s1702 + $0x9c] sm:$0xe]
        %v2857 = vld [vmem:[%s1702 + $0xa8] sm:$0xe]
        %v2858 = vld [vmem:[%s1702 + $0xb4] sm:$0xe]
        %v2907 = vrot.slane %v2843, 5
        %v2908 = vrot.slane %v2907, 4
        %v2909 = vrot.slane %v2090, 5
        %v2910 = vsel %vm1267, %v2908, %v2909
        %v2911 = vrot.slane %v2909, 4
        %v2912 = vrot.slane %v2091, 5
        %v2913 = vsel %vm1267, %v2911, %v2912
        %v2914 = vrot.slane %v2844, 5
        %v2915 = vrot.slane %v2914, 4
        %v2916 = vrot.slane %v2093, 5
        %v2917 = vsel %vm1267, %v2915, %v2916
        %v2918 = vrot.slane %v2916, 4
        %v2919 = vrot.slane %v2094, 5
        %v2920 = vsel %vm1267, %v2918, %v2919
        %v2921 = vrot.slane %v2845, 5
        %v2922 = vrot.slane %v2921, 4
        %v2923 = vrot.slane %v2096, 5
        %v2924 = vsel %vm1267, %v2922, %v2923
        %v2925 = vrot.slane %v2923, 4
        %v2926 = vrot.slane %v2097, 5
        %v2927 = vsel %vm1267, %v2925, %v2926
        %v2928 = vrot.slane %v2846, 5
        %v2929 = vrot.slane %v2928, 4
        %v2930 = vrot.slane %v2099, 5
        %v2931 = vsel %vm1267, %v2929, %v2930
        %v2932 = vrot.slane %v2930, 4
        %v2933 = vrot.slane %v2100, 5
        %v2934 = vsel %vm1267, %v2932, %v2933
        %v2935 = vrot.slane %v2847, 5
        %v2936 = vrot.slane %v2935, 4
        %v2937 = vrot.slane %v2102, 5
        %v2938 = vsel %vm1267, %v2936, %v2937
        %v2939 = vrot.slane %v2937, 4
        %v2940 = vrot.slane %v2103, 5
        %v2941 = vsel %vm1267, %v2939, %v2940
        %v2942 = vrot.slane %v2848, 5
        %v2943 = vrot.slane %v2942, 4
        %v2944 = vrot.slane %v2105, 5
        %v2945 = vsel %vm1267, %v2943, %v2944
        %v2946 = vrot.slane %v2944, 4
        %v2947 = vrot.slane %v2106, 5
        %v2948 = vsel %vm1267, %v2946, %v2947
        %v2949 = vrot.slane %v2849, 5
        %v2950 = vrot.slane %v2949, 4
        %v2951 = vrot.slane %v2108, 5
        %v2952 = vsel %vm1267, %v2950, %v2951
        %v2953 = vrot.slane %v2951, 4
        %v2954 = vrot.slane %v2109, 5
        %v2955 = vsel %vm1267, %v2953, %v2954
        %v2956 = vrot.slane %v2850, 5
        %v2957 = vrot.slane %v2956, 4
        %v2958 = vrot.slane %v2111, 5
        %v2959 = vsel %vm1267, %v2957, %v2958
        %v2960 = vrot.slane %v2958, 4
        %v2961 = vrot.slane %v2112, 5
        %v2962 = vsel %vm1267, %v2960, %v2961
        %v2963 = vrot.slane %v2851, 5
        %v2964 = vrot.slane %v2963, 4
        %v2965 = vrot.slane %v2114, 5
        %v2966 = vsel %vm1267, %v2964, %v2965
        %v2967 = vrot.slane %v2965, 4
        %v2968 = vrot.slane %v2115, 5
        %v2969 = vsel %vm1267, %v2967, %v2968
        %v2970 = vrot.slane %v2852, 5
        %v2971 = vrot.slane %v2970, 4
        %v2972 = vrot.slane %v2117, 5
        %v2973 = vsel %vm1267, %v2971, %v2972
        %v2974 = vrot.slane %v2972, 4
        %v2975 = vrot.slane %v2118, 5
        %v2976 = vsel %vm1267, %v2974, %v2975
        %v2977 = vrot.slane %v2853, 5
        %v2978 = vrot.slane %v2977, 4
        %v2979 = vrot.slane %v2120, 5
        %v2980 = vsel %vm1267, %v2978, %v2979
        %v2981 = vrot.slane %v2979, 4
        %v2982 = vrot.slane %v2121, 5
        %v2983 = vsel %vm1267, %v2981, %v2982
        %v2984 = vrot.slane %v2854, 5
        %v2985 = vrot.slane %v2984, 4
        %v2986 = vrot.slane %v2123, 5
        %v2987 = vsel %vm1267, %v2985, %v2986
        %v2988 = vrot.slane %v2986, 4
        %v2989 = vrot.slane %v2124, 5
        %v2990 = vsel %vm1267, %v2988, %v2989
        %v2991 = vrot.slane %v2855, 5
        %v2992 = vrot.slane %v2991, 4
        %v2993 = vrot.slane %v2126, 5
        %v2994 = vsel %vm1267, %v2992, %v2993
        %v2995 = vrot.slane %v2993, 4
        %v2996 = vrot.slane %v2127, 5
        %v2997 = vsel %vm1267, %v2995, %v2996
        %v2998 = vrot.slane %v2856, 5
        %v2999 = vrot.slane %v2998, 4
        %v3000 = vrot.slane %v2129, 5
        %v3001 = vsel %vm1267, %v2999, %v3000
        %v3002 = vrot.slane %v3000, 4
        %v3003 = vrot.slane %v2130, 5
        %v3004 = vsel %vm1267, %v3002, %v3003
        %v3005 = vrot.slane %v2857, 5
        %v3006 = vrot.slane %v3005, 4
        %v3007 = vrot.slane %v2132, 5
        %v3008 = vsel %vm1267, %v3006, %v3007
        %v3009 = vrot.slane %v3007, 4
        %v3010 = vrot.slane %v2133, 5
        %v3011 = vsel %vm1267, %v3009, %v3010
        %v3012 = vrot.slane %v2858, 5
        %v3013 = vrot.slane %v3012, 4
        %v3014 = vrot.slane %v2135, 5
        %v3015 = vsel %vm1267, %v3013, %v3014
        %v3016 = vrot.slane %v3014, 4
        %v3017 = vrot.slane %v2136, 5
        %v3018 = vsel %vm1267, %v3016, %v3017
        %s3019 = scalar_lea.vmem %s1, 160
        %v3020 = vld [vmem:[%s3019] sm:$0xf]
        %v3021 = vld [vmem:[%s3019 + $0x4] sm:$0xf]
        %v3022 = vld [vmem:[%s3019 + $0x8] sm:$0xf]
        %v3023 = vld [vmem:[%s3019 + $0xc] sm:$0xf]
        %v3024 = vld [vmem:[%s3019 + $0x10] sm:$0xf]
        %v3025 = vld [vmem:[%s3019 + $0x14] sm:$0xf]
        %v3026 = vld [vmem:[%s3019 + $0x18] sm:$0xf]
        %v3027 = vld [vmem:[%s3019 + $0x1c] sm:$0xf]
        %v3028 = vunpack.c.l.b16 %v2910
        %v3029 = vunpack.c.l.b16 %v2913
        %v3030 = vunpack.c.l.b16 %v2917
        %v3031 = vunpack.c.l.b16 %v2920
        %v3032 = vunpack.c.l.b16 %v2924
        %v3033 = vunpack.c.l.b16 %v2927
        %v3034 = vunpack.c.l.b16 %v2931
        %v3035 = vunpack.c.l.b16 %v2934
        %v3036 = vunpack.c.l.b16 %v2938
        %v3037 = vunpack.c.l.b16 %v2941
        %v3038 = vunpack.c.l.b16 %v2945
        %v3039 = vunpack.c.l.b16 %v2948
        %v3040 = vunpack.c.l.b16 %v2952
        %v3041 = vunpack.c.l.b16 %v2955
        %v3042 = vunpack.c.l.b16 %v2959
        %v3043 = vunpack.c.l.b16 %v2962
        %v3044 = vunpack.c.l.b16 %v2966
        %v3045 = vunpack.c.l.b16 %v2969
        %v3046 = vunpack.c.l.b16 %v2973
        %v3047 = vunpack.c.l.b16 %v2976
        %v3048 = vunpack.c.l.b16 %v2980
        %v3049 = vunpack.c.l.b16 %v2983
        %v3050 = vunpack.c.l.b16 %v2987
        %v3051 = vunpack.c.l.b16 %v2990
        %v3052 = vunpack.c.l.b16 %v2994
        %v3053 = vunpack.c.l.b16 %v2997
        %v3054 = vunpack.c.l.b16 %v3001
        %v3055 = vunpack.c.l.b16 %v3004
        %v3056 = vunpack.c.l.b16 %v3008
        %v3057 = vunpack.c.l.b16 %v3011
        %v3058 = vunpack.c.l.b16 %v3015
        %v3059 = vunpack.c.l.b16 %v3018
        %v3060 = vpack.c.b16 %v3029, %v3028
        %v3061 = vpack.c.b16 %v3031, %v3030
        %v3062 = vpack.c.b16 %v3033, %v3032
        %v3063 = vpack.c.b16 %v3035, %v3034
        %v3064 = vpack.c.b16 %v3037, %v3036
        %v3065 = vpack.c.b16 %v3039, %v3038
        %v3066 = vpack.c.b16 %v3041, %v3040
        %v3067 = vpack.c.b16 %v3043, %v3042
        %v3068 = vpack.c.b16 %v3045, %v3044
        %v3069 = vpack.c.b16 %v3047, %v3046
        %v3070 = vpack.c.b16 %v3049, %v3048
        %v3071 = vpack.c.b16 %v3051, %v3050
        %v3072 = vpack.c.b16 %v3053, %v3052
        %v3073 = vpack.c.b16 %v3055, %v3054
        %v3074 = vpack.c.b16 %v3057, %v3056
        %v3075 = vpack.c.b16 %v3059, %v3058
        %v3084 = vunpack.c.l.b16 %v3020
        %v3085 = vunpack.c.l.b16 %v3021
        %v3086 = vunpack.c.l.b16 %v3022
        %v3087 = vunpack.c.l.b16 %v3023
        %v3088 = vunpack.c.l.b16 %v3024
        %v3089 = vunpack.c.l.b16 %v3025
        %v3090 = vunpack.c.l.b16 %v3026
        %v3091 = vunpack.c.l.b16 %v3027
        %v3092 = vpack.c.b16 %v3085, %v3084
        %v3093 = vpack.c.b16 %v3087, %v3086
        %v3094 = vpack.c.b16 %v3089, %v3088
        %v3095 = vpack.c.b16 %v3091, %v3090
        %v3101 = vsel %vm694, %v3060, 0
        %v3104 = vsel %vm694, %v3061, 0
        %v3107 = vsel %vm694, %v3062, 0
        %v3110 = vsel %vm694, %v3063, 0
        %v3113 = vsel %vm694, %v3064, 0
        %v3116 = vsel %vm694, %v3065, 0
        %v3119 = vsel %vm694, %v3066, 0
        %v3122 = vsel %vm694, %v3067, 0
        %v3125 = vsel %vm694, %v3068, 0
        %v3128 = vsel %vm694, %v3069, 0
        %v3131 = vsel %vm694, %v3070, 0
        %v3134 = vsel %vm694, %v3071, 0
        %v3137 = vsel %vm694, %v3072, 0
        %v3140 = vsel %vm694, %v3073, 0
        %v3143 = vsel %vm694, %v3074, 0
        %v3146 = vsel %vm694, %v3075, 0
        %3148 = vmatprep.subr.bf16.mxu0 0
        %3149 = vmatpush1.bf16.msra.mxu0 0
        %3150 = vmatprep.subr.bf16.mxu0 0
        %3151 = vmatpush1.bf16.msra.mxu0 0
        %3152 = vmatprep.subr.bf16.mxu0 0
        %3153 = vmatpush1.bf16.msra.mxu0 0
        %3154 = vmatprep.subr.bf16.mxu0 0
        %3155 = vmatpush1.bf16.msra.mxu0 0
        %3156 = vmatprep.subr.bf16.mxu0 0
        %3157 = vmatpush1.bf16.msra.mxu0 %v3095
        %3158 = vmatprep.subr.bf16.mxu0 0
        %3159 = vmatpush1.bf16.msra.mxu0 %v3094
        %3160 = vmatprep.subr.bf16.mxu0 0
        %3161 = vmatpush1.bf16.msra.mxu0 %v3093
        %3162 = vmatprep.subr.bf16.mxu0 0
        %3163 = vmatpush1.bf16.msra.mxu0 %v3092
        %3164 = vmatprep.subr.bf16.mxu0 0
        %3165 = vmatpush2.bf16.msra.mxu0 0
        %3166 = vmatprep.subr.bf16.mxu0 0
        %3167 = vmatpush2.bf16.msra.mxu0 0
        %3168 = vmatprep.subr.bf16.mxu0 0
        %3169 = vmatpush2.bf16.msra.mxu0 0
        %3170 = vmatprep.subr.bf16.mxu0 0
        %3171 = vmatpush2.bf16.msra.mxu0 0
        %3172 = vmatprep.subr.bf16.mxu0 0
        %3173 = vmatpush2.bf16.msra.mxu0 0
        %3174 = vmatprep.subr.bf16.mxu0 0
        %3175 = vmatpush2.bf16.msra.mxu0 0
        %3176 = vmatprep.subr.bf16.mxu0 0
        %3177 = vmatpush2.bf16.msra.mxu0 0
        %3178 = vmatprep.subr.bf16.mxu0 0
        %3179 = vmatpush2.bf16.msra.mxu0 0
        %3180 = vmatprep.mubr.bf16.mxu0 0
        %3181 = vmatmul.mubr.bf16.gmra.mxu0 %v3101
        %v3182 = vpop.f32.mrf.mxu0
        %v3183 = vadd.f32 0.0, %v3182
        %v3184 = vpop.f32.mrf.mxu0
        %v3185 = vpop.f32.mrf.mxu0
        %v3186 = vadd.f32 0.0, %v3185
        %v3187 = vpop.f32.mrf.mxu0
        %3188 = vmatprep.mubr.bf16.mxu0 0
        %3189 = vmatmul.mubr.bf16.gmra.mxu0 %v3104
        %v3190 = vpop.f32.mrf.mxu0
        %v3191 = vadd.f32 0.0, %v3190
        %v3192 = vpop.f32.mrf.mxu0
        %v3193 = vpop.f32.mrf.mxu0
        %v3194 = vadd.f32 0.0, %v3193
        %v3195 = vpop.f32.mrf.mxu0
        %3196 = vmatprep.mubr.bf16.mxu0 0
        %3197 = vmatmul.mubr.bf16.gmra.mxu0 %v3107
        %v3198 = vpop.f32.mrf.mxu0
        %v3199 = vadd.f32 0.0, %v3198
        %v3200 = vpop.f32.mrf.mxu0
        %v3201 = vpop.f32.mrf.mxu0
        %v3202 = vadd.f32 0.0, %v3201
        %v3203 = vpop.f32.mrf.mxu0
        %3204 = vmatprep.mubr.bf16.mxu0 0
        %3205 = vmatmul.mubr.bf16.gmra.mxu0 %v3110
        %v3206 = vpop.f32.mrf.mxu0
        %v3207 = vadd.f32 0.0, %v3206
        %v3208 = vpop.f32.mrf.mxu0
        %v3209 = vpop.f32.mrf.mxu0
        %v3210 = vadd.f32 0.0, %v3209
        %v3211 = vpop.f32.mrf.mxu0
        %3212 = vmatprep.mubr.bf16.mxu0 0
        %3213 = vmatmul.mubr.bf16.gmra.mxu0 %v3113
        %v3214 = vpop.f32.mrf.mxu0
        %v3215 = vadd.f32 0.0, %v3214
        %v3216 = vpop.f32.mrf.mxu0
        %v3217 = vpop.f32.mrf.mxu0
        %v3218 = vadd.f32 0.0, %v3217
        %v3219 = vpop.f32.mrf.mxu0
        %3220 = vmatprep.mubr.bf16.mxu0 0
        %3221 = vmatmul.mubr.bf16.gmra.mxu0 %v3116
        %v3222 = vpop.f32.mrf.mxu0
        %v3223 = vadd.f32 0.0, %v3222
        %v3224 = vpop.f32.mrf.mxu0
        %v3225 = vpop.f32.mrf.mxu0
        %v3226 = vadd.f32 0.0, %v3225
        %v3227 = vpop.f32.mrf.mxu0
        %3228 = vmatprep.mubr.bf16.mxu0 0
        %3229 = vmatmul.mubr.bf16.gmra.mxu0 %v3119
        %v3230 = vpop.f32.mrf.mxu0
        %v3231 = vadd.f32 0.0, %v3230
        %v3232 = vpop.f32.mrf.mxu0
        %v3233 = vpop.f32.mrf.mxu0
        %v3234 = vadd.f32 0.0, %v3233
        %v3235 = vpop.f32.mrf.mxu0
        %3236 = vmatprep.mubr.bf16.mxu0 0
        %3237 = vmatmul.mubr.bf16.gmra.mxu0 %v3122
        %v3238 = vpop.f32.mrf.mxu0
        %v3239 = vadd.f32 0.0, %v3238
        %v3240 = vpop.f32.mrf.mxu0
        %v3241 = vpop.f32.mrf.mxu0
        %v3242 = vadd.f32 0.0, %v3241
        %v3243 = vpop.f32.mrf.mxu0
        %3244 = vmatprep.mubr.bf16.mxu0 0
        %3245 = vmatmul.mubr.bf16.gmra.mxu0 %v3125
        %v3246 = vpop.f32.mrf.mxu0
        %v3247 = vadd.f32 0.0, %v3246
        %v3248 = vpop.f32.mrf.mxu0
        %v3249 = vpop.f32.mrf.mxu0
        %v3250 = vadd.f32 0.0, %v3249
        %v3251 = vpop.f32.mrf.mxu0
        %3252 = vmatprep.mubr.bf16.mxu0 0
        %3253 = vmatmul.mubr.bf16.gmra.mxu0 %v3128
        %v3254 = vpop.f32.mrf.mxu0
        %v3255 = vadd.f32 0.0, %v3254
        %v3256 = vpop.f32.mrf.mxu0
        %v3257 = vpop.f32.mrf.mxu0
        %v3258 = vadd.f32 0.0, %v3257
        %v3259 = vpop.f32.mrf.mxu0
        %3260 = vmatprep.mubr.bf16.mxu0 0
        %3261 = vmatmul.mubr.bf16.gmra.mxu0 %v3131
        %v3262 = vpop.f32.mrf.mxu0
        %v3263 = vadd.f32 0.0, %v3262
        %v3264 = vpop.f32.mrf.mxu0
        %v3265 = vpop.f32.mrf.mxu0
        %v3266 = vadd.f32 0.0, %v3265
        %v3267 = vpop.f32.mrf.mxu0
        %3268 = vmatprep.mubr.bf16.mxu0 0
        %3269 = vmatmul.mubr.bf16.gmra.mxu0 %v3134
        %v3270 = vpop.f32.mrf.mxu0
        %v3271 = vadd.f32 0.0, %v3270
        %v3272 = vpop.f32.mrf.mxu0
        %v3273 = vpop.f32.mrf.mxu0
        %v3274 = vadd.f32 0.0, %v3273
        %v3275 = vpop.f32.mrf.mxu0
        %3276 = vmatprep.mubr.bf16.mxu0 0
        %3277 = vmatmul.mubr.bf16.gmra.mxu0 %v3137
        %v3278 = vpop.f32.mrf.mxu0
        %v3279 = vadd.f32 0.0, %v3278
        %v3280 = vpop.f32.mrf.mxu0
        %v3281 = vpop.f32.mrf.mxu0
        %v3282 = vadd.f32 0.0, %v3281
        %v3283 = vpop.f32.mrf.mxu0
        %3284 = vmatprep.mubr.bf16.mxu0 0
        %3285 = vmatmul.mubr.bf16.gmra.mxu0 %v3140
        %v3286 = vpop.f32.mrf.mxu0
        %v3287 = vadd.f32 0.0, %v3286
        %v3288 = vpop.f32.mrf.mxu0
        %v3289 = vpop.f32.mrf.mxu0
        %v3290 = vadd.f32 0.0, %v3289
        %v3291 = vpop.f32.mrf.mxu0
        %3292 = vmatprep.mubr.bf16.mxu0 0
        %3293 = vmatmul.mubr.bf16.gmra.mxu0 %v3143
        %v3294 = vpop.f32.mrf.mxu0
        %v3295 = vadd.f32 0.0, %v3294
        %v3296 = vpop.f32.mrf.mxu0
        %v3297 = vpop.f32.mrf.mxu0
        %v3298 = vadd.f32 0.0, %v3297
        %v3299 = vpop.f32.mrf.mxu0
        %3300 = vmatprep.mubr.bf16.mxu0 0
        %3301 = vmatmul.mubr.bf16.gmra.mxu0 %v3146
        %v3302 = vpop.f32.mrf.mxu0
        %v3303 = vadd.f32 0.0, %v3302
        %v3304 = vpop.f32.mrf.mxu0
        %v3305 = vpop.f32.mrf.mxu0
        %v3306 = vadd.f32 0.0, %v3305
        %v3307 = vpop.f32.mrf.mxu0
        %3308 = vdwg.mxu0
        %v3309 = vadd.f32 %v2811, %v3183
        %v3310 = vadd.f32 %v2812, %v3186
        %v3311 = vadd.f32 %v2813, %v3191
        %v3312 = vadd.f32 %v2814, %v3194
        %v3313 = vadd.f32 %v2815, %v3199
        %v3314 = vadd.f32 %v2816, %v3202
        %v3315 = vadd.f32 %v2817, %v3207
        %v3316 = vadd.f32 %v2818, %v3210
        %v3317 = vadd.f32 %v2819, %v3215
        %v3318 = vadd.f32 %v2820, %v3218
        %v3319 = vadd.f32 %v2821, %v3223
        %v3320 = vadd.f32 %v2822, %v3226
        %v3321 = vadd.f32 %v2823, %v3231
        %v3322 = vadd.f32 %v2824, %v3234
        %v3323 = vadd.f32 %v2825, %v3239
        %v3324 = vadd.f32 %v2826, %v3242
        %v3325 = vadd.f32 %v2827, %v3247
        %v3326 = vadd.f32 %v2828, %v3250
        %v3327 = vadd.f32 %v2829, %v3255
        %v3328 = vadd.f32 %v2830, %v3258
        %v3329 = vadd.f32 %v2831, %v3263
        %v3330 = vadd.f32 %v2832, %v3266
        %v3331 = vadd.f32 %v2833, %v3271
        %v3332 = vadd.f32 %v2834, %v3274
        %v3333 = vadd.f32 %v2835, %v3279
        %v3334 = vadd.f32 %v2836, %v3282
        %v3335 = vadd.f32 %v2837, %v3287
        %v3336 = vadd.f32 %v2838, %v3290
        %v3337 = vadd.f32 %v2839, %v3295
        %v3338 = vadd.f32 %v2840, %v3298
        %v3339 = vadd.f32 %v2841, %v3303
        %v3340 = vadd.f32 %v2842, %v3306
        %s3341 = scalar_lea.vmem %s168, 24
        %v3342 = vld [vmem:[%s3341] sm:$0xf]
        %v3343 = vld [vmem:[%s3341 + $0x4] sm:$0xf]
        %v3344 = vld [vmem:[%s3341 + $0xc] sm:$0xf]
        %v3345 = vld [vmem:[%s3341 + $0x10] sm:$0xf]
        %v3346 = vld [vmem:[%s3341 + $0x18] sm:$0xf]
        %v3347 = vld [vmem:[%s3341 + $0x1c] sm:$0xf]
        %v3348 = vld [vmem:[%s3341 + $0x24] sm:$0xf]
        %v3349 = vld [vmem:[%s3341 + $0x28] sm:$0xf]
        %v3350 = vld [vmem:[%s3341 + $0x30] sm:$0xf]
        %v3351 = vld [vmem:[%s3341 + $0x34] sm:$0xf]
        %v3352 = vld [vmem:[%s3341 + $0x3c] sm:$0xf]
        %v3353 = vld [vmem:[%s3341 + $0x40] sm:$0xf]
        %v3354 = vld [vmem:[%s3341 + $0x48] sm:$0xf]
        %v3355 = vld [vmem:[%s3341 + $0x4c] sm:$0xf]
        %v3356 = vld [vmem:[%s3341 + $0x54] sm:$0xf]
        %v3357 = vld [vmem:[%s3341 + $0x58] sm:$0xf]
        %v3358 = vld [vmem:[%s3341 + $0x60] sm:$0xf]
        %v3359 = vld [vmem:[%s3341 + $0x64] sm:$0xf]
        %v3360 = vld [vmem:[%s3341 + $0x6c] sm:$0xf]
        %v3361 = vld [vmem:[%s3341 + $0x70] sm:$0xf]
        %v3362 = vld [vmem:[%s3341 + $0x78] sm:$0xf]
        %v3363 = vld [vmem:[%s3341 + $0x7c] sm:$0xf]
        %v3364 = vld [vmem:[%s3341 + $0x84] sm:$0xf]
        %v3365 = vld [vmem:[%s3341 + $0x88] sm:$0xf]
        %v3366 = vld [vmem:[%s3341 + $0x90] sm:$0xf]
        %v3367 = vld [vmem:[%s3341 + $0x94] sm:$0xf]
        %v3368 = vld [vmem:[%s3341 + $0x9c] sm:$0xf]
        %v3369 = vld [vmem:[%s3341 + $0xa0] sm:$0xf]
        %v3370 = vld [vmem:[%s3341 + $0xa8] sm:$0xf]
        %v3371 = vld [vmem:[%s3341 + $0xac] sm:$0xf]
        %v3372 = vld [vmem:[%s3341 + $0xb4] sm:$0xf]
        %v3373 = vld [vmem:[%s3341 + $0xb8] sm:$0xf]
        %s3374 = scalar_lea.vmem %s1, 192
        %v3375 = vld [vmem:[%s3374] sm:$0xf]
        %v3376 = vld [vmem:[%s3374 + $0x4] sm:$0xf]
        %v3377 = vld [vmem:[%s3374 + $0x8] sm:$0xf]
        %v3378 = vld [vmem:[%s3374 + $0xc] sm:$0xf]
        %v3379 = vld [vmem:[%s3374 + $0x10] sm:$0xf]
        %v3380 = vld [vmem:[%s3374 + $0x14] sm:$0xf]
        %v3381 = vld [vmem:[%s3374 + $0x18] sm:$0xf]
        %v3382 = vld [vmem:[%s3374 + $0x1c] sm:$0xf]
        %v3415 = vunpack.c.l.b16 %v3342
        %v3416 = vunpack.c.l.b16 %v3343
        %v3417 = vunpack.c.l.b16 %v3344
        %v3418 = vunpack.c.l.b16 %v3345
        %v3419 = vunpack.c.l.b16 %v3346
        %v3420 = vunpack.c.l.b16 %v3347
        %v3421 = vunpack.c.l.b16 %v3348
        %v3422 = vunpack.c.l.b16 %v3349
        %v3423 = vunpack.c.l.b16 %v3350
        %v3424 = vunpack.c.l.b16 %v3351
        %v3425 = vunpack.c.l.b16 %v3352
        %v3426 = vunpack.c.l.b16 %v3353
        %v3427 = vunpack.c.l.b16 %v3354
        %v3428 = vunpack.c.l.b16 %v3355
        %v3429 = vunpack.c.l.b16 %v3356
        %v3430 = vunpack.c.l.b16 %v3357
        %v3431 = vunpack.c.l.b16 %v3358
        %v3432 = vunpack.c.l.b16 %v3359
        %v3433 = vunpack.c.l.b16 %v3360
        %v3434 = vunpack.c.l.b16 %v3361
        %v3435 = vunpack.c.l.b16 %v3362
        %v3436 = vunpack.c.l.b16 %v3363
        %v3437 = vunpack.c.l.b16 %v3364
        %v3438 = vunpack.c.l.b16 %v3365
        %v3439 = vunpack.c.l.b16 %v3366
        %v3440 = vunpack.c.l.b16 %v3367
        %v3441 = vunpack.c.l.b16 %v3368
        %v3442 = vunpack.c.l.b16 %v3369
        %v3443 = vunpack.c.l.b16 %v3370
        %v3444 = vunpack.c.l.b16 %v3371
        %v3445 = vunpack.c.l.b16 %v3372
        %v3446 = vunpack.c.l.b16 %v3373
        %v3447 = vpack.c.b16 %v3416, %v3415
        %v3448 = vpack.c.b16 %v3418, %v3417
        %v3449 = vpack.c.b16 %v3420, %v3419
        %v3450 = vpack.c.b16 %v3422, %v3421
        %v3451 = vpack.c.b16 %v3424, %v3423
        %v3452 = vpack.c.b16 %v3426, %v3425
        %v3453 = vpack.c.b16 %v3428, %v3427
        %v3454 = vpack.c.b16 %v3430, %v3429
        %v3455 = vpack.c.b16 %v3432, %v3431
        %v3456 = vpack.c.b16 %v3434, %v3433
        %v3457 = vpack.c.b16 %v3436, %v3435
        %v3458 = vpack.c.b16 %v3438, %v3437
        %v3459 = vpack.c.b16 %v3440, %v3439
        %v3460 = vpack.c.b16 %v3442, %v3441
        %v3461 = vpack.c.b16 %v3444, %v3443
        %v3462 = vpack.c.b16 %v3446, %v3445
        %v3471 = vunpack.c.l.b16 %v3375
        %v3472 = vunpack.c.l.b16 %v3376
        %v3473 = vunpack.c.l.b16 %v3377
        %v3474 = vunpack.c.l.b16 %v3378
        %v3475 = vunpack.c.l.b16 %v3379
        %v3476 = vunpack.c.l.b16 %v3380
        %v3477 = vunpack.c.l.b16 %v3381
        %v3478 = vunpack.c.l.b16 %v3382
        %v3479 = vpack.c.b16 %v3472, %v3471
        %v3480 = vpack.c.b16 %v3474, %v3473
        %v3481 = vpack.c.b16 %v3476, %v3475
        %v3482 = vpack.c.b16 %v3478, %v3477
        %v3488 = vsel %vm694, %v3447, 0
        %v3491 = vsel %vm694, %v3448, 0
        %v3494 = vsel %vm694, %v3449, 0
        %v3497 = vsel %vm694, %v3450, 0
        %v3500 = vsel %vm694, %v3451, 0
        %v3503 = vsel %vm694, %v3452, 0
        %v3506 = vsel %vm694, %v3453, 0
        %v3509 = vsel %vm694, %v3454, 0
        %v3512 = vsel %vm694, %v3455, 0
        %v3515 = vsel %vm694, %v3456, 0
        %v3518 = vsel %vm694, %v3457, 0
        %v3521 = vsel %vm694, %v3458, 0
        %v3524 = vsel %vm694, %v3459, 0
        %v3527 = vsel %vm694, %v3460, 0
        %v3530 = vsel %vm694, %v3461, 0
        %v3533 = vsel %vm694, %v3462, 0
        %3535 = vmatprep.subr.bf16.mxu0 0
        %3536 = vmatpush1.bf16.msra.mxu0 0
        %3537 = vmatprep.subr.bf16.mxu0 0
        %3538 = vmatpush1.bf16.msra.mxu0 0
        %3539 = vmatprep.subr.bf16.mxu0 0
        %3540 = vmatpush1.bf16.msra.mxu0 0
        %3541 = vmatprep.subr.bf16.mxu0 0
        %3542 = vmatpush1.bf16.msra.mxu0 0
        %3543 = vmatprep.subr.bf16.mxu0 0
        %3544 = vmatpush1.bf16.msra.mxu0 %v3482
        %3545 = vmatprep.subr.bf16.mxu0 0
        %3546 = vmatpush1.bf16.msra.mxu0 %v3481
        %3547 = vmatprep.subr.bf16.mxu0 0
        %3548 = vmatpush1.bf16.msra.mxu0 %v3480
        %3549 = vmatprep.subr.bf16.mxu0 0
        %3550 = vmatpush1.bf16.msra.mxu0 %v3479
        %3551 = vmatprep.subr.bf16.mxu0 0
        %3552 = vmatpush2.bf16.msra.mxu0 0
        %3553 = vmatprep.subr.bf16.mxu0 0
        %3554 = vmatpush2.bf16.msra.mxu0 0
        %3555 = vmatprep.subr.bf16.mxu0 0
        %3556 = vmatpush2.bf16.msra.mxu0 0
        %3557 = vmatprep.subr.bf16.mxu0 0
        %3558 = vmatpush2.bf16.msra.mxu0 0
        %3559 = vmatprep.subr.bf16.mxu0 0
        %3560 = vmatpush2.bf16.msra.mxu0 0
        %3561 = vmatprep.subr.bf16.mxu0 0
        %3562 = vmatpush2.bf16.msra.mxu0 0
        %3563 = vmatprep.subr.bf16.mxu0 0
        %3564 = vmatpush2.bf16.msra.mxu0 0
        %3565 = vmatprep.subr.bf16.mxu0 0
        %3566 = vmatpush2.bf16.msra.mxu0 0
        %3567 = vmatprep.mubr.bf16.mxu0 0
        %3568 = vmatmul.mubr.bf16.gmra.mxu0 %v3488
        %v3569 = vpop.f32.mrf.mxu0
        %v3570 = vadd.f32 0.0, %v3569
        %v3571 = vpop.f32.mrf.mxu0
        %v3572 = vpop.f32.mrf.mxu0
        %v3573 = vadd.f32 0.0, %v3572
        %v3574 = vpop.f32.mrf.mxu0
        %3575 = vmatprep.mubr.bf16.mxu0 0
        %3576 = vmatmul.mubr.bf16.gmra.mxu0 %v3491
        %v3577 = vpop.f32.mrf.mxu0
        %v3578 = vadd.f32 0.0, %v3577
        %v3579 = vpop.f32.mrf.mxu0
        %v3580 = vpop.f32.mrf.mxu0
        %v3581 = vadd.f32 0.0, %v3580
        %v3582 = vpop.f32.mrf.mxu0
        %3583 = vmatprep.mubr.bf16.mxu0 0
        %3584 = vmatmul.mubr.bf16.gmra.mxu0 %v3494
        %v3585 = vpop.f32.mrf.mxu0
        %v3586 = vadd.f32 0.0, %v3585
        %v3587 = vpop.f32.mrf.mxu0
        %v3588 = vpop.f32.mrf.mxu0
        %v3589 = vadd.f32 0.0, %v3588
        %v3590 = vpop.f32.mrf.mxu0
        %3591 = vmatprep.mubr.bf16.mxu0 0
        %3592 = vmatmul.mubr.bf16.gmra.mxu0 %v3497
        %v3593 = vpop.f32.mrf.mxu0
        %v3594 = vadd.f32 0.0, %v3593
        %v3595 = vpop.f32.mrf.mxu0
        %v3596 = vpop.f32.mrf.mxu0
        %v3597 = vadd.f32 0.0, %v3596
        %v3598 = vpop.f32.mrf.mxu0
        %3599 = vmatprep.mubr.bf16.mxu0 0
        %3600 = vmatmul.mubr.bf16.gmra.mxu0 %v3500
        %v3601 = vpop.f32.mrf.mxu0
        %v3602 = vadd.f32 0.0, %v3601
        %v3603 = vpop.f32.mrf.mxu0
        %v3604 = vpop.f32.mrf.mxu0
        %v3605 = vadd.f32 0.0, %v3604
        %v3606 = vpop.f32.mrf.mxu0
        %3607 = vmatprep.mubr.bf16.mxu0 0
        %3608 = vmatmul.mubr.bf16.gmra.mxu0 %v3503
        %v3609 = vpop.f32.mrf.mxu0
        %v3610 = vadd.f32 0.0, %v3609
        %v3611 = vpop.f32.mrf.mxu0
        %v3612 = vpop.f32.mrf.mxu0
        %v3613 = vadd.f32 0.0, %v3612
        %v3614 = vpop.f32.mrf.mxu0
        %3615 = vmatprep.mubr.bf16.mxu0 0
        %3616 = vmatmul.mubr.bf16.gmra.mxu0 %v3506
        %v3617 = vpop.f32.mrf.mxu0
        %v3618 = vadd.f32 0.0, %v3617
        %v3619 = vpop.f32.mrf.mxu0
        %v3620 = vpop.f32.mrf.mxu0
        %v3621 = vadd.f32 0.0, %v3620
        %v3622 = vpop.f32.mrf.mxu0
        %3623 = vmatprep.mubr.bf16.mxu0 0
        %3624 = vmatmul.mubr.bf16.gmra.mxu0 %v3509
        %v3625 = vpop.f32.mrf.mxu0
        %v3626 = vadd.f32 0.0, %v3625
        %v3627 = vpop.f32.mrf.mxu0
        %v3628 = vpop.f32.mrf.mxu0
        %v3629 = vadd.f32 0.0, %v3628
        %v3630 = vpop.f32.mrf.mxu0
        %3631 = vmatprep.mubr.bf16.mxu0 0
        %3632 = vmatmul.mubr.bf16.gmra.mxu0 %v3512
        %v3633 = vpop.f32.mrf.mxu0
        %v3634 = vadd.f32 0.0, %v3633
        %v3635 = vpop.f32.mrf.mxu0
        %v3636 = vpop.f32.mrf.mxu0
        %v3637 = vadd.f32 0.0, %v3636
        %v3638 = vpop.f32.mrf.mxu0
        %3639 = vmatprep.mubr.bf16.mxu0 0
        %3640 = vmatmul.mubr.bf16.gmra.mxu0 %v3515
        %v3641 = vpop.f32.mrf.mxu0
        %v3642 = vadd.f32 0.0, %v3641
        %v3643 = vpop.f32.mrf.mxu0
        %v3644 = vpop.f32.mrf.mxu0
        %v3645 = vadd.f32 0.0, %v3644
        %v3646 = vpop.f32.mrf.mxu0
        %3647 = vmatprep.mubr.bf16.mxu0 0
        %3648 = vmatmul.mubr.bf16.gmra.mxu0 %v3518
        %v3649 = vpop.f32.mrf.mxu0
        %v3650 = vadd.f32 0.0, %v3649
        %v3651 = vpop.f32.mrf.mxu0
        %v3652 = vpop.f32.mrf.mxu0
        %v3653 = vadd.f32 0.0, %v3652
        %v3654 = vpop.f32.mrf.mxu0
        %3655 = vmatprep.mubr.bf16.mxu0 0
        %3656 = vmatmul.mubr.bf16.gmra.mxu0 %v3521
        %v3657 = vpop.f32.mrf.mxu0
        %v3658 = vadd.f32 0.0, %v3657
        %v3659 = vpop.f32.mrf.mxu0
        %v3660 = vpop.f32.mrf.mxu0
        %v3661 = vadd.f32 0.0, %v3660
        %v3662 = vpop.f32.mrf.mxu0
        %3663 = vmatprep.mubr.bf16.mxu0 0
        %3664 = vmatmul.mubr.bf16.gmra.mxu0 %v3524
        %v3665 = vpop.f32.mrf.mxu0
        %v3666 = vadd.f32 0.0, %v3665
        %v3667 = vpop.f32.mrf.mxu0
        %v3668 = vpop.f32.mrf.mxu0
        %v3669 = vadd.f32 0.0, %v3668
        %v3670 = vpop.f32.mrf.mxu0
        %3671 = vmatprep.mubr.bf16.mxu0 0
        %3672 = vmatmul.mubr.bf16.gmra.mxu0 %v3527
        %v3673 = vpop.f32.mrf.mxu0
        %v3674 = vadd.f32 0.0, %v3673
        %v3675 = vpop.f32.mrf.mxu0
        %v3676 = vpop.f32.mrf.mxu0
        %v3677 = vadd.f32 0.0, %v3676
        %v3678 = vpop.f32.mrf.mxu0
        %3679 = vmatprep.mubr.bf16.mxu0 0
        %3680 = vmatmul.mubr.bf16.gmra.mxu0 %v3530
        %v3681 = vpop.f32.mrf.mxu0
        %v3682 = vadd.f32 0.0, %v3681
        %v3683 = vpop.f32.mrf.mxu0
        %v3684 = vpop.f32.mrf.mxu0
        %v3685 = vadd.f32 0.0, %v3684
        %v3686 = vpop.f32.mrf.mxu0
        %3687 = vmatprep.mubr.bf16.mxu0 0
        %3688 = vmatmul.mubr.bf16.gmra.mxu0 %v3533
        %v3689 = vpop.f32.mrf.mxu0
        %v3690 = vadd.f32 0.0, %v3689
        %v3691 = vpop.f32.mrf.mxu0
        %v3692 = vpop.f32.mrf.mxu0
        %v3693 = vadd.f32 0.0, %v3692
        %v3694 = vpop.f32.mrf.mxu0
        %3695 = vdwg.mxu0
        %v3696 = vadd.f32 %v3309, %v3570
        %v3697 = vadd.f32 %v3310, %v3573
        %v3698 = vadd.f32 %v3311, %v3578
        %v3699 = vadd.f32 %v3312, %v3581
        %v3700 = vadd.f32 %v3313, %v3586
        %v3701 = vadd.f32 %v3314, %v3589
        %v3702 = vadd.f32 %v3315, %v3594
        %v3703 = vadd.f32 %v3316, %v3597
        %v3704 = vadd.f32 %v3317, %v3602
        %v3705 = vadd.f32 %v3318, %v3605
        %v3706 = vadd.f32 %v3319, %v3610
        %v3707 = vadd.f32 %v3320, %v3613
        %v3708 = vadd.f32 %v3321, %v3618
        %v3709 = vadd.f32 %v3322, %v3621
        %v3710 = vadd.f32 %v3323, %v3626
        %v3711 = vadd.f32 %v3324, %v3629
        %v3712 = vadd.f32 %v3325, %v3634
        %v3713 = vadd.f32 %v3326, %v3637
        %v3714 = vadd.f32 %v3327, %v3642
        %v3715 = vadd.f32 %v3328, %v3645
        %v3716 = vadd.f32 %v3329, %v3650
        %v3717 = vadd.f32 %v3330, %v3653
        %v3718 = vadd.f32 %v3331, %v3658
        %v3719 = vadd.f32 %v3332, %v3661
        %v3720 = vadd.f32 %v3333, %v3666
        %v3721 = vadd.f32 %v3334, %v3669
        %v3722 = vadd.f32 %v3335, %v3674
        %v3723 = vadd.f32 %v3336, %v3677
        %v3724 = vadd.f32 %v3337, %v3682
        %v3725 = vadd.f32 %v3338, %v3685
        %v3726 = vadd.f32 %v3339, %v3690
        %v3727 = vadd.f32 %v3340, %v3693
        %v3728 = vld [vmem:[%s3341] sm:$0xf]
        %v3729 = vld [vmem:[%s3341 + $0x4] sm:$0xf]
        %v3730 = vld [vmem:[%s3341 + $0x8] sm:$0x1]
        %v3731 = vld [vmem:[%s3341 + $0xc] sm:$0xf]
        %v3732 = vld [vmem:[%s3341 + $0x10] sm:$0xf]
        %v3733 = vld [vmem:[%s3341 + $0x14] sm:$0x1]
        %v3734 = vld [vmem:[%s3341 + $0x18] sm:$0xf]
        %v3735 = vld [vmem:[%s3341 + $0x1c] sm:$0xf]
        %v3736 = vld [vmem:[%s3341 + $0x20] sm:$0x1]
        %v3737 = vld [vmem:[%s3341 + $0x24] sm:$0xf]
        %v3738 = vld [vmem:[%s3341 + $0x28] sm:$0xf]
        %v3739 = vld [vmem:[%s3341 + $0x2c] sm:$0x1]
        %v3740 = vld [vmem:[%s3341 + $0x30] sm:$0xf]
        %v3741 = vld [vmem:[%s3341 + $0x34] sm:$0xf]
        %v3742 = vld [vmem:[%s3341 + $0x38] sm:$0x1]
        %v3743 = vld [vmem:[%s3341 + $0x3c] sm:$0xf]
        %v3744 = vld [vmem:[%s3341 + $0x40] sm:$0xf]
        %v3745 = vld [vmem:[%s3341 + $0x44] sm:$0x1]
        %v3746 = vld [vmem:[%s3341 + $0x48] sm:$0xf]
        %v3747 = vld [vmem:[%s3341 + $0x4c] sm:$0xf]
        %v3748 = vld [vmem:[%s3341 + $0x50] sm:$0x1]
        %v3749 = vld [vmem:[%s3341 + $0x54] sm:$0xf]
        %v3750 = vld [vmem:[%s3341 + $0x58] sm:$0xf]
        %v3751 = vld [vmem:[%s3341 + $0x5c] sm:$0x1]
        %v3752 = vld [vmem:[%s3341 + $0x60] sm:$0xf]
        %v3753 = vld [vmem:[%s3341 + $0x64] sm:$0xf]
        %v3754 = vld [vmem:[%s3341 + $0x68] sm:$0x1]
        %v3755 = vld [vmem:[%s3341 + $0x6c] sm:$0xf]
        %v3756 = vld [vmem:[%s3341 + $0x70] sm:$0xf]
        %v3757 = vld [vmem:[%s3341 + $0x74] sm:$0x1]
        %v3758 = vld [vmem:[%s3341 + $0x78] sm:$0xf]
        %v3759 = vld [vmem:[%s3341 + $0x7c] sm:$0xf]
        %v3760 = vld [vmem:[%s3341 + $0x80] sm:$0x1]
        %v3761 = vld [vmem:[%s3341 + $0x84] sm:$0xf]
        %v3762 = vld [vmem:[%s3341 + $0x88] sm:$0xf]
        %v3763 = vld [vmem:[%s3341 + $0x8c] sm:$0x1]
        %v3764 = vld [vmem:[%s3341 + $0x90] sm:$0xf]
        %v3765 = vld [vmem:[%s3341 + $0x94] sm:$0xf]
        %v3766 = vld [vmem:[%s3341 + $0x98] sm:$0x1]
        %v3767 = vld [vmem:[%s3341 + $0x9c] sm:$0xf]
        %v3768 = vld [vmem:[%s3341 + $0xa0] sm:$0xf]
        %v3769 = vld [vmem:[%s3341 + $0xa4] sm:$0x1]
        %v3770 = vld [vmem:[%s3341 + $0xa8] sm:$0xf]
        %v3771 = vld [vmem:[%s3341 + $0xac] sm:$0xf]
        %v3772 = vld [vmem:[%s3341 + $0xb0] sm:$0x1]
        %v3773 = vld [vmem:[%s3341 + $0xb4] sm:$0xf]
        %v3774 = vld [vmem:[%s3341 + $0xb8] sm:$0xf]
        %v3775 = vld [vmem:[%s3341 + $0xbc] sm:$0x1]
        %v3777 = vshrl.u32 %v3728, 16
        %v3779 = vrot.slane %v3777, 4
        %v3780 = vshll.u32 %v3728, 16
        %v3782 = vrot.slane %v3780, 5
        %v3783 = vor.u32 %v3779, %v3782
        %v3784 = vrot.slane %v3783, 4
        %v3786 = vshll.u32 %v3729, 16
        %v3788 = vrot.slane %v3786, 5
        %v3789 = vsel %vm228, %v3784, %v3788
        %v3790 = vshrl.u32 %v3729, 16
        %v3792 = vrot.slane %v3790, 4
        %v3793 = vor.u32 %v3792, %v3788
        %v3794 = vrot.slane %v3793, 4
        %v3796 = vshll.u32 %v3730, 16
        %v3798 = vrot.slane %v3796, 5
        %v3799 = vsel %vm228, %v3794, %v3798
        %v3801 = vshrl.u32 %v3731, 16
        %v3803 = vrot.slane %v3801, 4
        %v3804 = vshll.u32 %v3731, 16
        %v3806 = vrot.slane %v3804, 5
        %v3807 = vor.u32 %v3803, %v3806
        %v3808 = vrot.slane %v3807, 4
        %v3810 = vshll.u32 %v3732, 16
        %v3812 = vrot.slane %v3810, 5
        %v3813 = vsel %vm228, %v3808, %v3812
        %v3814 = vshrl.u32 %v3732, 16
        %v3816 = vrot.slane %v3814, 4
        %v3817 = vor.u32 %v3816, %v3812
        %v3818 = vrot.slane %v3817, 4
        %v3820 = vshll.u32 %v3733, 16
        %v3822 = vrot.slane %v3820, 5
        %v3823 = vsel %vm228, %v3818, %v3822
        %v3825 = vshrl.u32 %v3734, 16
        %v3827 = vrot.slane %v3825, 4
        %v3828 = vshll.u32 %v3734, 16
        %v3830 = vrot.slane %v3828, 5
        %v3831 = vor.u32 %v3827, %v3830
        %v3832 = vrot.slane %v3831, 4
        %v3834 = vshll.u32 %v3735, 16
        %v3836 = vrot.slane %v3834, 5
        %v3837 = vsel %vm228, %v3832, %v3836
        %v3838 = vshrl.u32 %v3735, 16
        %v3840 = vrot.slane %v3838, 4
        %v3841 = vor.u32 %v3840, %v3836
        %v3842 = vrot.slane %v3841, 4
        %v3844 = vshll.u32 %v3736, 16
        %v3846 = vrot.slane %v3844, 5
        %v3847 = vsel %vm228, %v3842, %v3846
        %v3849 = vshrl.u32 %v3737, 16
        %v3851 = vrot.slane %v3849, 4
        %v3852 = vshll.u32 %v3737, 16
        %v3854 = vrot.slane %v3852, 5
        %v3855 = vor.u32 %v3851, %v3854
        %v3856 = vrot.slane %v3855, 4
        %v3858 = vshll.u32 %v3738, 16
        %v3860 = vrot.slane %v3858, 5
        %v3861 = vsel %vm228, %v3856, %v3860
        %v3862 = vshrl.u32 %v3738, 16
        %v3864 = vrot.slane %v3862, 4
        %v3865 = vor.u32 %v3864, %v3860
        %v3866 = vrot.slane %v3865, 4
        %v3868 = vshll.u32 %v3739, 16
        %v3870 = vrot.slane %v3868, 5
        %v3871 = vsel %vm228, %v3866, %v3870
        %v3873 = vshrl.u32 %v3740, 16
        %v3875 = vrot.slane %v3873, 4
        %v3876 = vshll.u32 %v3740, 16
        %v3878 = vrot.slane %v3876, 5
        %v3879 = vor.u32 %v3875, %v3878
        %v3880 = vrot.slane %v3879, 4
        %v3882 = vshll.u32 %v3741, 16
        %v3884 = vrot.slane %v3882, 5
        %v3885 = vsel %vm228, %v3880, %v3884
        %v3886 = vshrl.u32 %v3741, 16
        %v3888 = vrot.slane %v3886, 4
        %v3889 = vor.u32 %v3888, %v3884
        %v3890 = vrot.slane %v3889, 4
        %v3892 = vshll.u32 %v3742, 16
        %v3894 = vrot.slane %v3892, 5
        %v3895 = vsel %vm228, %v3890, %v3894
        %v3897 = vshrl.u32 %v3743, 16
        %v3899 = vrot.slane %v3897, 4
        %v3900 = vshll.u32 %v3743, 16
        %v3902 = vrot.slane %v3900, 5
        %v3903 = vor.u32 %v3899, %v3902
        %v3904 = vrot.slane %v3903, 4
        %v3906 = vshll.u32 %v3744, 16
        %v3908 = vrot.slane %v3906, 5
        %v3909 = vsel %vm228, %v3904, %v3908
        %v3910 = vshrl.u32 %v3744, 16
        %v3912 = vrot.slane %v3910, 4
        %v3913 = vor.u32 %v3912, %v3908
        %v3914 = vrot.slane %v3913, 4
        %v3916 = vshll.u32 %v3745, 16
        %v3918 = vrot.slane %v3916, 5
        %v3919 = vsel %vm228, %v3914, %v3918
        %v3921 = vshrl.u32 %v3746, 16
        %v3923 = vrot.slane %v3921, 4
        %v3924 = vshll.u32 %v3746, 16
        %v3926 = vrot.slane %v3924, 5
        %v3927 = vor.u32 %v3923, %v3926
        %v3928 = vrot.slane %v3927, 4
        %v3930 = vshll.u32 %v3747, 16
        %v3932 = vrot.slane %v3930, 5
        %v3933 = vsel %vm228, %v3928, %v3932
        %v3934 = vshrl.u32 %v3747, 16
        %v3936 = vrot.slane %v3934, 4
        %v3937 = vor.u32 %v3936, %v3932
        %v3938 = vrot.slane %v3937, 4
        %v3940 = vshll.u32 %v3748, 16
        %v3942 = vrot.slane %v3940, 5
        %v3943 = vsel %vm228, %v3938, %v3942
        %v3945 = vshrl.u32 %v3749, 16
        %v3947 = vrot.slane %v3945, 4
        %v3948 = vshll.u32 %v3749, 16
        %v3950 = vrot.slane %v3948, 5
        %v3951 = vor.u32 %v3947, %v3950
        %v3952 = vrot.slane %v3951, 4
        %v3954 = vshll.u32 %v3750, 16
        %v3956 = vrot.slane %v3954, 5
        %v3957 = vsel %vm228, %v3952, %v3956
        %v3958 = vshrl.u32 %v3750, 16
        %v3960 = vrot.slane %v3958, 4
        %v3961 = vor.u32 %v3960, %v3956
        %v3962 = vrot.slane %v3961, 4
        %v3964 = vshll.u32 %v3751, 16
        %v3966 = vrot.slane %v3964, 5
        %v3967 = vsel %vm228, %v3962, %v3966
        %v3969 = vshrl.u32 %v3752, 16
        %v3971 = vrot.slane %v3969, 4
        %v3972 = vshll.u32 %v3752, 16
        %v3974 = vrot.slane %v3972, 5
        %v3975 = vor.u32 %v3971, %v3974
        %v3976 = vrot.slane %v3975, 4
        %v3978 = vshll.u32 %v3753, 16
        %v3980 = vrot.slane %v3978, 5
        %v3981 = vsel %vm228, %v3976, %v3980
        %v3982 = vshrl.u32 %v3753, 16
        %v3984 = vrot.slane %v3982, 4
        %v3985 = vor.u32 %v3984, %v3980
        %v3986 = vrot.slane %v3985, 4
        %v3988 = vshll.u32 %v3754, 16
        %v3990 = vrot.slane %v3988, 5
        %v3991 = vsel %vm228, %v3986, %v3990
        %v3993 = vshrl.u32 %v3755, 16
        %v3995 = vrot.slane %v3993, 4
        %v3996 = vshll.u32 %v3755, 16
        %v3998 = vrot.slane %v3996, 5
        %v3999 = vor.u32 %v3995, %v3998
        %v4000 = vrot.slane %v3999, 4
        %v4002 = vshll.u32 %v3756, 16
        %v4004 = vrot.slane %v4002, 5
        %v4005 = vsel %vm228, %v4000, %v4004
        %v4006 = vshrl.u32 %v3756, 16
        %v4008 = vrot.slane %v4006, 4
        %v4009 = vor.u32 %v4008, %v4004
        %v4010 = vrot.slane %v4009, 4
        %v4012 = vshll.u32 %v3757, 16
        %v4014 = vrot.slane %v4012, 5
        %v4015 = vsel %vm228, %v4010, %v4014
        %v4017 = vshrl.u32 %v3758, 16
        %v4019 = vrot.slane %v4017, 4
        %v4020 = vshll.u32 %v3758, 16
        %v4022 = vrot.slane %v4020, 5
        %v4023 = vor.u32 %v4019, %v4022
        %v4024 = vrot.slane %v4023, 4
        %v4026 = vshll.u32 %v3759, 16
        %v4028 = vrot.slane %v4026, 5
        %v4029 = vsel %vm228, %v4024, %v4028
        %v4030 = vshrl.u32 %v3759, 16
        %v4032 = vrot.slane %v4030, 4
        %v4033 = vor.u32 %v4032, %v4028
        %v4034 = vrot.slane %v4033, 4
        %v4036 = vshll.u32 %v3760, 16
        %v4038 = vrot.slane %v4036, 5
        %v4039 = vsel %vm228, %v4034, %v4038
        %v4041 = vshrl.u32 %v3761, 16
        %v4043 = vrot.slane %v4041, 4
        %v4044 = vshll.u32 %v3761, 16
        %v4046 = vrot.slane %v4044, 5
        %v4047 = vor.u32 %v4043, %v4046
        %v4048 = vrot.slane %v4047, 4
        %v4050 = vshll.u32 %v3762, 16
        %v4052 = vrot.slane %v4050, 5
        %v4053 = vsel %vm228, %v4048, %v4052
        %v4054 = vshrl.u32 %v3762, 16
        %v4056 = vrot.slane %v4054, 4
        %v4057 = vor.u32 %v4056, %v4052
        %v4058 = vrot.slane %v4057, 4
        %v4060 = vshll.u32 %v3763, 16
        %v4062 = vrot.slane %v4060, 5
        %v4063 = vsel %vm228, %v4058, %v4062
        %v4065 = vshrl.u32 %v3764, 16
        %v4067 = vrot.slane %v4065, 4
        %v4068 = vshll.u32 %v3764, 16
        %v4070 = vrot.slane %v4068, 5
        %v4071 = vor.u32 %v4067, %v4070
        %v4072 = vrot.slane %v4071, 4
        %v4074 = vshll.u32 %v3765, 16
        %v4076 = vrot.slane %v4074, 5
        %v4077 = vsel %vm228, %v4072, %v4076
        %v4078 = vshrl.u32 %v3765, 16
        %v4080 = vrot.slane %v4078, 4
        %v4081 = vor.u32 %v4080, %v4076
        %v4082 = vrot.slane %v4081, 4
        %v4084 = vshll.u32 %v3766, 16
        %v4086 = vrot.slane %v4084, 5
        %v4087 = vsel %vm228, %v4082, %v4086
        %v4089 = vshrl.u32 %v3767, 16
        %v4091 = vrot.slane %v4089, 4
        %v4092 = vshll.u32 %v3767, 16
        %v4094 = vrot.slane %v4092, 5
        %v4095 = vor.u32 %v4091, %v4094
        %v4096 = vrot.slane %v4095, 4
        %v4098 = vshll.u32 %v3768, 16
        %v4100 = vrot.slane %v4098, 5
        %v4101 = vsel %vm228, %v4096, %v4100
        %v4102 = vshrl.u32 %v3768, 16
        %v4104 = vrot.slane %v4102, 4
        %v4105 = vor.u32 %v4104, %v4100
        %v4106 = vrot.slane %v4105, 4
        %v4108 = vshll.u32 %v3769, 16
        %v4110 = vrot.slane %v4108, 5
        %v4111 = vsel %vm228, %v4106, %v4110
        %v4113 = vshrl.u32 %v3770, 16
        %v4115 = vrot.slane %v4113, 4
        %v4116 = vshll.u32 %v3770, 16
        %v4118 = vrot.slane %v4116, 5
        %v4119 = vor.u32 %v4115, %v4118
        %v4120 = vrot.slane %v4119, 4
        %v4122 = vshll.u32 %v3771, 16
        %v4124 = vrot.slane %v4122, 5
        %v4125 = vsel %vm228, %v4120, %v4124
        %v4126 = vshrl.u32 %v3771, 16
        %v4128 = vrot.slane %v4126, 4
        %v4129 = vor.u32 %v4128, %v4124
        %v4130 = vrot.slane %v4129, 4
        %v4132 = vshll.u32 %v3772, 16
        %v4134 = vrot.slane %v4132, 5
        %v4135 = vsel %vm228, %v4130, %v4134
        %v4137 = vshrl.u32 %v3773, 16
        %v4139 = vrot.slane %v4137, 4
        %v4140 = vshll.u32 %v3773, 16
        %v4142 = vrot.slane %v4140, 5
        %v4143 = vor.u32 %v4139, %v4142
        %v4144 = vrot.slane %v4143, 4
        %v4146 = vshll.u32 %v3774, 16
        %v4148 = vrot.slane %v4146, 5
        %v4149 = vsel %vm228, %v4144, %v4148
        %v4150 = vshrl.u32 %v3774, 16
        %v4152 = vrot.slane %v4150, 4
        %v4153 = vor.u32 %v4152, %v4148
        %v4154 = vrot.slane %v4153, 4
        %v4156 = vshll.u32 %v3775, 16
        %v4158 = vrot.slane %v4156, 5
        %v4159 = vsel %vm228, %v4154, %v4158
        %s4160 = scalar_lea.vmem %s1, 224
        %v4161 = vld [vmem:[%s4160] sm:$0xf]
        %v4162 = vld [vmem:[%s4160 + $0x4] sm:$0xf]
        %v4163 = vld [vmem:[%s4160 + $0x8] sm:$0xf]
        %v4164 = vld [vmem:[%s4160 + $0xc] sm:$0xf]
        %v4165 = vld [vmem:[%s4160 + $0x10] sm:$0xf]
        %v4166 = vld [vmem:[%s4160 + $0x14] sm:$0xf]
        %v4167 = vld [vmem:[%s4160 + $0x18] sm:$0xf]
        %v4168 = vld [vmem:[%s4160 + $0x1c] sm:$0xf]
        %v4169 = vunpack.c.l.b16 %v3789
        %v4170 = vunpack.c.l.b16 %v3799
        %v4171 = vunpack.c.l.b16 %v3813
        %v4172 = vunpack.c.l.b16 %v3823
        %v4173 = vunpack.c.l.b16 %v3837
        %v4174 = vunpack.c.l.b16 %v3847
        %v4175 = vunpack.c.l.b16 %v3861
        %v4176 = vunpack.c.l.b16 %v3871
        %v4177 = vunpack.c.l.b16 %v3885
        %v4178 = vunpack.c.l.b16 %v3895
        %v4179 = vunpack.c.l.b16 %v3909
        %v4180 = vunpack.c.l.b16 %v3919
        %v4181 = vunpack.c.l.b16 %v3933
        %v4182 = vunpack.c.l.b16 %v3943
        %v4183 = vunpack.c.l.b16 %v3957
        %v4184 = vunpack.c.l.b16 %v3967
        %v4185 = vunpack.c.l.b16 %v3981
        %v4186 = vunpack.c.l.b16 %v3991
        %v4187 = vunpack.c.l.b16 %v4005
        %v4188 = vunpack.c.l.b16 %v4015
        %v4189 = vunpack.c.l.b16 %v4029
        %v4190 = vunpack.c.l.b16 %v4039
        %v4191 = vunpack.c.l.b16 %v4053
        %v4192 = vunpack.c.l.b16 %v4063
        %v4193 = vunpack.c.l.b16 %v4077
        %v4194 = vunpack.c.l.b16 %v4087
        %v4195 = vunpack.c.l.b16 %v4101
        %v4196 = vunpack.c.l.b16 %v4111
        %v4197 = vunpack.c.l.b16 %v4125
        %v4198 = vunpack.c.l.b16 %v4135
        %v4199 = vunpack.c.l.b16 %v4149
        %v4200 = vunpack.c.l.b16 %v4159
        %v4201 = vpack.c.b16 %v4170, %v4169
        %v4202 = vpack.c.b16 %v4172, %v4171
        %v4203 = vpack.c.b16 %v4174, %v4173
        %v4204 = vpack.c.b16 %v4176, %v4175
        %v4205 = vpack.c.b16 %v4178, %v4177
        %v4206 = vpack.c.b16 %v4180, %v4179
        %v4207 = vpack.c.b16 %v4182, %v4181
        %v4208 = vpack.c.b16 %v4184, %v4183
        %v4209 = vpack.c.b16 %v4186, %v4185
        %v4210 = vpack.c.b16 %v4188, %v4187
        %v4211 = vpack.c.b16 %v4190, %v4189
        %v4212 = vpack.c.b16 %v4192, %v4191
        %v4213 = vpack.c.b16 %v4194, %v4193
        %v4214 = vpack.c.b16 %v4196, %v4195
        %v4215 = vpack.c.b16 %v4198, %v4197
        %v4216 = vpack.c.b16 %v4200, %v4199
        %v4225 = vunpack.c.l.b16 %v4161
        %v4226 = vunpack.c.l.b16 %v4162
        %v4227 = vunpack.c.l.b16 %v4163
        %v4228 = vunpack.c.l.b16 %v4164
        %v4229 = vunpack.c.l.b16 %v4165
        %v4230 = vunpack.c.l.b16 %v4166
        %v4231 = vunpack.c.l.b16 %v4167
        %v4232 = vunpack.c.l.b16 %v4168
        %v4233 = vpack.c.b16 %v4226, %v4225
        %v4234 = vpack.c.b16 %v4228, %v4227
        %v4235 = vpack.c.b16 %v4230, %v4229
        %v4236 = vpack.c.b16 %v4232, %v4231
        %v4242 = vsel %vm694, %v4201, 0
        %v4245 = vsel %vm694, %v4202, 0
        %v4248 = vsel %vm694, %v4203, 0
        %v4251 = vsel %vm694, %v4204, 0
        %v4254 = vsel %vm694, %v4205, 0
        %v4257 = vsel %vm694, %v4206, 0
        %v4260 = vsel %vm694, %v4207, 0
        %v4263 = vsel %vm694, %v4208, 0
        %v4266 = vsel %vm694, %v4209, 0
        %v4269 = vsel %vm694, %v4210, 0
        %v4272 = vsel %vm694, %v4211, 0
        %v4275 = vsel %vm694, %v4212, 0
        %v4278 = vsel %vm694, %v4213, 0
        %v4281 = vsel %vm694, %v4214, 0
        %v4284 = vsel %vm694, %v4215, 0
        %v4287 = vsel %vm694, %v4216, 0
        %4289 = vmatprep.subr.bf16.mxu0 0
        %4290 = vmatpush1.bf16.msra.mxu0 0
        %4291 = vmatprep.subr.bf16.mxu0 0
        %4292 = vmatpush1.bf16.msra.mxu0 0
        %4293 = vmatprep.subr.bf16.mxu0 0
        %4294 = vmatpush1.bf16.msra.mxu0 0
        %4295 = vmatprep.subr.bf16.mxu0 0
        %4296 = vmatpush1.bf16.msra.mxu0 0
        %4297 = vmatprep.subr.bf16.mxu0 0
        %4298 = vmatpush1.bf16.msra.mxu0 %v4236
        %4299 = vmatprep.subr.bf16.mxu0 0
        %4300 = vmatpush1.bf16.msra.mxu0 %v4235
        %4301 = vmatprep.subr.bf16.mxu0 0
        %4302 = vmatpush1.bf16.msra.mxu0 %v4234
        %4303 = vmatprep.subr.bf16.mxu0 0
        %4304 = vmatpush1.bf16.msra.mxu0 %v4233
        %4305 = vmatprep.subr.bf16.mxu0 0
        %4306 = vmatpush2.bf16.msra.mxu0 0
        %4307 = vmatprep.subr.bf16.mxu0 0
        %4308 = vmatpush2.bf16.msra.mxu0 0
        %4309 = vmatprep.subr.bf16.mxu0 0
        %4310 = vmatpush2.bf16.msra.mxu0 0
        %4311 = vmatprep.subr.bf16.mxu0 0
        %4312 = vmatpush2.bf16.msra.mxu0 0
        %4313 = vmatprep.subr.bf16.mxu0 0
        %4314 = vmatpush2.bf16.msra.mxu0 0
        %4315 = vmatprep.subr.bf16.mxu0 0
        %4316 = vmatpush2.bf16.msra.mxu0 0
        %4317 = vmatprep.subr.bf16.mxu0 0
        %4318 = vmatpush2.bf16.msra.mxu0 0
        %4319 = vmatprep.subr.bf16.mxu0 0
        %4320 = vmatpush2.bf16.msra.mxu0 0
        %4321 = vmatprep.mubr.bf16.mxu0 0
        %4322 = vmatmul.mubr.bf16.gmra.mxu0 %v4242
        %v4323 = vpop.f32.mrf.mxu0
        %v4324 = vadd.f32 0.0, %v4323
        %v4325 = vpop.f32.mrf.mxu0
        %v4326 = vpop.f32.mrf.mxu0
        %v4327 = vadd.f32 0.0, %v4326
        %v4328 = vpop.f32.mrf.mxu0
        %4329 = vmatprep.mubr.bf16.mxu0 0
        %4330 = vmatmul.mubr.bf16.gmra.mxu0 %v4245
        %v4331 = vpop.f32.mrf.mxu0
        %v4332 = vadd.f32 0.0, %v4331
        %v4333 = vpop.f32.mrf.mxu0
        %v4334 = vpop.f32.mrf.mxu0
        %v4335 = vadd.f32 0.0, %v4334
        %v4336 = vpop.f32.mrf.mxu0
        %4337 = vmatprep.mubr.bf16.mxu0 0
        %4338 = vmatmul.mubr.bf16.gmra.mxu0 %v4248
        %v4339 = vpop.f32.mrf.mxu0
        %v4340 = vadd.f32 0.0, %v4339
        %v4341 = vpop.f32.mrf.mxu0
        %v4342 = vpop.f32.mrf.mxu0
        %v4343 = vadd.f32 0.0, %v4342
        %v4344 = vpop.f32.mrf.mxu0
        %4345 = vmatprep.mubr.bf16.mxu0 0
        %4346 = vmatmul.mubr.bf16.gmra.mxu0 %v4251
        %v4347 = vpop.f32.mrf.mxu0
        %v4348 = vadd.f32 0.0, %v4347
        %v4349 = vpop.f32.mrf.mxu0
        %v4350 = vpop.f32.mrf.mxu0
        %v4351 = vadd.f32 0.0, %v4350
        %v4352 = vpop.f32.mrf.mxu0
        %4353 = vmatprep.mubr.bf16.mxu0 0
        %4354 = vmatmul.mubr.bf16.gmra.mxu0 %v4254
        %v4355 = vpop.f32.mrf.mxu0
        %v4356 = vadd.f32 0.0, %v4355
        %v4357 = vpop.f32.mrf.mxu0
        %v4358 = vpop.f32.mrf.mxu0
        %v4359 = vadd.f32 0.0, %v4358
        %v4360 = vpop.f32.mrf.mxu0
        %4361 = vmatprep.mubr.bf16.mxu0 0
        %4362 = vmatmul.mubr.bf16.gmra.mxu0 %v4257
        %v4363 = vpop.f32.mrf.mxu0
        %v4364 = vadd.f32 0.0, %v4363
        %v4365 = vpop.f32.mrf.mxu0
        %v4366 = vpop.f32.mrf.mxu0
        %v4367 = vadd.f32 0.0, %v4366
        %v4368 = vpop.f32.mrf.mxu0
        %4369 = vmatprep.mubr.bf16.mxu0 0
        %4370 = vmatmul.mubr.bf16.gmra.mxu0 %v4260
        %v4371 = vpop.f32.mrf.mxu0
        %v4372 = vadd.f32 0.0, %v4371
        %v4373 = vpop.f32.mrf.mxu0
        %v4374 = vpop.f32.mrf.mxu0
        %v4375 = vadd.f32 0.0, %v4374
        %v4376 = vpop.f32.mrf.mxu0
        %4377 = vmatprep.mubr.bf16.mxu0 0
        %4378 = vmatmul.mubr.bf16.gmra.mxu0 %v4263
        %v4379 = vpop.f32.mrf.mxu0
        %v4380 = vadd.f32 0.0, %v4379
        %v4381 = vpop.f32.mrf.mxu0
        %v4382 = vpop.f32.mrf.mxu0
        %v4383 = vadd.f32 0.0, %v4382
        %v4384 = vpop.f32.mrf.mxu0
        %4385 = vmatprep.mubr.bf16.mxu0 0
        %4386 = vmatmul.mubr.bf16.gmra.mxu0 %v4266
        %v4387 = vpop.f32.mrf.mxu0
        %v4388 = vadd.f32 0.0, %v4387
        %v4389 = vpop.f32.mrf.mxu0
        %v4390 = vpop.f32.mrf.mxu0
        %v4391 = vadd.f32 0.0, %v4390
        %v4392 = vpop.f32.mrf.mxu0
        %4393 = vmatprep.mubr.bf16.mxu0 0
        %4394 = vmatmul.mubr.bf16.gmra.mxu0 %v4269
        %v4395 = vpop.f32.mrf.mxu0
        %v4396 = vadd.f32 0.0, %v4395
        %v4397 = vpop.f32.mrf.mxu0
        %v4398 = vpop.f32.mrf.mxu0
        %v4399 = vadd.f32 0.0, %v4398
        %v4400 = vpop.f32.mrf.mxu0
        %4401 = vmatprep.mubr.bf16.mxu0 0
        %4402 = vmatmul.mubr.bf16.gmra.mxu0 %v4272
        %v4403 = vpop.f32.mrf.mxu0
        %v4404 = vadd.f32 0.0, %v4403
        %v4405 = vpop.f32.mrf.mxu0
        %v4406 = vpop.f32.mrf.mxu0
        %v4407 = vadd.f32 0.0, %v4406
        %v4408 = vpop.f32.mrf.mxu0
        %4409 = vmatprep.mubr.bf16.mxu0 0
        %4410 = vmatmul.mubr.bf16.gmra.mxu0 %v4275
        %v4411 = vpop.f32.mrf.mxu0
        %v4412 = vadd.f32 0.0, %v4411
        %v4413 = vpop.f32.mrf.mxu0
        %v4414 = vpop.f32.mrf.mxu0
        %v4415 = vadd.f32 0.0, %v4414
        %v4416 = vpop.f32.mrf.mxu0
        %4417 = vmatprep.mubr.bf16.mxu0 0
        %4418 = vmatmul.mubr.bf16.gmra.mxu0 %v4278
        %v4419 = vpop.f32.mrf.mxu0
        %v4420 = vadd.f32 0.0, %v4419
        %v4421 = vpop.f32.mrf.mxu0
        %v4422 = vpop.f32.mrf.mxu0
        %v4423 = vadd.f32 0.0, %v4422
        %v4424 = vpop.f32.mrf.mxu0
        %4425 = vmatprep.mubr.bf16.mxu0 0
        %4426 = vmatmul.mubr.bf16.gmra.mxu0 %v4281
        %v4427 = vpop.f32.mrf.mxu0
        %v4428 = vadd.f32 0.0, %v4427
        %v4429 = vpop.f32.mrf.mxu0
        %v4430 = vpop.f32.mrf.mxu0
        %v4431 = vadd.f32 0.0, %v4430
        %v4432 = vpop.f32.mrf.mxu0
        %4433 = vmatprep.mubr.bf16.mxu0 0
        %4434 = vmatmul.mubr.bf16.gmra.mxu0 %v4284
        %v4435 = vpop.f32.mrf.mxu0
        %v4436 = vadd.f32 0.0, %v4435
        %v4437 = vpop.f32.mrf.mxu0
        %v4438 = vpop.f32.mrf.mxu0
        %v4439 = vadd.f32 0.0, %v4438
        %v4440 = vpop.f32.mrf.mxu0
        %4441 = vmatprep.mubr.bf16.mxu0 0
        %4442 = vmatmul.mubr.bf16.gmra.mxu0 %v4287
        %v4443 = vpop.f32.mrf.mxu0
        %v4444 = vadd.f32 0.0, %v4443
        %v4445 = vpop.f32.mrf.mxu0
        %v4446 = vpop.f32.mrf.mxu0
        %v4447 = vadd.f32 0.0, %v4446
        %v4448 = vpop.f32.mrf.mxu0
        %4449 = vdwg.mxu0
        %v4450 = vadd.f32 %v3696, %v4324
        %v4451 = vadd.f32 %v3697, %v4327
        %v4452 = vadd.f32 %v3698, %v4332
        %v4453 = vadd.f32 %v3699, %v4335
        %v4454 = vadd.f32 %v3700, %v4340
        %v4455 = vadd.f32 %v3701, %v4343
        %v4456 = vadd.f32 %v3702, %v4348
        %v4457 = vadd.f32 %v3703, %v4351
        %v4458 = vadd.f32 %v3704, %v4356
        %v4459 = vadd.f32 %v3705, %v4359
        %v4460 = vadd.f32 %v3706, %v4364
        %v4461 = vadd.f32 %v3707, %v4367
        %v4462 = vadd.f32 %v3708, %v4372
        %v4463 = vadd.f32 %v3709, %v4375
        %v4464 = vadd.f32 %v3710, %v4380
        %v4465 = vadd.f32 %v3711, %v4383
        %v4466 = vadd.f32 %v3712, %v4388
        %v4467 = vadd.f32 %v3713, %v4391
        %v4468 = vadd.f32 %v3714, %v4396
        %v4469 = vadd.f32 %v3715, %v4399
        %v4470 = vadd.f32 %v3716, %v4404
        %v4471 = vadd.f32 %v3717, %v4407
        %v4472 = vadd.f32 %v3718, %v4412
        %v4473 = vadd.f32 %v3719, %v4415
        %v4474 = vadd.f32 %v3720, %v4420
        %v4475 = vadd.f32 %v3721, %v4423
        %v4476 = vadd.f32 %v3722, %v4428
        %v4477 = vadd.f32 %v3723, %v4431
        %v4478 = vadd.f32 %v3724, %v4436
        %v4479 = vadd.f32 %v3725, %v4439
        %v4480 = vadd.f32 %v3726, %v4444
        %v4481 = vadd.f32 %v3727, %v4447
        %v4482 = vld [vmem:[%s3341] sm:$0xe]
        %v4483 = vld [vmem:[%s3341 + $0xc] sm:$0xe]
        %v4484 = vld [vmem:[%s3341 + $0x18] sm:$0xe]
        %v4485 = vld [vmem:[%s3341 + $0x24] sm:$0xe]
        %v4486 = vld [vmem:[%s3341 + $0x30] sm:$0xe]
        %v4487 = vld [vmem:[%s3341 + $0x3c] sm:$0xe]
        %v4488 = vld [vmem:[%s3341 + $0x48] sm:$0xe]
        %v4489 = vld [vmem:[%s3341 + $0x54] sm:$0xe]
        %v4490 = vld [vmem:[%s3341 + $0x60] sm:$0xe]
        %v4491 = vld [vmem:[%s3341 + $0x6c] sm:$0xe]
        %v4492 = vld [vmem:[%s3341 + $0x78] sm:$0xe]
        %v4493 = vld [vmem:[%s3341 + $0x84] sm:$0xe]
        %v4494 = vld [vmem:[%s3341 + $0x90] sm:$0xe]
        %v4495 = vld [vmem:[%s3341 + $0x9c] sm:$0xe]
        %v4496 = vld [vmem:[%s3341 + $0xa8] sm:$0xe]
        %v4497 = vld [vmem:[%s3341 + $0xb4] sm:$0xe]
        %v4546 = vrot.slane %v4482, 5
        %v4547 = vrot.slane %v4546, 4
        %v4548 = vrot.slane %v3729, 5
        %v4549 = vsel %vm1267, %v4547, %v4548
        %v4550 = vrot.slane %v4548, 4
        %v4551 = vrot.slane %v3730, 5
        %v4552 = vsel %vm1267, %v4550, %v4551
        %v4553 = vrot.slane %v4483, 5
        %v4554 = vrot.slane %v4553, 4
        %v4555 = vrot.slane %v3732, 5
        %v4556 = vsel %vm1267, %v4554, %v4555
        %v4557 = vrot.slane %v4555, 4
        %v4558 = vrot.slane %v3733, 5
        %v4559 = vsel %vm1267, %v4557, %v4558
        %v4560 = vrot.slane %v4484, 5
        %v4561 = vrot.slane %v4560, 4
        %v4562 = vrot.slane %v3735, 5
        %v4563 = vsel %vm1267, %v4561, %v4562
        %v4564 = vrot.slane %v4562, 4
        %v4565 = vrot.slane %v3736, 5
        %v4566 = vsel %vm1267, %v4564, %v4565
        %v4567 = vrot.slane %v4485, 5
        %v4568 = vrot.slane %v4567, 4
        %v4569 = vrot.slane %v3738, 5
        %v4570 = vsel %vm1267, %v4568, %v4569
        %v4571 = vrot.slane %v4569, 4
        %v4572 = vrot.slane %v3739, 5
        %v4573 = vsel %vm1267, %v4571, %v4572
        %v4574 = vrot.slane %v4486, 5
        %v4575 = vrot.slane %v4574, 4
        %v4576 = vrot.slane %v3741, 5
        %v4577 = vsel %vm1267, %v4575, %v4576
        %v4578 = vrot.slane %v4576, 4
        %v4579 = vrot.slane %v3742, 5
        %v4580 = vsel %vm1267, %v4578, %v4579
        %v4581 = vrot.slane %v4487, 5
        %v4582 = vrot.slane %v4581, 4
        %v4583 = vrot.slane %v3744, 5
        %v4584 = vsel %vm1267, %v4582, %v4583
        %v4585 = vrot.slane %v4583, 4
        %v4586 = vrot.slane %v3745, 5
        %v4587 = vsel %vm1267, %v4585, %v4586
        %v4588 = vrot.slane %v4488, 5
        %v4589 = vrot.slane %v4588, 4
        %v4590 = vrot.slane %v3747, 5
        %v4591 = vsel %vm1267, %v4589, %v4590
        %v4592 = vrot.slane %v4590, 4
        %v4593 = vrot.slane %v3748, 5
        %v4594 = vsel %vm1267, %v4592, %v4593
        %v4595 = vrot.slane %v4489, 5
        %v4596 = vrot.slane %v4595, 4
        %v4597 = vrot.slane %v3750, 5
        %v4598 = vsel %vm1267, %v4596, %v4597
        %v4599 = vrot.slane %v4597, 4
        %v4600 = vrot.slane %v3751, 5
        %v4601 = vsel %vm1267, %v4599, %v4600
        %v4602 = vrot.slane %v4490, 5
        %v4603 = vrot.slane %v4602, 4
        %v4604 = vrot.slane %v3753, 5
        %v4605 = vsel %vm1267, %v4603, %v4604
        %v4606 = vrot.slane %v4604, 4
        %v4607 = vrot.slane %v3754, 5
        %v4608 = vsel %vm1267, %v4606, %v4607
        %v4609 = vrot.slane %v4491, 5
        %v4610 = vrot.slane %v4609, 4
        %v4611 = vrot.slane %v3756, 5
        %v4612 = vsel %vm1267, %v4610, %v4611
        %v4613 = vrot.slane %v4611, 4
        %v4614 = vrot.slane %v3757, 5
        %v4615 = vsel %vm1267, %v4613, %v4614
        %v4616 = vrot.slane %v4492, 5
        %v4617 = vrot.slane %v4616, 4
        %v4618 = vrot.slane %v3759, 5
        %v4619 = vsel %vm1267, %v4617, %v4618
        %v4620 = vrot.slane %v4618, 4
        %v4621 = vrot.slane %v3760, 5
        %v4622 = vsel %vm1267, %v4620, %v4621
        %v4623 = vrot.slane %v4493, 5
        %v4624 = vrot.slane %v4623, 4
        %v4625 = vrot.slane %v3762, 5
        %v4626 = vsel %vm1267, %v4624, %v4625
        %v4627 = vrot.slane %v4625, 4
        %v4628 = vrot.slane %v3763, 5
        %v4629 = vsel %vm1267, %v4627, %v4628
        %v4630 = vrot.slane %v4494, 5
        %v4631 = vrot.slane %v4630, 4
        %v4632 = vrot.slane %v3765, 5
        %v4633 = vsel %vm1267, %v4631, %v4632
        %v4634 = vrot.slane %v4632, 4
        %v4635 = vrot.slane %v3766, 5
        %v4636 = vsel %vm1267, %v4634, %v4635
        %v4637 = vrot.slane %v4495, 5
        %v4638 = vrot.slane %v4637, 4
        %v4639 = vrot.slane %v3768, 5
        %v4640 = vsel %vm1267, %v4638, %v4639
        %v4641 = vrot.slane %v4639, 4
        %v4642 = vrot.slane %v3769, 5
        %v4643 = vsel %vm1267, %v4641, %v4642
        %v4644 = vrot.slane %v4496, 5
        %v4645 = vrot.slane %v4644, 4
        %v4646 = vrot.slane %v3771, 5
        %v4647 = vsel %vm1267, %v4645, %v4646
        %v4648 = vrot.slane %v4646, 4
        %v4649 = vrot.slane %v3772, 5
        %v4650 = vsel %vm1267, %v4648, %v4649
        %v4651 = vrot.slane %v4497, 5
        %v4652 = vrot.slane %v4651, 4
        %v4653 = vrot.slane %v3774, 5
        %v4654 = vsel %vm1267, %v4652, %v4653
        %v4655 = vrot.slane %v4653, 4
        %v4656 = vrot.slane %v3775, 5
        %v4657 = vsel %vm1267, %v4655, %v4656
        %s4658 = scalar_lea.vmem %s1, 256
        %v4659 = vld [vmem:[%s4658] sm:$0xf]
        %v4660 = vld [vmem:[%s4658 + $0x4] sm:$0xf]
        %v4661 = vld [vmem:[%s4658 + $0x8] sm:$0xf]
        %v4662 = vld [vmem:[%s4658 + $0xc] sm:$0xf]
        %v4663 = vld [vmem:[%s4658 + $0x10] sm:$0xf]
        %v4664 = vld [vmem:[%s4658 + $0x14] sm:$0xf]
        %v4665 = vld [vmem:[%s4658 + $0x18] sm:$0xf]
        %v4666 = vld [vmem:[%s4658 + $0x1c] sm:$0xf]
        %v4667 = vunpack.c.l.b16 %v4549
        %v4668 = vunpack.c.l.b16 %v4552
        %v4669 = vunpack.c.l.b16 %v4556
        %v4670 = vunpack.c.l.b16 %v4559
        %v4671 = vunpack.c.l.b16 %v4563
        %v4672 = vunpack.c.l.b16 %v4566
        %v4673 = vunpack.c.l.b16 %v4570
        %v4674 = vunpack.c.l.b16 %v4573
        %v4675 = vunpack.c.l.b16 %v4577
        %v4676 = vunpack.c.l.b16 %v4580
        %v4677 = vunpack.c.l.b16 %v4584
        %v4678 = vunpack.c.l.b16 %v4587
        %v4679 = vunpack.c.l.b16 %v4591
        %v4680 = vunpack.c.l.b16 %v4594
        %v4681 = vunpack.c.l.b16 %v4598
        %v4682 = vunpack.c.l.b16 %v4601
        %v4683 = vunpack.c.l.b16 %v4605
        %v4684 = vunpack.c.l.b16 %v4608
        %v4685 = vunpack.c.l.b16 %v4612
        %v4686 = vunpack.c.l.b16 %v4615
        %v4687 = vunpack.c.l.b16 %v4619
        %v4688 = vunpack.c.l.b16 %v4622
        %v4689 = vunpack.c.l.b16 %v4626
        %v4690 = vunpack.c.l.b16 %v4629
        %v4691 = vunpack.c.l.b16 %v4633
        %v4692 = vunpack.c.l.b16 %v4636
        %v4693 = vunpack.c.l.b16 %v4640
        %v4694 = vunpack.c.l.b16 %v4643
        %v4695 = vunpack.c.l.b16 %v4647
        %v4696 = vunpack.c.l.b16 %v4650
        %v4697 = vunpack.c.l.b16 %v4654
        %v4698 = vunpack.c.l.b16 %v4657
        %v4699 = vpack.c.b16 %v4668, %v4667
        %v4700 = vpack.c.b16 %v4670, %v4669
        %v4701 = vpack.c.b16 %v4672, %v4671
        %v4702 = vpack.c.b16 %v4674, %v4673
        %v4703 = vpack.c.b16 %v4676, %v4675
        %v4704 = vpack.c.b16 %v4678, %v4677
        %v4705 = vpack.c.b16 %v4680, %v4679
        %v4706 = vpack.c.b16 %v4682, %v4681
        %v4707 = vpack.c.b16 %v4684, %v4683
        %v4708 = vpack.c.b16 %v4686, %v4685
        %v4709 = vpack.c.b16 %v4688, %v4687
        %v4710 = vpack.c.b16 %v4690, %v4689
        %v4711 = vpack.c.b16 %v4692, %v4691
        %v4712 = vpack.c.b16 %v4694, %v4693
        %v4713 = vpack.c.b16 %v4696, %v4695
        %v4714 = vpack.c.b16 %v4698, %v4697
        %v4723 = vunpack.c.l.b16 %v4659
        %v4724 = vunpack.c.l.b16 %v4660
        %v4725 = vunpack.c.l.b16 %v4661
        %v4726 = vunpack.c.l.b16 %v4662
        %v4727 = vunpack.c.l.b16 %v4663
        %v4728 = vunpack.c.l.b16 %v4664
        %v4729 = vunpack.c.l.b16 %v4665
        %v4730 = vunpack.c.l.b16 %v4666
        %v4731 = vpack.c.b16 %v4724, %v4723
        %v4732 = vpack.c.b16 %v4726, %v4725
        %v4733 = vpack.c.b16 %v4728, %v4727
        %v4734 = vpack.c.b16 %v4730, %v4729
        %v4740 = vsel %vm694, %v4699, 0
        %v4743 = vsel %vm694, %v4700, 0
        %v4746 = vsel %vm694, %v4701, 0
        %v4749 = vsel %vm694, %v4702, 0
        %v4752 = vsel %vm694, %v4703, 0
        %v4755 = vsel %vm694, %v4704, 0
        %v4758 = vsel %vm694, %v4705, 0
        %v4761 = vsel %vm694, %v4706, 0
        %v4764 = vsel %vm694, %v4707, 0
        %v4767 = vsel %vm694, %v4708, 0
        %v4770 = vsel %vm694, %v4709, 0
        %v4773 = vsel %vm694, %v4710, 0
        %v4776 = vsel %vm694, %v4711, 0
        %v4779 = vsel %vm694, %v4712, 0
        %v4782 = vsel %vm694, %v4713, 0
        %v4785 = vsel %vm694, %v4714, 0
        %4787 = vmatprep.subr.bf16.mxu0 0
        %4788 = vmatpush1.bf16.msra.mxu0 0
        %4789 = vmatprep.subr.bf16.mxu0 0
        %4790 = vmatpush1.bf16.msra.mxu0 0
        %4791 = vmatprep.subr.bf16.mxu0 0
        %4792 = vmatpush1.bf16.msra.mxu0 0
        %4793 = vmatprep.subr.bf16.mxu0 0
        %4794 = vmatpush1.bf16.msra.mxu0 0
        %4795 = vmatprep.subr.bf16.mxu0 0
        %4796 = vmatpush1.bf16.msra.mxu0 %v4734
        %4797 = vmatprep.subr.bf16.mxu0 0
        %4798 = vmatpush1.bf16.msra.mxu0 %v4733
        %4799 = vmatprep.subr.bf16.mxu0 0
        %4800 = vmatpush1.bf16.msra.mxu0 %v4732
        %4801 = vmatprep.subr.bf16.mxu0 0
        %4802 = vmatpush1.bf16.msra.mxu0 %v4731
        %4803 = vmatprep.subr.bf16.mxu0 0
        %4804 = vmatpush2.bf16.msra.mxu0 0
        %4805 = vmatprep.subr.bf16.mxu0 0
        %4806 = vmatpush2.bf16.msra.mxu0 0
        %4807 = vmatprep.subr.bf16.mxu0 0
        %4808 = vmatpush2.bf16.msra.mxu0 0
        %4809 = vmatprep.subr.bf16.mxu0 0
        %4810 = vmatpush2.bf16.msra.mxu0 0
        %4811 = vmatprep.subr.bf16.mxu0 0
        %4812 = vmatpush2.bf16.msra.mxu0 0
        %4813 = vmatprep.subr.bf16.mxu0 0
        %4814 = vmatpush2.bf16.msra.mxu0 0
        %4815 = vmatprep.subr.bf16.mxu0 0
        %4816 = vmatpush2.bf16.msra.mxu0 0
        %4817 = vmatprep.subr.bf16.mxu0 0
        %4818 = vmatpush2.bf16.msra.mxu0 0
        %4819 = vmatprep.mubr.bf16.mxu0 0
        %4820 = vmatmul.mubr.bf16.gmra.mxu0 %v4740
        %v4821 = vpop.f32.mrf.mxu0
        %v4822 = vadd.f32 0.0, %v4821
        %v4823 = vpop.f32.mrf.mxu0
        %v4824 = vpop.f32.mrf.mxu0
        %v4825 = vadd.f32 0.0, %v4824
        %v4826 = vpop.f32.mrf.mxu0
        %4827 = vmatprep.mubr.bf16.mxu0 0
        %4828 = vmatmul.mubr.bf16.gmra.mxu0 %v4743
        %v4829 = vpop.f32.mrf.mxu0
        %v4830 = vadd.f32 0.0, %v4829
        %v4831 = vpop.f32.mrf.mxu0
        %v4832 = vpop.f32.mrf.mxu0
        %v4833 = vadd.f32 0.0, %v4832
        %v4834 = vpop.f32.mrf.mxu0
        %4835 = vmatprep.mubr.bf16.mxu0 0
        %4836 = vmatmul.mubr.bf16.gmra.mxu0 %v4746
        %v4837 = vpop.f32.mrf.mxu0
        %v4838 = vadd.f32 0.0, %v4837
        %v4839 = vpop.f32.mrf.mxu0
        %v4840 = vpop.f32.mrf.mxu0
        %v4841 = vadd.f32 0.0, %v4840
        %v4842 = vpop.f32.mrf.mxu0
        %4843 = vmatprep.mubr.bf16.mxu0 0
        %4844 = vmatmul.mubr.bf16.gmra.mxu0 %v4749
        %v4845 = vpop.f32.mrf.mxu0
        %v4846 = vadd.f32 0.0, %v4845
        %v4847 = vpop.f32.mrf.mxu0
        %v4848 = vpop.f32.mrf.mxu0
        %v4849 = vadd.f32 0.0, %v4848
        %v4850 = vpop.f32.mrf.mxu0
        %4851 = vmatprep.mubr.bf16.mxu0 0
        %4852 = vmatmul.mubr.bf16.gmra.mxu0 %v4752
        %v4853 = vpop.f32.mrf.mxu0
        %v4854 = vadd.f32 0.0, %v4853
        %v4855 = vpop.f32.mrf.mxu0
        %v4856 = vpop.f32.mrf.mxu0
        %v4857 = vadd.f32 0.0, %v4856
        %v4858 = vpop.f32.mrf.mxu0
        %4859 = vmatprep.mubr.bf16.mxu0 0
        %4860 = vmatmul.mubr.bf16.gmra.mxu0 %v4755
        %v4861 = vpop.f32.mrf.mxu0
        %v4862 = vadd.f32 0.0, %v4861
        %v4863 = vpop.f32.mrf.mxu0
        %v4864 = vpop.f32.mrf.mxu0
        %v4865 = vadd.f32 0.0, %v4864
        %v4866 = vpop.f32.mrf.mxu0
        %4867 = vmatprep.mubr.bf16.mxu0 0
        %4868 = vmatmul.mubr.bf16.gmra.mxu0 %v4758
        %v4869 = vpop.f32.mrf.mxu0
        %v4870 = vadd.f32 0.0, %v4869
        %v4871 = vpop.f32.mrf.mxu0
        %v4872 = vpop.f32.mrf.mxu0
        %v4873 = vadd.f32 0.0, %v4872
        %v4874 = vpop.f32.mrf.mxu0
        %4875 = vmatprep.mubr.bf16.mxu0 0
        %4876 = vmatmul.mubr.bf16.gmra.mxu0 %v4761
        %v4877 = vpop.f32.mrf.mxu0
        %v4878 = vadd.f32 0.0, %v4877
        %v4879 = vpop.f32.mrf.mxu0
        %v4880 = vpop.f32.mrf.mxu0
        %v4881 = vadd.f32 0.0, %v4880
        %v4882 = vpop.f32.mrf.mxu0
        %4883 = vmatprep.mubr.bf16.mxu0 0
        %4884 = vmatmul.mubr.bf16.gmra.mxu0 %v4764
        %v4885 = vpop.f32.mrf.mxu0
        %v4886 = vadd.f32 0.0, %v4885
        %v4887 = vpop.f32.mrf.mxu0
        %v4888 = vpop.f32.mrf.mxu0
        %v4889 = vadd.f32 0.0, %v4888
        %v4890 = vpop.f32.mrf.mxu0
        %4891 = vmatprep.mubr.bf16.mxu0 0
        %4892 = vmatmul.mubr.bf16.gmra.mxu0 %v4767
        %v4893 = vpop.f32.mrf.mxu0
        %v4894 = vadd.f32 0.0, %v4893
        %v4895 = vpop.f32.mrf.mxu0
        %v4896 = vpop.f32.mrf.mxu0
        %v4897 = vadd.f32 0.0, %v4896
        %v4898 = vpop.f32.mrf.mxu0
        %4899 = vmatprep.mubr.bf16.mxu0 0
        %4900 = vmatmul.mubr.bf16.gmra.mxu0 %v4770
        %v4901 = vpop.f32.mrf.mxu0
        %v4902 = vadd.f32 0.0, %v4901
        %v4903 = vpop.f32.mrf.mxu0
        %v4904 = vpop.f32.mrf.mxu0
        %v4905 = vadd.f32 0.0, %v4904
        %v4906 = vpop.f32.mrf.mxu0
        %4907 = vmatprep.mubr.bf16.mxu0 0
        %4908 = vmatmul.mubr.bf16.gmra.mxu0 %v4773
        %v4909 = vpop.f32.mrf.mxu0
        %v4910 = vadd.f32 0.0, %v4909
        %v4911 = vpop.f32.mrf.mxu0
        %v4912 = vpop.f32.mrf.mxu0
        %v4913 = vadd.f32 0.0, %v4912
        %v4914 = vpop.f32.mrf.mxu0
        %4915 = vmatprep.mubr.bf16.mxu0 0
        %4916 = vmatmul.mubr.bf16.gmra.mxu0 %v4776
        %v4917 = vpop.f32.mrf.mxu0
        %v4918 = vadd.f32 0.0, %v4917
        %v4919 = vpop.f32.mrf.mxu0
        %v4920 = vpop.f32.mrf.mxu0
        %v4921 = vadd.f32 0.0, %v4920
        %v4922 = vpop.f32.mrf.mxu0
        %4923 = vmatprep.mubr.bf16.mxu0 0
        %4924 = vmatmul.mubr.bf16.gmra.mxu0 %v4779
        %v4925 = vpop.f32.mrf.mxu0
        %v4926 = vadd.f32 0.0, %v4925
        %v4927 = vpop.f32.mrf.mxu0
        %v4928 = vpop.f32.mrf.mxu0
        %v4929 = vadd.f32 0.0, %v4928
        %v4930 = vpop.f32.mrf.mxu0
        %4931 = vmatprep.mubr.bf16.mxu0 0
        %4932 = vmatmul.mubr.bf16.gmra.mxu0 %v4782
        %v4933 = vpop.f32.mrf.mxu0
        %v4934 = vadd.f32 0.0, %v4933
        %v4935 = vpop.f32.mrf.mxu0
        %v4936 = vpop.f32.mrf.mxu0
        %v4937 = vadd.f32 0.0, %v4936
        %v4938 = vpop.f32.mrf.mxu0
        %4939 = vmatprep.mubr.bf16.mxu0 0
        %4940 = vmatmul.mubr.bf16.gmra.mxu0 %v4785
        %v4941 = vpop.f32.mrf.mxu0
        %v4942 = vadd.f32 0.0, %v4941
        %v4943 = vpop.f32.mrf.mxu0
        %v4944 = vpop.f32.mrf.mxu0
        %v4945 = vadd.f32 0.0, %v4944
        %v4946 = vpop.f32.mrf.mxu0
        %4947 = vdwg.mxu0
        %v4948 = vadd.f32 %v4450, %v4822
        %v4949 = vadd.f32 %v4451, %v4825
        %v4950 = vadd.f32 %v4452, %v4830
        %v4951 = vadd.f32 %v4453, %v4833
        %v4952 = vadd.f32 %v4454, %v4838
        %v4953 = vadd.f32 %v4455, %v4841
        %v4954 = vadd.f32 %v4456, %v4846
        %v4955 = vadd.f32 %v4457, %v4849
        %v4956 = vadd.f32 %v4458, %v4854
        %v4957 = vadd.f32 %v4459, %v4857
        %v4958 = vadd.f32 %v4460, %v4862
        %v4959 = vadd.f32 %v4461, %v4865
        %v4960 = vadd.f32 %v4462, %v4870
        %v4961 = vadd.f32 %v4463, %v4873
        %v4962 = vadd.f32 %v4464, %v4878
        %v4963 = vadd.f32 %v4465, %v4881
        %v4964 = vadd.f32 %v4466, %v4886
        %v4965 = vadd.f32 %v4467, %v4889
        %v4966 = vadd.f32 %v4468, %v4894
        %v4967 = vadd.f32 %v4469, %v4897
        %v4968 = vadd.f32 %v4470, %v4902
        %v4969 = vadd.f32 %v4471, %v4905
        %v4970 = vadd.f32 %v4472, %v4910
        %v4971 = vadd.f32 %v4473, %v4913
        %v4972 = vadd.f32 %v4474, %v4918
        %v4973 = vadd.f32 %v4475, %v4921
        %v4974 = vadd.f32 %v4476, %v4926
        %v4975 = vadd.f32 %v4477, %v4929
        %v4976 = vadd.f32 %v4478, %v4934
        %v4977 = vadd.f32 %v4479, %v4937
        %v4978 = vadd.f32 %v4480, %v4942
        %v4979 = vadd.f32 %v4481, %v4945
        %v4980 = vld [vmem:[%s2] sm:$0x1]
        %v4982 = vlaneseq
        %v4983 = vshrl.u32 %v4982, 7
        %v4984 = vsub.s32 0, %v4983
        %v4985 = vrot.slane %v4980, %v4984
        %v4987 = vadd.f32 %v4948, %v4985
        %v4988 = vadd.f32 %v4949, %v4985
        %v4989 = vadd.f32 %v4950, %v4985
        %v4990 = vadd.f32 %v4951, %v4985
        %v4991 = vadd.f32 %v4952, %v4985
        %v4992 = vadd.f32 %v4953, %v4985
        %v4993 = vadd.f32 %v4954, %v4985
        %v4994 = vadd.f32 %v4955, %v4985
        %v4995 = vadd.f32 %v4956, %v4985
        %v4996 = vadd.f32 %v4957, %v4985
        %v4997 = vadd.f32 %v4958, %v4985
        %v4998 = vadd.f32 %v4959, %v4985
        %v4999 = vadd.f32 %v4960, %v4985
        %v5000 = vadd.f32 %v4961, %v4985
        %v5001 = vadd.f32 %v4962, %v4985
        %v5002 = vadd.f32 %v4963, %v4985
        %v5003 = vadd.f32 %v4964, %v4985
        %v5004 = vadd.f32 %v4965, %v4985
        %v5005 = vadd.f32 %v4966, %v4985
        %v5006 = vadd.f32 %v4967, %v4985
        %v5007 = vadd.f32 %v4968, %v4985
        %v5008 = vadd.f32 %v4969, %v4985
        %v5009 = vadd.f32 %v4970, %v4985
        %v5010 = vadd.f32 %v4971, %v4985
        %v5011 = vadd.f32 %v4972, %v4985
        %v5012 = vadd.f32 %v4973, %v4985
        %v5013 = vadd.f32 %v4974, %v4985
        %v5014 = vadd.f32 %v4975, %v4985
        %v5015 = vadd.f32 %v4976, %v4985
        %v5016 = vadd.f32 %v4977, %v4985
        %v5017 = vadd.f32 %v4978, %v4985
        %v5018 = vadd.f32 %v4979, %v4985
        %v5019 = vmax.f32 %v4987, 0.0
        %v5020 = vmax.f32 %v4988, 0.0
        %v5021 = vmax.f32 %v4989, 0.0
        %v5022 = vmax.f32 %v4990, 0.0
        %v5023 = vmax.f32 %v4991, 0.0
        %v5024 = vmax.f32 %v4992, 0.0
        %v5025 = vmax.f32 %v4993, 0.0
        %v5026 = vmax.f32 %v4994, 0.0
        %v5027 = vmax.f32 %v4995, 0.0
        %v5028 = vmax.f32 %v4996, 0.0
        %v5029 = vmax.f32 %v4997, 0.0
        %v5030 = vmax.f32 %v4998, 0.0
        %v5031 = vmax.f32 %v4999, 0.0
        %v5032 = vmax.f32 %v5000, 0.0
        %v5033 = vmax.f32 %v5001, 0.0
        %v5034 = vmax.f32 %v5002, 0.0
        %v5035 = vmax.f32 %v5003, 0.0
        %v5036 = vmax.f32 %v5004, 0.0
        %v5037 = vmax.f32 %v5005, 0.0
        %v5038 = vmax.f32 %v5006, 0.0
        %v5039 = vmax.f32 %v5007, 0.0
        %v5040 = vmax.f32 %v5008, 0.0
        %v5041 = vmax.f32 %v5009, 0.0
        %v5042 = vmax.f32 %v5010, 0.0
        %v5043 = vmax.f32 %v5011, 0.0
        %v5044 = vmax.f32 %v5012, 0.0
        %v5045 = vmax.f32 %v5013, 0.0
        %v5046 = vmax.f32 %v5014, 0.0
        %v5047 = vmax.f32 %v5015, 0.0
        %v5048 = vmax.f32 %v5016, 0.0
        %v5049 = vmax.f32 %v5017, 0.0
        %v5050 = vmax.f32 %v5018, 0.0
        %v5051 = vpack.c.bf16 %v5020, %v5019
        %v5052 = vpack.c.bf16 %v5022, %v5021
        %v5053 = vpack.c.bf16 %v5024, %v5023
        %v5054 = vpack.c.bf16 %v5026, %v5025
        %v5055 = vpack.c.bf16 %v5028, %v5027
        %v5056 = vpack.c.bf16 %v5030, %v5029
        %v5057 = vpack.c.bf16 %v5032, %v5031
        %v5058 = vpack.c.bf16 %v5034, %v5033
        %v5059 = vpack.c.bf16 %v5036, %v5035
        %v5060 = vpack.c.bf16 %v5038, %v5037
        %v5061 = vpack.c.bf16 %v5040, %v5039
        %v5062 = vpack.c.bf16 %v5042, %v5041
        %v5063 = vpack.c.bf16 %v5044, %v5043
        %v5064 = vpack.c.bf16 %v5046, %v5045
        %v5065 = vpack.c.bf16 %v5048, %v5047
        %v5066 = vpack.c.bf16 %v5050, %v5049
        %v5083 = vunpack.c.l.b16 %v5051
        %v5084 = vunpack.c.h.b16 %v5051
        %v5085 = vunpack.c.l.b16 %v5052
        %v5086 = vunpack.c.h.b16 %v5052
        %v5087 = vunpack.c.l.b16 %v5053
        %v5088 = vunpack.c.h.b16 %v5053
        %v5089 = vunpack.c.l.b16 %v5054
        %v5090 = vunpack.c.h.b16 %v5054
        %v5091 = vunpack.c.l.b16 %v5055
        %v5092 = vunpack.c.h.b16 %v5055
        %v5093 = vunpack.c.l.b16 %v5056
        %v5094 = vunpack.c.h.b16 %v5056
        %v5095 = vunpack.c.l.b16 %v5057
        %v5096 = vunpack.c.h.b16 %v5057
        %v5097 = vunpack.c.l.b16 %v5058
        %v5098 = vunpack.c.h.b16 %v5058
        %v5099 = vunpack.c.l.b16 %v5059
        %v5100 = vunpack.c.h.b16 %v5059
        %v5101 = vunpack.c.l.b16 %v5060
        %v5102 = vunpack.c.h.b16 %v5060
        %v5103 = vunpack.c.l.b16 %v5061
        %v5104 = vunpack.c.h.b16 %v5061
        %v5105 = vunpack.c.l.b16 %v5062
        %v5106 = vunpack.c.h.b16 %v5062
        %v5107 = vunpack.c.l.b16 %v5063
        %v5108 = vunpack.c.h.b16 %v5063
        %v5109 = vunpack.c.l.b16 %v5064
        %v5110 = vunpack.c.h.b16 %v5064
        %v5111 = vunpack.c.l.b16 %v5065
        %v5112 = vunpack.c.h.b16 %v5065
        %v5113 = vunpack.c.l.b16 %v5066
        %v5114 = vunpack.c.h.b16 %v5066
        %v5115 = vpack.c.b16 %v5083, %v5083
        %v5116 = vpack.c.b16 %v5084, %v5084
        %v5117 = vpack.c.b16 %v5085, %v5085
        %v5118 = vpack.c.b16 %v5086, %v5086
        %v5119 = vpack.c.b16 %v5087, %v5087
        %v5120 = vpack.c.b16 %v5088, %v5088
        %v5121 = vpack.c.b16 %v5089, %v5089
        %v5122 = vpack.c.b16 %v5090, %v5090
        %v5123 = vpack.c.b16 %v5091, %v5091
        %v5124 = vpack.c.b16 %v5092, %v5092
        %v5125 = vpack.c.b16 %v5093, %v5093
        %v5126 = vpack.c.b16 %v5094, %v5094
        %v5127 = vpack.c.b16 %v5095, %v5095
        %v5128 = vpack.c.b16 %v5096, %v5096
        %v5129 = vpack.c.b16 %v5097, %v5097
        %v5130 = vpack.c.b16 %v5098, %v5098
        %v5131 = vpack.c.b16 %v5099, %v5099
        %v5132 = vpack.c.b16 %v5100, %v5100
        %v5133 = vpack.c.b16 %v5101, %v5101
        %v5134 = vpack.c.b16 %v5102, %v5102
        %v5135 = vpack.c.b16 %v5103, %v5103
        %v5136 = vpack.c.b16 %v5104, %v5104
        %v5137 = vpack.c.b16 %v5105, %v5105
        %v5138 = vpack.c.b16 %v5106, %v5106
        %v5139 = vpack.c.b16 %v5107, %v5107
        %v5140 = vpack.c.b16 %v5108, %v5108
        %v5141 = vpack.c.b16 %v5109, %v5109
        %v5142 = vpack.c.b16 %v5110, %v5110
        %v5143 = vpack.c.b16 %v5111, %v5111
        %v5144 = vpack.c.b16 %v5112, %v5112
        %v5145 = vpack.c.b16 %v5113, %v5113
        %v5146 = vpack.c.b16 %v5114, %v5114
        %vm5179 = vcmask 125952
        %5180 = vst.msk [vmem:[%s163] sm:$0xf] %vm5179, %v5115
        %5181 = vst.msk [vmem:[%s163 + $0x4] sm:$0xf] %vm5179, %v5116
        %5182 = vst.msk [vmem:[%s163 + $0x8] sm:$0xf] %vm5179, %v5117
        %5183 = vst.msk [vmem:[%s163 + $0xc] sm:$0xf] %vm5179, %v5118
        %5184 = vst.msk [vmem:[%s163 + $0x10] sm:$0xf] %vm5179, %v5119
        %5185 = vst.msk [vmem:[%s163 + $0x14] sm:$0xf] %vm5179, %v5120
        %5186 = vst.msk [vmem:[%s163 + $0x18] sm:$0xf] %vm5179, %v5121
        %5187 = vst.msk [vmem:[%s163 + $0x1c] sm:$0xf] %vm5179, %v5122
        %5188 = vst.msk [vmem:[%s163 + $0x20] sm:$0xf] %vm5179, %v5123
        %5189 = vst.msk [vmem:[%s163 + $0x24] sm:$0xf] %vm5179, %v5124
        %5190 = vst.msk [vmem:[%s163 + $0x28] sm:$0xf] %vm5179, %v5125
        %5191 = vst.msk [vmem:[%s163 + $0x2c] sm:$0xf] %vm5179, %v5126
        %5192 = vst.msk [vmem:[%s163 + $0x30] sm:$0xf] %vm5179, %v5127
        %5193 = vst.msk [vmem:[%s163 + $0x34] sm:$0xf] %vm5179, %v5128
        %5194 = vst.msk [vmem:[%s163 + $0x38] sm:$0xf] %vm5179, %v5129
        %5195 = vst.msk [vmem:[%s163 + $0x3c] sm:$0xf] %vm5179, %v5130
        %5196 = vst.msk [vmem:[%s163 + $0x40] sm:$0xf] %vm5179, %v5131
        %5197 = vst.msk [vmem:[%s163 + $0x44] sm:$0xf] %vm5179, %v5132
        %5198 = vst.msk [vmem:[%s163 + $0x48] sm:$0xf] %vm5179, %v5133
        %5199 = vst.msk [vmem:[%s163 + $0x4c] sm:$0xf] %vm5179, %v5134
        %5200 = vst.msk [vmem:[%s163 + $0x50] sm:$0xf] %vm5179, %v5135
        %5201 = vst.msk [vmem:[%s163 + $0x54] sm:$0xf] %vm5179, %v5136
        %5202 = vst.msk [vmem:[%s163 + $0x58] sm:$0xf] %vm5179, %v5137
        %5203 = vst.msk [vmem:[%s163 + $0x5c] sm:$0xf] %vm5179, %v5138
        %5204 = vst.msk [vmem:[%s163 + $0x60] sm:$0xf] %vm5179, %v5139
        %5205 = vst.msk [vmem:[%s163 + $0x64] sm:$0xf] %vm5179, %v5140
        %5206 = vst.msk [vmem:[%s163 + $0x68] sm:$0xf] %vm5179, %v5141
        %5207 = vst.msk [vmem:[%s163 + $0x6c] sm:$0xf] %vm5179, %v5142
        %5208 = vst.msk [vmem:[%s163 + $0x70] sm:$0xf] %vm5179, %v5143
        %5209 = vst.msk [vmem:[%s163 + $0x74] sm:$0xf] %vm5179, %v5144
        %5210 = vst.msk [vmem:[%s163 + $0x78] sm:$0xf] %vm5179, %v5145
        %5211 = vst.msk [vmem:[%s163 + $0x7c] sm:$0xf] %vm5179, %v5146
        %s5212 = sand.u32 %s93, 1
        %s5213 = scalar_lea.sflag [#allocation3], %s5212
        %s5214 = sand.u32 %s93, 1
        %s5215 = smul.addr %s5214, 128
        %s5216 = scalar_lea.vmem [#allocation2], %s5215
        // Predicated region
        $region33: #{tpu_custom_call.1} parent=31 // pred_check
          %p5217 = pneg %p103
        $region34: #{tpu_custom_call.1} parent=31 // pred_check_branch
          %5219 = sbr.rel (%p5217) target = $region36
        $region35: #{tpu_custom_call.1} parent=31 // pred_region
          %s5221 = ssub.s32 2048, 2048
          %5222 = vsyncadd %s5213, %s5221
          %s5223 = smul.addr %s17, 32
          %s5224 = smul.addr %s5223, 64
          %s5225 = scalar_lea.hbm %s3, %s5224
          %s5226 = sshll.u32 %s5216, 4
          %s5227 = int_to_ptr.vmem [resolvable:$true] %s5226
          %5232 = dma.vmem_to_hbm [thread:$0]  %s5227, 2048, %s5225, %s5213, 64, 64, 4
        $region36: #{tpu_custom_call.1} parent=31 // pred_fallthru
          _
      $region32: #{tpu_custom_call.1} parent=5 // pred_fallthru
        _
      %p5233 = scmp.le.s32.totalorder 2, %s12
      // Predicated region
      $region37: #{tpu_custom_call.1} parent=5 // pred_check
        %p5234 = pneg %p5233
      $region38: #{tpu_custom_call.1} parent=5 // pred_check_branch
        %5236 = sbr.rel (%p5234) target = $region40
      $region39: #{tpu_custom_call.1} parent=5 // pred_region
        %s5237 = ssub.s32 %s12, 2
        // Predicated region
        $region41: #{tpu_custom_call.1} parent=39 // pred_check
          %p5238 = pneg %p109
        $region42: #{tpu_custom_call.1} parent=39 // pred_check_branch
          %5240 = sbr.rel (%p5238) target = $region44
        $region43: #{tpu_custom_call.1} parent=39 // pred_region
          %s5241 = sand.u32 %s94, 1
          %s5242 = scalar_lea.sflag [#allocation3], %s5241
          %s5243 = sand.u32 %s94, 1
          %s5244 = smul.addr %s5243, 128
          %s5245 = scalar_lea.vmem [#allocation2], %s5244
          %5246 = dma.done %s5242, 2048
        $region44: #{tpu_custom_call.1} parent=39 // pred_fallthru
          _
      $region40: #{tpu_custom_call.1} parent=5 // pred_fallthru
        _
    $region6: #{tpu_custom_call.1} parent=1 // loop_footer
      %s16 = sadd.s32 1, %s12
    $region7: #{tpu_custom_call.1} parent=1 // loop_footer_branch
      %11 = sbr.rel target = $region3
    $region8: #{tpu_custom_call.1} parent=1 // loop_exit
      _
    %5247 = vsyncpa [#allocation3], 1
    %s5248 = scalar_lea.sflag [#allocation3], 1
    %5249 = vsyncpa %s5248, 1

</llo_original>
